<compile_context>
chip_gen: v7x
topology: tpu7x:2x2x1
jax: 0.10.0
libtpu: 0.0.40
codegen_flags: <defaults>
</compile_context>

<pallas_src>
import functools

import jax
import jax.numpy as jnp
from jax import lax
from jax.experimental import pallas as pl
from jax.experimental.pallas import tpu as pltpu


# PyTorch stores LSTM gates as [i, f, g, o]; we permute columns to [i, f, o, g]
# so one sigmoid hits a contiguous 3*G slab and one tanh hits the trailing G.
_GATE_SRC = (0, 1, 3, 2)   # target order i,f,o,g  <-  source columns i,f,g,o


def _fuse_gate_cols(w_per_dir, H):
    """Fuse per-direction gate matrices into one lane-dense matrix.

    w_per_dir: list (len D) of (rows, 4H) arrays, columns in PyTorch order
    [i,f,g,o].  Returns (rows, 4*D*H) with column blocks [i | f | o | g],
    each block laid out [dir0 (H) | dir1 (H) | ...].
    """
    blocks = []
    for k in _GATE_SRC:
        for w in w_per_dir:
            blocks.append(w[:, k * H:(k + 1) * H])
    return jnp.concatenate(blocks, axis=1)


def _fuse_whh_blockdiag(w_per_dir, H):
    """Block-diagonal recurrent weight (D*H, 4*D*H).

    Row block d only feeds direction-d columns, so one (B, D*H) x (D*H, 4*D*H)
    dot computes both directions' recurrent gate contributions at once.
    """
    D = len(w_per_dir)
    G = D * H
    out = jnp.zeros((G, 4 * G), jnp.float32)
    for kt, ks in enumerate(_GATE_SRC):
        for d, w in enumerate(w_per_dir):
            out = out.at[d * H:(d + 1) * H,
                         kt * G + d * H: kt * G + (d + 1) * H].set(
                             w[:, ks * H:(ks + 1) * H])
    return out


# ----------------------------------------------------------------------------
# Fused decoder kernel: all LSTM layers + both directions + FC in one call.
# ----------------------------------------------------------------------------
def _decoder_kernel(*refs, hidden_size, num_layers, num_directions,
                    seq_len, batch):
    H, L, D, T, B = hidden_size, num_layers, num_directions, seq_len, batch
    G = D * H                                   # fused carry width

    # ---- positional ref parsing --------------------------------------------
    p = 0
    x_ref = refs[p]; p += 1                     # (T*B, F)   time-major, flat
    wih = refs[p:p + L]; p += L                 # layer l: (In_l, 4G) fused
    whh = refs[p:p + L]; p += L                 # (G, 4G) block-diagonal
    bias = refs[p:p + L]; p += L                # (1, 4G)
    h0_ref, c0_ref, fcw_ref, fcb_ref = refs[p:p + 4]; p += 4
    pred_ref, hN_ref, cN_ref = refs[p:p + 3]; p += 3
    gx_ref = refs[p]; p += 1                    # (T*B, 4G) fused gate scratch
    yf_ref = refs[p]; p += 1                    # (T, B, H) fwd hidden outputs
    yb_ref = refs[p] if D == 2 else None        # (T, B, H) bwd hidden outputs

    if D == 2:
        # Hoisted lane mask selecting forward-direction columns of the fused
        # gate layout (column c is fwd iff (c mod G) < H).
        lane = lax.broadcasted_iota(jnp.int32, (B, 4 * G), 1)
        fwd_mask = (lane % G) < H

    yf_flat = None
    yb_flat = None
    for layer in range(L):
        # ---- hoisted, direction-batched input projection (off serial path) -
        b = bias[layer][...]
        if layer == 0:
            gx_ref[...] = jnp.dot(x_ref[...], wih[0][...],
                                  preferred_element_type=jnp.float32) + b
        else:
            w = wih[layer]
            acc = jnp.dot(yf_flat, w[0:H, :],
                          preferred_element_type=jnp.float32)
            if D == 2:
                acc = acc + jnp.dot(yb_flat, w[H:2 * H, :],
                                    preferred_element_type=jnp.float32)
            gx_ref[...] = acc + b

        whh_l = whh[layer][...]                 # (G, 4G) resident across loop
        h = h0_ref[layer]                       # (B, G) fused fwd|bwd carry
        c = c0_ref[layer]

        def step(t, carry):
            h, c = carry
            row_f = pl.multiple_of(t * B, B)
            gx_t = gx_ref[pl.ds(row_f, B), :]               # fwd input gates
            if D == 2:
                row_b = pl.multiple_of((T - 1 - t) * B, B)
                gx_t = jnp.where(fwd_mask, gx_t,
                                 gx_ref[pl.ds(row_b, B), :])  # bwd input gates
            # One lane-dense recurrent dot for both directions.
            gates = gx_t + jnp.dot(h, whh_l,
                                   preferred_element_type=jnp.float32)
            sig = jax.nn.sigmoid(gates[:, :3 * G])          # [i | f | o]
            g_t = jnp.tanh(gates[:, 3 * G:])                # [g]
            c = sig[:, G:2 * G] * c + sig[:, :G] * g_t
            h = sig[:, 2 * G:3 * G] * jnp.tanh(c)
            yf_ref[t] = h[:, :H]
            if D == 2:
                yb_ref[T - 1 - t] = h[:, H:]
            return h, c

        h, c = lax.fori_loop(0, T, step, (h, c), unroll=True)
        hN_ref[layer] = h
        cN_ref[layer] = c

        yf_flat = yf_ref[...].reshape(T * B, H)
        if D == 2:
            yb_flat = yb_ref[...].reshape(T * B, H)

    # nn.Dropout(p=0.5) is identity in eval mode.
    # TODO(synk): training-mode stochastic dropout mask not implemented.
    preds = jnp.dot(yf_flat, fcw_ref[0:H, :],
                    preferred_element_type=jnp.float32)
    if D == 2:
        preds = preds + jnp.dot(yb_flat, fcw_ref[H:2 * H, :],
                                preferred_element_type=jnp.float32)
    pred_ref[...] = preds + fcb_ref[...]


# ----------------------------------------------------------------------------
# Wrapper: layout plumbing (weight fusion / transposes) happens outside kernel.
# ----------------------------------------------------------------------------
def decoder_forward(params, x, hidden, cell):
    """x: (B, T, F); hidden, cell: (num_layers*num_directions, B, H)."""
    B, T, F = x.shape
    H = hidden.shape[-1]
    L = params["num_layers"]
    D = params["num_directions"]
    assert L >= 1, "Decoder requires at least one LSTM layer"
    G = D * H
    O = params["fc_w"].shape[1]
    TB = T * B

    # Time-major flat input slab for the hoisted projection.
    x_flat = jnp.transpose(x, (1, 0, 2)).reshape(TB, F)

    wih_l, whh_l, b_l = [], [], []
    for l in range(L):
        dirs = params["lstm"][l]
        wih_l.append(_fuse_gate_cols([dirs[d]["w_ih"] for d in range(D)], H))
        whh_l.append(_fuse_whh_blockdiag([dirs[d]["w_hh"] for d in range(D)], H))
        b_l.append(_fuse_gate_cols([dirs[d]["b"] for d in range(D)], H))

    # (L*D, B, H) -> (L, B, D*H) fused carries (fwd in [:, :H], bwd in [:, H:]).
    h0 = hidden.reshape(L, D, B, H).transpose(0, 2, 1, 3).reshape(L, B, G)
    c0 = cell.reshape(L, D, B, H).transpose(0, 2, 1, 3).reshape(L, B, G)

    kernel = functools.partial(_decoder_kernel, hidden_size=H, num_layers=L,
                               num_directions=D, seq_len=T, batch=B)
    vmem = pl.BlockSpec(memory_space=pltpu.MemorySpace.VMEM)
    n_in = 1 + 3 * L + 4

    scratch = [pltpu.VMEM((TB, 4 * G), jnp.float32),      # fused gate pre-acts
               pltpu.VMEM((T, B, H), jnp.float32)]        # fwd hidden outputs
    if D == 2:
        scratch.append(pltpu.VMEM((T, B, H), jnp.float32))  # bwd hidden outputs

    preds_flat, hN, cN = pl.pallas_call(
        kernel,
        out_shape=(jax.ShapeDtypeStruct((TB, O), jnp.float32),
                   jax.ShapeDtypeStruct((L, B, G), jnp.float32),
                   jax.ShapeDtypeStruct((L, B, G), jnp.float32)),
        in_specs=[vmem] * n_in,
        out_specs=(vmem, vmem, vmem),
        scratch_shapes=scratch,
    )(x_flat, *wih_l, *whh_l, *b_l, h0, c0, params["fc_w"], params["fc_b"])

    preds = preds_flat.reshape(T, B, O).transpose(1, 0, 2)           # (B, T, O)
    hN = hN.reshape(L, B, D, H).transpose(0, 2, 1, 3).reshape(L * D, B, H)
    cN = cN.reshape(L, B, D, H).transpose(0, 2, 1, 3).reshape(L * D, B, H)
    return preds, hN, cN


# ----------------------------------------------------------------------------
# Parameter init (deterministic, PyTorch-style U(-1/sqrt(H), 1/sqrt(H))).
# Stored in PyTorch gate order (i, f, g, o), pre-transposed for right-multiply.
# ----------------------------------------------------------------------------
def init_decoder_params(key, input_size, hidden_size, output_size, num_layers,
                        bidirectional=True):
    num_directions = 2 if bidirectional else 1
    bound = 1.0 / (hidden_size ** 0.5)
    lstm = []
    for layer in range(num_layers):
        layer_in = input_size if layer == 0 else hidden_size * num_directions
        dirs = []
        for _ in range(num_directions):
            key, k1, k2, k3, k4 = jax.random.split(key, 5)
            w_ih = jax.random.uniform(k1, (layer_in, 4 * hidden_size),
                                      jnp.float32, -bound, bound)
            w_hh = jax.random.uniform(k2, (hidden_size, 4 * hidden_size),
                                      jnp.float32, -bound, bound)
            b_ih = jax.random.uniform(k3, (4 * hidden_size,),
                                      jnp.float32, -bound, bound)
            b_hh = jax.random.uniform(k4, (4 * hidden_size,),
                                      jnp.float32, -bound, bound)
            dirs.append({"w_ih": w_ih, "w_hh": w_hh,
                         "b": (b_ih + b_hh)[None, :]})
        lstm.append(dirs)
    key, k1, k2 = jax.random.split(key, 3)
    fb = 1.0 / ((hidden_size * num_directions) ** 0.5)
    fc_w = jax.random.uniform(k1, (hidden_size * num_directions, output_size),
                              jnp.float32, -fb, fb)
    fc_b = jax.random.uniform(k2, (output_size,), jnp.float32, -fb, fb)[None, :]
    return {"lstm": lstm, "fc_w": fc_w, "fc_b": fc_b,
            "num_layers": num_layers, "num_directions": num_directions}


# ----------------------------------------------------------------------------
# Pure-JAX reference (same math, PyTorch semantics) for self-validation.
# ----------------------------------------------------------------------------
def reference_forward(params, x, hidden, cell):
    B, T, _ = x.shape
    L, D = params["num_layers"], params["num_directions"]
    H = hidden.shape[-1]
    layer_in = x
    h_fin, c_fin = [], []
    for layer in range(L):
        dir_outs = []
        for d in range(D):
            p = params["lstm"][layer][d]
            idx = layer * D + d
            h, c = hidden[idx], cell[idx]
            order = range(T) if d == 0 else range(T - 1, -1, -1)
            ys = [None] * T
            for t in order:
                g = layer_in[:, t, :] @ p["w_ih"] + h @ p["w_hh"] + p["b"][0]
                i_g = jax.nn.sigmoid(g[:, :H])
                f_g = jax.nn.sigmoid(g[:, H:2 * H])
                g_g = jnp.tanh(g[:, 2 * H:3 * H])
                o_g = jax.nn.sigmoid(g[:, 3 * H:])
                c = f_g * c + i_g * g_g
                h = o_g * jnp.tanh(c)
                ys[t] = h
            dir_outs.append(jnp.stack(ys, axis=1))
            h_fin.append(h)
            c_fin.append(c)
        layer_in = jnp.concatenate(dir_outs, axis=-1)
    preds = layer_in @ params["fc_w"] + params["fc_b"][0]
    return preds, jnp.stack(h_fin), jnp.stack(c_fin)


if __name__ == "__main__":
    input_size, hidden_size, output_size = 8, 16, 4
    num_layers, bidirectional = 2, True
    B, T = 2, 8
    num_directions = 2 if bidirectional else 1

    key = jax.random.PRNGKey(0)
    kp, kx, kh, kc = jax.random.split(key, 4)
    params = init_decoder_params(kp, input_size, hidden_size, output_size,
                                 num_layers, bidirectional)
    x = jax.random.normal(kx, (B, T, input_size), jnp.float32)
    hidden = jax.random.normal(kh, (num_layers * num_directions, B, hidden_size),
                               jnp.float32)
    cell = jax.random.normal(kc, (num_layers * num_directions, B, hidden_size),
                             jnp.float32)

    preds, h_out, c_out = decoder_forward(params, x, hidden, cell)
    jax.block_until_ready((preds, h_out, c_out))

    rp, rh, rc = reference_forward(params, x, hidden, cell)
    assert preds.shape == (B, T, output_size)
    assert h_out.shape == (num_layers * num_directions, B, hidden_size)
    assert c_out.shape == (num_layers * num_directions, B, hidden_size)
    assert jnp.allclose(preds, rp, atol=5e-4), "predictions mismatch"
    assert jnp.allclose(h_out, rh, atol=5e-4), "hidden mismatch"
    assert jnp.allclose(c_out, rc, atol=5e-4), "cell mismatch"

    print("KERNEL_OK")
</pallas_src>

<mosaic_0001>
module attributes {stable_mosaic.version = 11 : i64} {
  func.func @_decoder_kernel(%arg0: memref<16x8xf32, #tpu.memory_space<vmem>>, %arg1: memref<8x128xf32, #tpu.memory_space<vmem>>, %arg2: memref<32x128xf32, #tpu.memory_space<vmem>>, %arg3: memref<32x128xf32, #tpu.memory_space<vmem>>, %arg4: memref<32x128xf32, #tpu.memory_space<vmem>>, %arg5: memref<1x128xf32, #tpu.memory_space<vmem>>, %arg6: memref<1x128xf32, #tpu.memory_space<vmem>>, %arg7: memref<2x2x32xf32, #tpu.memory_space<vmem>>, %arg8: memref<2x2x32xf32, #tpu.memory_space<vmem>>, %arg9: memref<32x4xf32, #tpu.memory_space<vmem>>, %arg10: memref<1x4xf32, #tpu.memory_space<vmem>>, %arg11: memref<16x4xf32, #tpu.memory_space<vmem>>, %arg12: memref<2x2x32xf32, #tpu.memory_space<vmem>>, %arg13: memref<2x2x32xf32, #tpu.memory_space<vmem>>, %arg14: memref<16x128xf32, #tpu.memory_space<vmem>>, %arg15: memref<8x2x16xf32, #tpu.memory_space<vmem>>, %arg16: memref<8x2x16xf32, #tpu.memory_space<vmem>>) attributes {dimension_semantics = [], scalar_prefetch = 0 : i64, scratch_operands = 3 : i64, tpu.core_type = #tpu.core_type<tc>} {
    %0 = tpu.iota {dimensions = array<i32: 1>} : vector<2x128xi32>
    %c32_i32 = arith.constant 32 : i32
    %c0_i32 = arith.constant 0 : i32
    %1 = arith.cmpi eq, %c32_i32, %c0_i32 : i32
    %c1_i32 = arith.constant 1 : i32
    %2 = arith.select %1, %c1_i32, %c32_i32 : i32
    %3 = vector.broadcast %2 : i32 to vector<2x128xi32>
    %4 = arith.remsi %0, %3 : vector<2x128xi32>
    %c0_i32_0 = arith.constant 0 : i32
    %5 = vector.broadcast %c0_i32_0 : i32 to vector<2x128xi32>
    %6 = arith.cmpi ne, %4, %5 : vector<2x128xi32>
    %c0_i32_1 = arith.constant 0 : i32
    %7 = vector.broadcast %c0_i32_1 : i32 to vector<2x128xi32>
    %8 = arith.cmpi slt, %4, %7 : vector<2x128xi32>
    %c0_i32_2 = arith.constant 0 : i32
    %9 = arith.cmpi slt, %2, %c0_i32_2 : i32
    %10 = vector.broadcast %9 : i1 to vector<2x128xi1>
    %11 = vector.broadcast %10 : vector<2x128xi1> to vector<2x128xi1>
    %12 = arith.xori %8, %11 : vector<2x128xi1>
    %13 = arith.andi %12, %6 : vector<2x128xi1>
    %14 = vector.broadcast %2 : i32 to vector<2x128xi32>
    %15 = arith.addi %4, %14 : vector<2x128xi32>
    %16 = arith.select %13, %15, %4 : vector<2x128xi1>, vector<2x128xi32>
    %c16_i32 = arith.constant 16 : i32
    %17 = vector.broadcast %c16_i32 : i32 to vector<2x128xi32>
    %18 = arith.cmpi slt, %16, %17 : vector<2x128xi32>
    %c0 = arith.constant 0 : index
    %c0_3 = arith.constant 0 : index
    %19 = vector.load %arg5[%c0, %c0_3] : memref<1x128xf32, #tpu.memory_space<vmem>>, vector<1x128xf32>
    %c0_4 = arith.constant 0 : index
    %c0_5 = arith.constant 0 : index
    %20 = vector.load %arg0[%c0_4, %c0_5] : memref<16x8xf32, #tpu.memory_space<vmem>>, vector<16x8xf32>
    %c0_6 = arith.constant 0 : index
    %c0_7 = arith.constant 0 : index
    %21 = vector.load %arg1[%c0_6, %c0_7] : memref<8x128xf32, #tpu.memory_space<vmem>>, vector<8x128xf32>
    %cst = arith.constant dense<0.000000e+00> : vector<16x128xf32>
    %22 = tpu.matmul %20, %21, %cst {dimension_numbers = #tpu.dot_dimension_numbers<[1], [0], [0], [1], [0, 0, 1, 1], [], []>} : vector<16x8xf32>, vector<8x128xf32>, vector<16x128xf32> -> vector<16x128xf32>
    %23 = vector.broadcast %19 : vector<1x128xf32> to vector<16x128xf32>
    %24 = arith.addf %22, %23 : vector<16x128xf32>
    %c0_8 = arith.constant 0 : index
    %c0_9 = arith.constant 0 : index
    %25 = vector.load %arg14[%c0_8, %c0_9] : memref<16x128xf32, #tpu.memory_space<vmem>>, vector<16x128xf32>
    tpu.vector_store %arg14[%c0_8, %c0_9], %24 {strides = array<i32>} : memref<16x128xf32, #tpu.memory_space<vmem>>, vector<16x128xf32>,
    %c0_10 = arith.constant 0 : index
    %c0_11 = arith.constant 0 : index
    %26 = vector.load %arg3[%c0_10, %c0_11] : memref<32x128xf32, #tpu.memory_space<vmem>>, vector<32x128xf32>
    %c0_12 = arith.constant 0 : index
    %c0_13 = arith.constant 0 : index
    %c0_14 = arith.constant 0 : index
    %27 = vector.load %arg7[%c0_12, %c0_13, %c0_14] : memref<2x2x32xf32, #tpu.memory_space<vmem>>, vector<1x2x32xf32>
    %28 = vector.shape_cast %27 : vector<1x2x32xf32> to vector<2x32xf32>
    %c0_15 = arith.constant 0 : index
    %c0_16 = arith.constant 0 : index
    %c0_17 = arith.constant 0 : index
    %29 = vector.load %arg8[%c0_15, %c0_16, %c0_17] : memref<2x2x32xf32, #tpu.memory_space<vmem>>, vector<1x2x32xf32>
    %30 = vector.shape_cast %29 : vector<1x2x32xf32> to vector<2x32xf32>
    %c0_i32_18 = arith.constant 0 : i32
    %c2_i32 = arith.constant 2 : i32
    %31 = arith.muli %c0_i32_18, %c2_i32 : i32
    %32 = tpu.assume_multiple %31, 2 : i32
    %33 = arith.index_cast %32 : i32 to index
    %c0_19 = arith.constant 0 : index
    %34 = vector.load %arg14[%33, %c0_19] : memref<16x128xf32, #tpu.memory_space<vmem>>, vector<2x128xf32>
    %c7_i32 = arith.constant 7 : i32
    %35 = arith.subi %c7_i32, %c0_i32_18 : i32
    %c2_i32_20 = arith.constant 2 : i32
    %36 = arith.muli %35, %c2_i32_20 : i32
    %37 = tpu.assume_multiple %36, 2 : i32
    %38 = arith.index_cast %37 : i32 to index
    %c0_21 = arith.constant 0 : index
    %39 = vector.load %arg14[%38, %c0_21] : memref<16x128xf32, #tpu.memory_space<vmem>>, vector<2x128xf32>
    %40 = arith.select %18, %34, %39 : vector<2x128xi1>, vector<2x128xf32>
    %cst_22 = arith.constant dense<0.000000e+00> : vector<2x128xf32>
    %41 = tpu.matmul %28, %26, %cst_22 {dimension_numbers = #tpu.dot_dimension_numbers<[1], [0], [0], [1], [0, 0, 1, 1], [], []>} : vector<2x32xf32>, vector<32x128xf32>, vector<2x128xf32> -> vector<2x128xf32>
    %42 = arith.addf %40, %41 : vector<2x128xf32>
    %43 = vector.extract_strided_slice %42 {offsets = [0, 0], sizes = [2, 96], strides = [1, 1]} : vector<2x128xf32> to vector<2x96xf32>
    %44 = arith.negf %43 : vector<2x96xf32>
    %45 = math.exp %44 : vector<2x96xf32>
    %cst_23 = arith.constant 1.000000e+00 : f32
    %46 = vector.broadcast %cst_23 : f32 to vector<2x96xf32>
    %47 = arith.addf %46, %45 : vector<2x96xf32>
    %48 = arith.divf %46, %47 : vector<2x96xf32>
    %49 = vector.extract_strided_slice %42 {offsets = [0, 96], sizes = [2, 32], strides = [1, 1]} : vector<2x128xf32> to vector<2x32xf32>
    %50 = math.tanh %49 : vector<2x32xf32>
    %51 = vector.extract_strided_slice %48 {offsets = [0, 32], sizes = [2, 32], strides = [1, 1]} : vector<2x96xf32> to vector<2x32xf32>
    %52 = arith.mulf %51, %30 : vector<2x32xf32>
    %53 = vector.extract_strided_slice %48 {offsets = [0, 0], sizes = [2, 32], strides = [1, 1]} : vector<2x96xf32> to vector<2x32xf32>
    %54 = arith.mulf %53, %50 : vector<2x32xf32>
    %55 = arith.addf %52, %54 : vector<2x32xf32>
    %56 = vector.extract_strided_slice %48 {offsets = [0, 64], sizes = [2, 32], strides = [1, 1]} : vector<2x96xf32> to vector<2x32xf32>
    %57 = math.tanh %55 : vector<2x32xf32>
    %58 = arith.mulf %56, %57 : vector<2x32xf32>
    %59 = vector.extract_strided_slice %58 {offsets = [0, 0], sizes = [2, 16], strides = [1, 1]} : vector<2x32xf32> to vector<2x16xf32>
    %60 = arith.index_cast %c0_i32_18 : i32 to index
    %c0_24 = arith.constant 0 : index
    %c0_25 = arith.constant 0 : index
    %61 = vector.load %arg15[%60, %c0_24, %c0_25] : memref<8x2x16xf32, #tpu.memory_space<vmem>>, vector<1x2x16xf32>
    %62 = vector.shape_cast %61 : vector<1x2x16xf32> to vector<2x16xf32>
    %63 = vector.shape_cast %59 : vector<2x16xf32> to vector<1x2x16xf32>
    tpu.vector_store %arg15[%60, %c0_24, %c0_25], %63 {strides = array<i32>} : memref<8x2x16xf32, #tpu.memory_space<vmem>>, vector<1x2x16xf32>,
    %64 = vector.extract_strided_slice %58 {offsets = [0, 16], sizes = [2, 16], strides = [1, 1]} : vector<2x32xf32> to vector<2x16xf32>
    %c7_i32_26 = arith.constant 7 : i32
    %65 = arith.subi %c7_i32_26, %c0_i32_18 : i32
    %66 = arith.index_cast %65 : i32 to index
    %c0_27 = arith.constant 0 : index
    %c0_28 = arith.constant 0 : index
    %67 = vector.load %arg16[%66, %c0_27, %c0_28] : memref<8x2x16xf32, #tpu.memory_space<vmem>>, vector<1x2x16xf32>
    %68 = vector.shape_cast %67 : vector<1x2x16xf32> to vector<2x16xf32>
    %69 = vector.shape_cast %64 : vector<2x16xf32> to vector<1x2x16xf32>
    tpu.vector_store %arg16[%66, %c0_27, %c0_28], %69 {strides = array<i32>} : memref<8x2x16xf32, #tpu.memory_space<vmem>>, vector<1x2x16xf32>,
    %c1_i32_29 = arith.constant 1 : i32
    %c2_i32_30 = arith.constant 2 : i32
    %70 = arith.muli %c1_i32_29, %c2_i32_30 : i32
    %71 = tpu.assume_multiple %70, 2 : i32
    %72 = arith.index_cast %71 : i32 to index
    %c0_31 = arith.constant 0 : index
    %73 = vector.load %arg14[%72, %c0_31] : memref<16x128xf32, #tpu.memory_space<vmem>>, vector<2x128xf32>
    %c7_i32_32 = arith.constant 7 : i32
    %74 = arith.subi %c7_i32_32, %c1_i32_29 : i32
    %c2_i32_33 = arith.constant 2 : i32
    %75 = arith.muli %74, %c2_i32_33 : i32
    %76 = tpu.assume_multiple %75, 2 : i32
    %77 = arith.index_cast %76 : i32 to index
    %c0_34 = arith.constant 0 : index
    %78 = vector.load %arg14[%77, %c0_34] : memref<16x128xf32, #tpu.memory_space<vmem>>, vector<2x128xf32>
    %79 = arith.select %18, %73, %78 : vector<2x128xi1>, vector<2x128xf32>
    %cst_35 = arith.constant dense<0.000000e+00> : vector<2x128xf32>
    %80 = tpu.matmul %58, %26, %cst_35 {dimension_numbers = #tpu.dot_dimension_numbers<[1], [0], [0], [1], [0, 0, 1, 1], [], []>} : vector<2x32xf32>, vector<32x128xf32>, vector<2x128xf32> -> vector<2x128xf32>
    %81 = arith.addf %79, %80 : vector<2x128xf32>
    %82 = vector.extract_strided_slice %81 {offsets = [0, 0], sizes = [2, 96], strides = [1, 1]} : vector<2x128xf32> to vector<2x96xf32>
    %83 = arith.negf %82 : vector<2x96xf32>
    %84 = math.exp %83 : vector<2x96xf32>
    %cst_36 = arith.constant 1.000000e+00 : f32
    %85 = vector.broadcast %cst_36 : f32 to vector<2x96xf32>
    %86 = arith.addf %85, %84 : vector<2x96xf32>
    %87 = arith.divf %85, %86 : vector<2x96xf32>
    %88 = vector.extract_strided_slice %81 {offsets = [0, 96], sizes = [2, 32], strides = [1, 1]} : vector<2x128xf32> to vector<2x32xf32>
    %89 = math.tanh %88 : vector<2x32xf32>
    %90 = vector.extract_strided_slice %87 {offsets = [0, 32], sizes = [2, 32], strides = [1, 1]} : vector<2x96xf32> to vector<2x32xf32>
    %91 = arith.mulf %90, %55 : vector<2x32xf32>
    %92 = vector.extract_strided_slice %87 {offsets = [0, 0], sizes = [2, 32], strides = [1, 1]} : vector<2x96xf32> to vector<2x32xf32>
    %93 = arith.mulf %92, %89 : vector<2x32xf32>
    %94 = arith.addf %91, %93 : vector<2x32xf32>
    %95 = vector.extract_strided_slice %87 {offsets = [0, 64], sizes = [2, 32], strides = [1, 1]} : vector<2x96xf32> to vector<2x32xf32>
    %96 = math.tanh %94 : vector<2x32xf32>
    %97 = arith.mulf %95, %96 : vector<2x32xf32>
    %98 = vector.extract_strided_slice %97 {offsets = [0, 0], sizes = [2, 16], strides = [1, 1]} : vector<2x32xf32> to vector<2x16xf32>
    %99 = arith.index_cast %c1_i32_29 : i32 to index
    %c0_37 = arith.constant 0 : index
    %c0_38 = arith.constant 0 : index
    %100 = vector.load %arg15[%99, %c0_37, %c0_38] : memref<8x2x16xf32, #tpu.memory_space<vmem>>, vector<1x2x16xf32>
    %101 = vector.shape_cast %100 : vector<1x2x16xf32> to vector<2x16xf32>
    %102 = vector.shape_cast %98 : vector<2x16xf32> to vector<1x2x16xf32>
    tpu.vector_store %arg15[%99, %c0_37, %c0_38], %102 {strides = array<i32>} : memref<8x2x16xf32, #tpu.memory_space<vmem>>, vector<1x2x16xf32>,
    %103 = vector.extract_strided_slice %97 {offsets = [0, 16], sizes = [2, 16], strides = [1, 1]} : vector<2x32xf32> to vector<2x16xf32>
    %c7_i32_39 = arith.constant 7 : i32
    %104 = arith.subi %c7_i32_39, %c1_i32_29 : i32
    %105 = arith.index_cast %104 : i32 to index
    %c0_40 = arith.constant 0 : index
    %c0_41 = arith.constant 0 : index
    %106 = vector.load %arg16[%105, %c0_40, %c0_41] : memref<8x2x16xf32, #tpu.memory_space<vmem>>, vector<1x2x16xf32>
    %107 = vector.shape_cast %106 : vector<1x2x16xf32> to vector<2x16xf32>
    %108 = vector.shape_cast %103 : vector<2x16xf32> to vector<1x2x16xf32>
    tpu.vector_store %arg16[%105, %c0_40, %c0_41], %108 {strides = array<i32>} : memref<8x2x16xf32, #tpu.memory_space<vmem>>, vector<1x2x16xf32>,
    %c2_i32_42 = arith.constant 2 : i32
    %c2_i32_43 = arith.constant 2 : i32
    %109 = arith.muli %c2_i32_42, %c2_i32_43 : i32
    %110 = tpu.assume_multiple %109, 2 : i32
    %111 = arith.index_cast %110 : i32 to index
    %c0_44 = arith.constant 0 : index
    %112 = vector.load %arg14[%111, %c0_44] : memref<16x128xf32, #tpu.memory_space<vmem>>, vector<2x128xf32>
    %c7_i32_45 = arith.constant 7 : i32
    %113 = arith.subi %c7_i32_45, %c2_i32_42 : i32
    %c2_i32_46 = arith.constant 2 : i32
    %114 = arith.muli %113, %c2_i32_46 : i32
    %115 = tpu.assume_multiple %114, 2 : i32
    %116 = arith.index_cast %115 : i32 to index
    %c0_47 = arith.constant 0 : index
    %117 = vector.load %arg14[%116, %c0_47] : memref<16x128xf32, #tpu.memory_space<vmem>>, vector<2x128xf32>
    %118 = arith.select %18, %112, %117 : vector<2x128xi1>, vector<2x128xf32>
    %cst_48 = arith.constant dense<0.000000e+00> : vector<2x128xf32>
    %119 = tpu.matmul %97, %26, %cst_48 {dimension_numbers = #tpu.dot_dimension_numbers<[1], [0], [0], [1], [0, 0, 1, 1], [], []>} : vector<2x32xf32>, vector<32x128xf32>, vector<2x128xf32> -> vector<2x128xf32>
    %120 = arith.addf %118, %119 : vector<2x128xf32>
    %121 = vector.extract_strided_slice %120 {offsets = [0, 0], sizes = [2, 96], strides = [1, 1]} : vector<2x128xf32> to vector<2x96xf32>
    %122 = arith.negf %121 : vector<2x96xf32>
    %123 = math.exp %122 : vector<2x96xf32>
    %cst_49 = arith.constant 1.000000e+00 : f32
    %124 = vector.broadcast %cst_49 : f32 to vector<2x96xf32>
    %125 = arith.addf %124, %123 : vector<2x96xf32>
    %126 = arith.divf %124, %125 : vector<2x96xf32>
    %127 = vector.extract_strided_slice %120 {offsets = [0, 96], sizes = [2, 32], strides = [1, 1]} : vector<2x128xf32> to vector<2x32xf32>
    %128 = math.tanh %127 : vector<2x32xf32>
    %129 = vector.extract_strided_slice %126 {offsets = [0, 32], sizes = [2, 32], strides = [1, 1]} : vector<2x96xf32> to vector<2x32xf32>
    %130 = arith.mulf %129, %94 : vector<2x32xf32>
    %131 = vector.extract_strided_slice %126 {offsets = [0, 0], sizes = [2, 32], strides = [1, 1]} : vector<2x96xf32> to vector<2x32xf32>
    %132 = arith.mulf %131, %128 : vector<2x32xf32>
    %133 = arith.addf %130, %132 : vector<2x32xf32>
    %134 = vector.extract_strided_slice %126 {offsets = [0, 64], sizes = [2, 32], strides = [1, 1]} : vector<2x96xf32> to vector<2x32xf32>
    %135 = math.tanh %133 : vector<2x32xf32>
    %136 = arith.mulf %134, %135 : vector<2x32xf32>
    %137 = vector.extract_strided_slice %136 {offsets = [0, 0], sizes = [2, 16], strides = [1, 1]} : vector<2x32xf32> to vector<2x16xf32>
    %138 = arith.index_cast %c2_i32_42 : i32 to index
    %c0_50 = arith.constant 0 : index
    %c0_51 = arith.constant 0 : index
    %139 = vector.load %arg15[%138, %c0_50, %c0_51] : memref<8x2x16xf32, #tpu.memory_space<vmem>>, vector<1x2x16xf32>
    %140 = vector.shape_cast %139 : vector<1x2x16xf32> to vector<2x16xf32>
    %141 = vector.shape_cast %137 : vector<2x16xf32> to vector<1x2x16xf32>
    tpu.vector_store %arg15[%138, %c0_50, %c0_51], %141 {strides = array<i32>} : memref<8x2x16xf32, #tpu.memory_space<vmem>>, vector<1x2x16xf32>,
    %142 = vector.extract_strided_slice %136 {offsets = [0, 16], sizes = [2, 16], strides = [1, 1]} : vector<2x32xf32> to vector<2x16xf32>
    %c7_i32_52 = arith.constant 7 : i32
    %143 = arith.subi %c7_i32_52, %c2_i32_42 : i32
    %144 = arith.index_cast %143 : i32 to index
    %c0_53 = arith.constant 0 : index
    %c0_54 = arith.constant 0 : index
    %145 = vector.load %arg16[%144, %c0_53, %c0_54] : memref<8x2x16xf32, #tpu.memory_space<vmem>>, vector<1x2x16xf32>
    %146 = vector.shape_cast %145 : vector<1x2x16xf32> to vector<2x16xf32>
    %147 = vector.shape_cast %142 : vector<2x16xf32> to vector<1x2x16xf32>
    tpu.vector_store %arg16[%144, %c0_53, %c0_54], %147 {strides = array<i32>} : memref<8x2x16xf32, #tpu.memory_space<vmem>>, vector<1x2x16xf32>,
    %c3_i32 = arith.constant 3 : i32
    %c2_i32_55 = arith.constant 2 : i32
    %148 = arith.muli %c3_i32, %c2_i32_55 : i32
    %149 = tpu.assume_multiple %148, 2 : i32
    %150 = arith.index_cast %149 : i32 to index
    %c0_56 = arith.constant 0 : index
    %151 = vector.load %arg14[%150, %c0_56] : memref<16x128xf32, #tpu.memory_space<vmem>>, vector<2x128xf32>
    %c7_i32_57 = arith.constant 7 : i32
    %152 = arith.subi %c7_i32_57, %c3_i32 : i32
    %c2_i32_58 = arith.constant 2 : i32
    %153 = arith.muli %152, %c2_i32_58 : i32
    %154 = tpu.assume_multiple %153, 2 : i32
    %155 = arith.index_cast %154 : i32 to index
    %c0_59 = arith.constant 0 : index
    %156 = vector.load %arg14[%155, %c0_59] : memref<16x128xf32, #tpu.memory_space<vmem>>, vector<2x128xf32>
    %157 = arith.select %18, %151, %156 : vector<2x128xi1>, vector<2x128xf32>
    %cst_60 = arith.constant dense<0.000000e+00> : vector<2x128xf32>
    %158 = tpu.matmul %136, %26, %cst_60 {dimension_numbers = #tpu.dot_dimension_numbers<[1], [0], [0], [1], [0, 0, 1, 1], [], []>} : vector<2x32xf32>, vector<32x128xf32>, vector<2x128xf32> -> vector<2x128xf32>
    %159 = arith.addf %157, %158 : vector<2x128xf32>
    %160 = vector.extract_strided_slice %159 {offsets = [0, 0], sizes = [2, 96], strides = [1, 1]} : vector<2x128xf32> to vector<2x96xf32>
    %161 = arith.negf %160 : vector<2x96xf32>
    %162 = math.exp %161 : vector<2x96xf32>
    %cst_61 = arith.constant 1.000000e+00 : f32
    %163 = vector.broadcast %cst_61 : f32 to vector<2x96xf32>
    %164 = arith.addf %163, %162 : vector<2x96xf32>
    %165 = arith.divf %163, %164 : vector<2x96xf32>
    %166 = vector.extract_strided_slice %159 {offsets = [0, 96], sizes = [2, 32], strides = [1, 1]} : vector<2x128xf32> to vector<2x32xf32>
    %167 = math.tanh %166 : vector<2x32xf32>
    %168 = vector.extract_strided_slice %165 {offsets = [0, 32], sizes = [2, 32], strides = [1, 1]} : vector<2x96xf32> to vector<2x32xf32>
    %169 = arith.mulf %168, %133 : vector<2x32xf32>
    %170 = vector.extract_strided_slice %165 {offsets = [0, 0], sizes = [2, 32], strides = [1, 1]} : vector<2x96xf32> to vector<2x32xf32>
    %171 = arith.mulf %170, %167 : vector<2x32xf32>
    %172 = arith.addf %169, %171 : vector<2x32xf32>
    %173 = vector.extract_strided_slice %165 {offsets = [0, 64], sizes = [2, 32], strides = [1, 1]} : vector<2x96xf32> to vector<2x32xf32>
    %174 = math.tanh %172 : vector<2x32xf32>
    %175 = arith.mulf %173, %174 : vector<2x32xf32>
    %176 = vector.extract_strided_slice %175 {offsets = [0, 0], sizes = [2, 16], strides = [1, 1]} : vector<2x32xf32> to vector<2x16xf32>
    %177 = arith.index_cast %c3_i32 : i32 to index
    %c0_62 = arith.constant 0 : index
    %c0_63 = arith.constant 0 : index
    %178 = vector.load %arg15[%177, %c0_62, %c0_63] : memref<8x2x16xf32, #tpu.memory_space<vmem>>, vector<1x2x16xf32>
    %179 = vector.shape_cast %178 : vector<1x2x16xf32> to vector<2x16xf32>
    %180 = vector.shape_cast %176 : vector<2x16xf32> to vector<1x2x16xf32>
    tpu.vector_store %arg15[%177, %c0_62, %c0_63], %180 {strides = array<i32>} : memref<8x2x16xf32, #tpu.memory_space<vmem>>, vector<1x2x16xf32>,
    %181 = vector.extract_strided_slice %175 {offsets = [0, 16], sizes = [2, 16], strides = [1, 1]} : vector<2x32xf32> to vector<2x16xf32>
    %c7_i32_64 = arith.constant 7 : i32
    %182 = arith.subi %c7_i32_64, %c3_i32 : i32
    %183 = arith.index_cast %182 : i32 to index
    %c0_65 = arith.constant 0 : index
    %c0_66 = arith.constant 0 : index
    %184 = vector.load %arg16[%183, %c0_65, %c0_66] : memref<8x2x16xf32, #tpu.memory_space<vmem>>, vector<1x2x16xf32>
    %185 = vector.shape_cast %184 : vector<1x2x16xf32> to vector<2x16xf32>
    %186 = vector.shape_cast %181 : vector<2x16xf32> to vector<1x2x16xf32>
    tpu.vector_store %arg16[%183, %c0_65, %c0_66], %186 {strides = array<i32>} : memref<8x2x16xf32, #tpu.memory_space<vmem>>, vector<1x2x16xf32>,
    %c4_i32 = arith.constant 4 : i32
    %c2_i32_67 = arith.constant 2 : i32
    %187 = arith.muli %c4_i32, %c2_i32_67 : i32
    %188 = tpu.assume_multiple %187, 2 : i32
    %189 = arith.index_cast %188 : i32 to index
    %c0_68 = arith.constant 0 : index
    %190 = vector.load %arg14[%189, %c0_68] : memref<16x128xf32, #tpu.memory_space<vmem>>, vector<2x128xf32>
    %c7_i32_69 = arith.constant 7 : i32
    %191 = arith.subi %c7_i32_69, %c4_i32 : i32
    %c2_i32_70 = arith.constant 2 : i32
    %192 = arith.muli %191, %c2_i32_70 : i32
    %193 = tpu.assume_multiple %192, 2 : i32
    %194 = arith.index_cast %193 : i32 to index
    %c0_71 = arith.constant 0 : index
    %195 = vector.load %arg14[%194, %c0_71] : memref<16x128xf32, #tpu.memory_space<vmem>>, vector<2x128xf32>
    %196 = arith.select %18, %190, %195 : vector<2x128xi1>, vector<2x128xf32>
    %cst_72 = arith.constant dense<0.000000e+00> : vector<2x128xf32>
    %197 = tpu.matmul %175, %26, %cst_72 {dimension_numbers = #tpu.dot_dimension_numbers<[1], [0], [0], [1], [0, 0, 1, 1], [], []>} : vector<2x32xf32>, vector<32x128xf32>, vector<2x128xf32> -> vector<2x128xf32>
    %198 = arith.addf %196, %197 : vector<2x128xf32>
    %199 = vector.extract_strided_slice %198 {offsets = [0, 0], sizes = [2, 96], strides = [1, 1]} : vector<2x128xf32> to vector<2x96xf32>
    %200 = arith.negf %199 : vector<2x96xf32>
    %201 = math.exp %200 : vector<2x96xf32>
    %cst_73 = arith.constant 1.000000e+00 : f32
    %202 = vector.broadcast %cst_73 : f32 to vector<2x96xf32>
    %203 = arith.addf %202, %201 : vector<2x96xf32>
    %204 = arith.divf %202, %203 : vector<2x96xf32>
    %205 = vector.extract_strided_slice %198 {offsets = [0, 96], sizes = [2, 32], strides = [1, 1]} : vector<2x128xf32> to vector<2x32xf32>
    %206 = math.tanh %205 : vector<2x32xf32>
    %207 = vector.extract_strided_slice %204 {offsets = [0, 32], sizes = [2, 32], strides = [1, 1]} : vector<2x96xf32> to vector<2x32xf32>
    %208 = arith.mulf %207, %172 : vector<2x32xf32>
    %209 = vector.extract_strided_slice %204 {offsets = [0, 0], sizes = [2, 32], strides = [1, 1]} : vector<2x96xf32> to vector<2x32xf32>
    %210 = arith.mulf %209, %206 : vector<2x32xf32>
    %211 = arith.addf %208, %210 : vector<2x32xf32>
    %212 = vector.extract_strided_slice %204 {offsets = [0, 64], sizes = [2, 32], strides = [1, 1]} : vector<2x96xf32> to vector<2x32xf32>
    %213 = math.tanh %211 : vector<2x32xf32>
    %214 = arith.mulf %212, %213 : vector<2x32xf32>
    %215 = vector.extract_strided_slice %214 {offsets = [0, 0], sizes = [2, 16], strides = [1, 1]} : vector<2x32xf32> to vector<2x16xf32>
    %216 = arith.index_cast %c4_i32 : i32 to index
    %c0_74 = arith.constant 0 : index
    %c0_75 = arith.constant 0 : index
    %217 = vector.load %arg15[%216, %c0_74, %c0_75] : memref<8x2x16xf32, #tpu.memory_space<vmem>>, vector<1x2x16xf32>
    %218 = vector.shape_cast %217 : vector<1x2x16xf32> to vector<2x16xf32>
    %219 = vector.shape_cast %215 : vector<2x16xf32> to vector<1x2x16xf32>
    tpu.vector_store %arg15[%216, %c0_74, %c0_75], %219 {strides = array<i32>} : memref<8x2x16xf32, #tpu.memory_space<vmem>>, vector<1x2x16xf32>,
    %220 = vector.extract_strided_slice %214 {offsets = [0, 16], sizes = [2, 16], strides = [1, 1]} : vector<2x32xf32> to vector<2x16xf32>
    %c7_i32_76 = arith.constant 7 : i32
    %221 = arith.subi %c7_i32_76, %c4_i32 : i32
    %222 = arith.index_cast %221 : i32 to index
    %c0_77 = arith.constant 0 : index
    %c0_78 = arith.constant 0 : index
    %223 = vector.load %arg16[%222, %c0_77, %c0_78] : memref<8x2x16xf32, #tpu.memory_space<vmem>>, vector<1x2x16xf32>
    %224 = vector.shape_cast %223 : vector<1x2x16xf32> to vector<2x16xf32>
    %225 = vector.shape_cast %220 : vector<2x16xf32> to vector<1x2x16xf32>
    tpu.vector_store %arg16[%222, %c0_77, %c0_78], %225 {strides = array<i32>} : memref<8x2x16xf32, #tpu.memory_space<vmem>>, vector<1x2x16xf32>,
    %c5_i32 = arith.constant 5 : i32
    %c2_i32_79 = arith.constant 2 : i32
    %226 = arith.muli %c5_i32, %c2_i32_79 : i32
    %227 = tpu.assume_multiple %226, 2 : i32
    %228 = arith.index_cast %227 : i32 to index
    %c0_80 = arith.constant 0 : index
    %229 = vector.load %arg14[%228, %c0_80] : memref<16x128xf32, #tpu.memory_space<vmem>>, vector<2x128xf32>
    %c7_i32_81 = arith.constant 7 : i32
    %230 = arith.subi %c7_i32_81, %c5_i32 : i32
    %c2_i32_82 = arith.constant 2 : i32
    %231 = arith.muli %230, %c2_i32_82 : i32
    %232 = tpu.assume_multiple %231, 2 : i32
    %233 = arith.index_cast %232 : i32 to index
    %c0_83 = arith.constant 0 : index
    %234 = vector.load %arg14[%233, %c0_83] : memref<16x128xf32, #tpu.memory_space<vmem>>, vector<2x128xf32>
    %235 = arith.select %18, %229, %234 : vector<2x128xi1>, vector<2x128xf32>
    %cst_84 = arith.constant dense<0.000000e+00> : vector<2x128xf32>
    %236 = tpu.matmul %214, %26, %cst_84 {dimension_numbers = #tpu.dot_dimension_numbers<[1], [0], [0], [1], [0, 0, 1, 1], [], []>} : vector<2x32xf32>, vector<32x128xf32>, vector<2x128xf32> -> vector<2x128xf32>
    %237 = arith.addf %235, %236 : vector<2x128xf32>
    %238 = vector.extract_strided_slice %237 {offsets = [0, 0], sizes = [2, 96], strides = [1, 1]} : vector<2x128xf32> to vector<2x96xf32>
    %239 = arith.negf %238 : vector<2x96xf32>
    %240 = math.exp %239 : vector<2x96xf32>
    %cst_85 = arith.constant 1.000000e+00 : f32
    %241 = vector.broadcast %cst_85 : f32 to vector<2x96xf32>
    %242 = arith.addf %241, %240 : vector<2x96xf32>
    %243 = arith.divf %241, %242 : vector<2x96xf32>
    %244 = vector.extract_strided_slice %237 {offsets = [0, 96], sizes = [2, 32], strides = [1, 1]} : vector<2x128xf32> to vector<2x32xf32>
    %245 = math.tanh %244 : vector<2x32xf32>
    %246 = vector.extract_strided_slice %243 {offsets = [0, 32], sizes = [2, 32], strides = [1, 1]} : vector<2x96xf32> to vector<2x32xf32>
    %247 = arith.mulf %246, %211 : vector<2x32xf32>
    %248 = vector.extract_strided_slice %243 {offsets = [0, 0], sizes = [2, 32], strides = [1, 1]} : vector<2x96xf32> to vector<2x32xf32>
    %249 = arith.mulf %248, %245 : vector<2x32xf32>
    %250 = arith.addf %247, %249 : vector<2x32xf32>
    %251 = vector.extract_strided_slice %243 {offsets = [0, 64], sizes = [2, 32], strides = [1, 1]} : vector<2x96xf32> to vector<2x32xf32>
    %252 = math.tanh %250 : vector<2x32xf32>
    %253 = arith.mulf %251, %252 : vector<2x32xf32>
    %254 = vector.extract_strided_slice %253 {offsets = [0, 0], sizes = [2, 16], strides = [1, 1]} : vector<2x32xf32> to vector<2x16xf32>
    %255 = arith.index_cast %c5_i32 : i32 to index
    %c0_86 = arith.constant 0 : index
    %c0_87 = arith.constant 0 : index
    %256 = vector.load %arg15[%255, %c0_86, %c0_87] : memref<8x2x16xf32, #tpu.memory_space<vmem>>, vector<1x2x16xf32>
    %257 = vector.shape_cast %256 : vector<1x2x16xf32> to vector<2x16xf32>
    %258 = vector.shape_cast %254 : vector<2x16xf32> to vector<1x2x16xf32>
    tpu.vector_store %arg15[%255, %c0_86, %c0_87], %258 {strides = array<i32>} : memref<8x2x16xf32, #tpu.memory_space<vmem>>, vector<1x2x16xf32>,
    %259 = vector.extract_strided_slice %253 {offsets = [0, 16], sizes = [2, 16], strides = [1, 1]} : vector<2x32xf32> to vector<2x16xf32>
    %c7_i32_88 = arith.constant 7 : i32
    %260 = arith.subi %c7_i32_88, %c5_i32 : i32
    %261 = arith.index_cast %260 : i32 to index
    %c0_89 = arith.constant 0 : index
    %c0_90 = arith.constant 0 : index
    %262 = vector.load %arg16[%261, %c0_89, %c0_90] : memref<8x2x16xf32, #tpu.memory_space<vmem>>, vector<1x2x16xf32>
    %263 = vector.shape_cast %262 : vector<1x2x16xf32> to vector<2x16xf32>
    %264 = vector.shape_cast %259 : vector<2x16xf32> to vector<1x2x16xf32>
    tpu.vector_store %arg16[%261, %c0_89, %c0_90], %264 {strides = array<i32>} : memref<8x2x16xf32, #tpu.memory_space<vmem>>, vector<1x2x16xf32>,
    %c6_i32 = arith.constant 6 : i32
    %c2_i32_91 = arith.constant 2 : i32
    %265 = arith.muli %c6_i32, %c2_i32_91 : i32
    %266 = tpu.assume_multiple %265, 2 : i32
    %267 = arith.index_cast %266 : i32 to index
    %c0_92 = arith.constant 0 : index
    %268 = vector.load %arg14[%267, %c0_92] : memref<16x128xf32, #tpu.memory_space<vmem>>, vector<2x128xf32>
    %c7_i32_93 = arith.constant 7 : i32
    %269 = arith.subi %c7_i32_93, %c6_i32 : i32
    %c2_i32_94 = arith.constant 2 : i32
    %270 = arith.muli %269, %c2_i32_94 : i32
    %271 = tpu.assume_multiple %270, 2 : i32
    %272 = arith.index_cast %271 : i32 to index
    %c0_95 = arith.constant 0 : index
    %273 = vector.load %arg14[%272, %c0_95] : memref<16x128xf32, #tpu.memory_space<vmem>>, vector<2x128xf32>
    %274 = arith.select %18, %268, %273 : vector<2x128xi1>, vector<2x128xf32>
    %cst_96 = arith.constant dense<0.000000e+00> : vector<2x128xf32>
    %275 = tpu.matmul %253, %26, %cst_96 {dimension_numbers = #tpu.dot_dimension_numbers<[1], [0], [0], [1], [0, 0, 1, 1], [], []>} : vector<2x32xf32>, vector<32x128xf32>, vector<2x128xf32> -> vector<2x128xf32>
    %276 = arith.addf %274, %275 : vector<2x128xf32>
    %277 = vector.extract_strided_slice %276 {offsets = [0, 0], sizes = [2, 96], strides = [1, 1]} : vector<2x128xf32> to vector<2x96xf32>
    %278 = arith.negf %277 : vector<2x96xf32>
    %279 = math.exp %278 : vector<2x96xf32>
    %cst_97 = arith.constant 1.000000e+00 : f32
    %280 = vector.broadcast %cst_97 : f32 to vector<2x96xf32>
    %281 = arith.addf %280, %279 : vector<2x96xf32>
    %282 = arith.divf %280, %281 : vector<2x96xf32>
    %283 = vector.extract_strided_slice %276 {offsets = [0, 96], sizes = [2, 32], strides = [1, 1]} : vector<2x128xf32> to vector<2x32xf32>
    %284 = math.tanh %283 : vector<2x32xf32>
    %285 = vector.extract_strided_slice %282 {offsets = [0, 32], sizes = [2, 32], strides = [1, 1]} : vector<2x96xf32> to vector<2x32xf32>
    %286 = arith.mulf %285, %250 : vector<2x32xf32>
    %287 = vector.extract_strided_slice %282 {offsets = [0, 0], sizes = [2, 32], strides = [1, 1]} : vector<2x96xf32> to vector<2x32xf32>
    %288 = arith.mulf %287, %284 : vector<2x32xf32>
    %289 = arith.addf %286, %288 : vector<2x32xf32>
    %290 = vector.extract_strided_slice %282 {offsets = [0, 64], sizes = [2, 32], strides = [1, 1]} : vector<2x96xf32> to vector<2x32xf32>
    %291 = math.tanh %289 : vector<2x32xf32>
    %292 = arith.mulf %290, %291 : vector<2x32xf32>
    %293 = vector.extract_strided_slice %292 {offsets = [0, 0], sizes = [2, 16], strides = [1, 1]} : vector<2x32xf32> to vector<2x16xf32>
    %294 = arith.index_cast %c6_i32 : i32 to index
    %c0_98 = arith.constant 0 : index
    %c0_99 = arith.constant 0 : index
    %295 = vector.load %arg15[%294, %c0_98, %c0_99] : memref<8x2x16xf32, #tpu.memory_space<vmem>>, vector<1x2x16xf32>
    %296 = vector.shape_cast %295 : vector<1x2x16xf32> to vector<2x16xf32>
    %297 = vector.shape_cast %293 : vector<2x16xf32> to vector<1x2x16xf32>
    tpu.vector_store %arg15[%294, %c0_98, %c0_99], %297 {strides = array<i32>} : memref<8x2x16xf32, #tpu.memory_space<vmem>>, vector<1x2x16xf32>,
    %298 = vector.extract_strided_slice %292 {offsets = [0, 16], sizes = [2, 16], strides = [1, 1]} : vector<2x32xf32> to vector<2x16xf32>
    %c7_i32_100 = arith.constant 7 : i32
    %299 = arith.subi %c7_i32_100, %c6_i32 : i32
    %300 = arith.index_cast %299 : i32 to index
    %c0_101 = arith.constant 0 : index
    %c0_102 = arith.constant 0 : index
    %301 = vector.load %arg16[%300, %c0_101, %c0_102] : memref<8x2x16xf32, #tpu.memory_space<vmem>>, vector<1x2x16xf32>
    %302 = vector.shape_cast %301 : vector<1x2x16xf32> to vector<2x16xf32>
    %303 = vector.shape_cast %298 : vector<2x16xf32> to vector<1x2x16xf32>
    tpu.vector_store %arg16[%300, %c0_101, %c0_102], %303 {strides = array<i32>} : memref<8x2x16xf32, #tpu.memory_space<vmem>>, vector<1x2x16xf32>,
    %c7_i32_103 = arith.constant 7 : i32
    %c2_i32_104 = arith.constant 2 : i32
    %304 = arith.muli %c7_i32_103, %c2_i32_104 : i32
    %305 = tpu.assume_multiple %304, 2 : i32
    %306 = arith.index_cast %305 : i32 to index
    %c0_105 = arith.constant 0 : index
    %307 = vector.load %arg14[%306, %c0_105] : memref<16x128xf32, #tpu.memory_space<vmem>>, vector<2x128xf32>
    %c7_i32_106 = arith.constant 7 : i32
    %308 = arith.subi %c7_i32_106, %c7_i32_103 : i32
    %c2_i32_107 = arith.constant 2 : i32
    %309 = arith.muli %308, %c2_i32_107 : i32
    %310 = tpu.assume_multiple %309, 2 : i32
    %311 = arith.index_cast %310 : i32 to index
    %c0_108 = arith.constant 0 : index
    %312 = vector.load %arg14[%311, %c0_108] : memref<16x128xf32, #tpu.memory_space<vmem>>, vector<2x128xf32>
    %313 = arith.select %18, %307, %312 : vector<2x128xi1>, vector<2x128xf32>
    %cst_109 = arith.constant dense<0.000000e+00> : vector<2x128xf32>
    %314 = tpu.matmul %292, %26, %cst_109 {dimension_numbers = #tpu.dot_dimension_numbers<[1], [0], [0], [1], [0, 0, 1, 1], [], []>} : vector<2x32xf32>, vector<32x128xf32>, vector<2x128xf32> -> vector<2x128xf32>
    %315 = arith.addf %313, %314 : vector<2x128xf32>
    %316 = vector.extract_strided_slice %315 {offsets = [0, 0], sizes = [2, 96], strides = [1, 1]} : vector<2x128xf32> to vector<2x96xf32>
    %317 = arith.negf %316 : vector<2x96xf32>
    %318 = math.exp %317 : vector<2x96xf32>
    %cst_110 = arith.constant 1.000000e+00 : f32
    %319 = vector.broadcast %cst_110 : f32 to vector<2x96xf32>
    %320 = arith.addf %319, %318 : vector<2x96xf32>
    %321 = arith.divf %319, %320 : vector<2x96xf32>
    %322 = vector.extract_strided_slice %315 {offsets = [0, 96], sizes = [2, 32], strides = [1, 1]} : vector<2x128xf32> to vector<2x32xf32>
    %323 = math.tanh %322 : vector<2x32xf32>
    %324 = vector.extract_strided_slice %321 {offsets = [0, 32], sizes = [2, 32], strides = [1, 1]} : vector<2x96xf32> to vector<2x32xf32>
    %325 = arith.mulf %324, %289 : vector<2x32xf32>
    %326 = vector.extract_strided_slice %321 {offsets = [0, 0], sizes = [2, 32], strides = [1, 1]} : vector<2x96xf32> to vector<2x32xf32>
    %327 = arith.mulf %326, %323 : vector<2x32xf32>
    %328 = arith.addf %325, %327 : vector<2x32xf32>
    %329 = vector.extract_strided_slice %321 {offsets = [0, 64], sizes = [2, 32], strides = [1, 1]} : vector<2x96xf32> to vector<2x32xf32>
    %330 = math.tanh %328 : vector<2x32xf32>
    %331 = arith.mulf %329, %330 : vector<2x32xf32>
    %332 = vector.extract_strided_slice %331 {offsets = [0, 0], sizes = [2, 16], strides = [1, 1]} : vector<2x32xf32> to vector<2x16xf32>
    %333 = arith.index_cast %c7_i32_103 : i32 to index
    %c0_111 = arith.constant 0 : index
    %c0_112 = arith.constant 0 : index
    %334 = vector.load %arg15[%333, %c0_111, %c0_112] : memref<8x2x16xf32, #tpu.memory_space<vmem>>, vector<1x2x16xf32>
    %335 = vector.shape_cast %334 : vector<1x2x16xf32> to vector<2x16xf32>
    %336 = vector.shape_cast %332 : vector<2x16xf32> to vector<1x2x16xf32>
    tpu.vector_store %arg15[%333, %c0_111, %c0_112], %336 {strides = array<i32>} : memref<8x2x16xf32, #tpu.memory_space<vmem>>, vector<1x2x16xf32>,
    %337 = vector.extract_strided_slice %331 {offsets = [0, 16], sizes = [2, 16], strides = [1, 1]} : vector<2x32xf32> to vector<2x16xf32>
    %c7_i32_113 = arith.constant 7 : i32
    %338 = arith.subi %c7_i32_113, %c7_i32_103 : i32
    %339 = arith.index_cast %338 : i32 to index
    %c0_114 = arith.constant 0 : index
    %c0_115 = arith.constant 0 : index
    %340 = vector.load %arg16[%339, %c0_114, %c0_115] : memref<8x2x16xf32, #tpu.memory_space<vmem>>, vector<1x2x16xf32>
    %341 = vector.shape_cast %340 : vector<1x2x16xf32> to vector<2x16xf32>
    %342 = vector.shape_cast %337 : vector<2x16xf32> to vector<1x2x16xf32>
    tpu.vector_store %arg16[%339, %c0_114, %c0_115], %342 {strides = array<i32>} : memref<8x2x16xf32, #tpu.memory_space<vmem>>, vector<1x2x16xf32>,
    %c8_i32 = arith.constant 8 : i32
    %c0_116 = arith.constant 0 : index
    %c0_117 = arith.constant 0 : index
    %c0_118 = arith.constant 0 : index
    %343 = vector.load %arg12[%c0_116, %c0_117, %c0_118] : memref<2x2x32xf32, #tpu.memory_space<vmem>>, vector<1x2x32xf32>
    %344 = vector.shape_cast %343 : vector<1x2x32xf32> to vector<2x32xf32>
    %345 = vector.shape_cast %331 : vector<2x32xf32> to vector<1x2x32xf32>
    tpu.vector_store %arg12[%c0_116, %c0_117, %c0_118], %345 {strides = array<i32>} : memref<2x2x32xf32, #tpu.memory_space<vmem>>, vector<1x2x32xf32>,
    %c0_119 = arith.constant 0 : index
    %c0_120 = arith.constant 0 : index
    %c0_121 = arith.constant 0 : index
    %346 = vector.load %arg13[%c0_119, %c0_120, %c0_121] : memref<2x2x32xf32, #tpu.memory_space<vmem>>, vector<1x2x32xf32>
    %347 = vector.shape_cast %346 : vector<1x2x32xf32> to vector<2x32xf32>
    %348 = vector.shape_cast %328 : vector<2x32xf32> to vector<1x2x32xf32>
    tpu.vector_store %arg13[%c0_119, %c0_120, %c0_121], %348 {strides = array<i32>} : memref<2x2x32xf32, #tpu.memory_space<vmem>>, vector<1x2x32xf32>,
    %c0_122 = arith.constant 0 : index
    %c0_123 = arith.constant 0 : index
    %c0_124 = arith.constant 0 : index
    %349 = vector.load %arg15[%c0_122, %c0_123, %c0_124] : memref<8x2x16xf32, #tpu.memory_space<vmem>>, vector<8x2x16xf32>
    %350 = vector.shape_cast %349 : vector<8x2x16xf32> to vector<16x16xf32>
    %c0_125 = arith.constant 0 : index
    %c0_126 = arith.constant 0 : index
    %c0_127 = arith.constant 0 : index
    %351 = vector.load %arg16[%c0_125, %c0_126, %c0_127] : memref<8x2x16xf32, #tpu.memory_space<vmem>>, vector<8x2x16xf32>
    %352 = vector.shape_cast %351 : vector<8x2x16xf32> to vector<16x16xf32>
    %c0_128 = arith.constant 0 : index
    %c0_129 = arith.constant 0 : index
    %353 = vector.load %arg6[%c0_128, %c0_129] : memref<1x128xf32, #tpu.memory_space<vmem>>, vector<1x128xf32>
    %c0_130 = arith.constant 0 : index
    %c0_131 = arith.constant 0 : index
    %354 = vector.load %arg2[%c0_130, %c0_131] : memref<32x128xf32, #tpu.memory_space<vmem>>, vector<16x128xf32>
    %cst_132 = arith.constant dense<0.000000e+00> : vector<16x128xf32>
    %355 = tpu.matmul %350, %354, %cst_132 {dimension_numbers = #tpu.dot_dimension_numbers<[1], [0], [0], [1], [0, 0, 1, 1], [], []>} : vector<16x16xf32>, vector<16x128xf32>, vector<16x128xf32> -> vector<16x128xf32>
    %c16 = arith.constant 16 : index
    %c0_133 = arith.constant 0 : index
    %356 = vector.load %arg2[%c16, %c0_133] : memref<32x128xf32, #tpu.memory_space<vmem>>, vector<16x128xf32>
    %cst_134 = arith.constant dense<0.000000e+00> : vector<16x128xf32>
    %357 = tpu.matmul %352, %356, %cst_134 {dimension_numbers = #tpu.dot_dimension_numbers<[1], [0], [0], [1], [0, 0, 1, 1], [], []>} : vector<16x16xf32>, vector<16x128xf32>, vector<16x128xf32> -> vector<16x128xf32>
    %358 = arith.addf %355, %357 : vector<16x128xf32>
    %359 = vector.broadcast %353 : vector<1x128xf32> to vector<16x128xf32>
    %360 = arith.addf %358, %359 : vector<16x128xf32>
    %c0_135 = arith.constant 0 : index
    %c0_136 = arith.constant 0 : index
    %361 = vector.load %arg14[%c0_135, %c0_136] : memref<16x128xf32, #tpu.memory_space<vmem>>, vector<16x128xf32>
    tpu.vector_store %arg14[%c0_135, %c0_136], %360 {strides = array<i32>} : memref<16x128xf32, #tpu.memory_space<vmem>>, vector<16x128xf32>,
    %c0_137 = arith.constant 0 : index
    %c0_138 = arith.constant 0 : index
    %362 = vector.load %arg4[%c0_137, %c0_138] : memref<32x128xf32, #tpu.memory_space<vmem>>, vector<32x128xf32>
    %c1 = arith.constant 1 : index
    %c0_139 = arith.constant 0 : index
    %c0_140 = arith.constant 0 : index
    %363 = vector.load %arg7[%c1, %c0_139, %c0_140] : memref<2x2x32xf32, #tpu.memory_space<vmem>>, vector<1x2x32xf32>
    %364 = vector.shape_cast %363 : vector<1x2x32xf32> to vector<2x32xf32>
    %c1_141 = arith.constant 1 : index
    %c0_142 = arith.constant 0 : index
    %c0_143 = arith.constant 0 : index
    %365 = vector.load %arg8[%c1_141, %c0_142, %c0_143] : memref<2x2x32xf32, #tpu.memory_space<vmem>>, vector<1x2x32xf32>
    %366 = vector.shape_cast %365 : vector<1x2x32xf32> to vector<2x32xf32>
    %c0_i32_144 = arith.constant 0 : i32
    %c2_i32_145 = arith.constant 2 : i32
    %367 = arith.muli %c0_i32_144, %c2_i32_145 : i32
    %368 = tpu.assume_multiple %367, 2 : i32
    %369 = arith.index_cast %368 : i32 to index
    %c0_146 = arith.constant 0 : index
    %370 = vector.load %arg14[%369, %c0_146] : memref<16x128xf32, #tpu.memory_space<vmem>>, vector<2x128xf32>
    %c7_i32_147 = arith.constant 7 : i32
    %371 = arith.subi %c7_i32_147, %c0_i32_144 : i32
    %c2_i32_148 = arith.constant 2 : i32
    %372 = arith.muli %371, %c2_i32_148 : i32
    %373 = tpu.assume_multiple %372, 2 : i32
    %374 = arith.index_cast %373 : i32 to index
    %c0_149 = arith.constant 0 : index
    %375 = vector.load %arg14[%374, %c0_149] : memref<16x128xf32, #tpu.memory_space<vmem>>, vector<2x128xf32>
    %376 = arith.select %18, %370, %375 : vector<2x128xi1>, vector<2x128xf32>
    %cst_150 = arith.constant dense<0.000000e+00> : vector<2x128xf32>
    %377 = tpu.matmul %364, %362, %cst_150 {dimension_numbers = #tpu.dot_dimension_numbers<[1], [0], [0], [1], [0, 0, 1, 1], [], []>} : vector<2x32xf32>, vector<32x128xf32>, vector<2x128xf32> -> vector<2x128xf32>
    %378 = arith.addf %376, %377 : vector<2x128xf32>
    %379 = vector.extract_strided_slice %378 {offsets = [0, 0], sizes = [2, 96], strides = [1, 1]} : vector<2x128xf32> to vector<2x96xf32>
    %380 = arith.negf %379 : vector<2x96xf32>
    %381 = math.exp %380 : vector<2x96xf32>
    %cst_151 = arith.constant 1.000000e+00 : f32
    %382 = vector.broadcast %cst_151 : f32 to vector<2x96xf32>
    %383 = arith.addf %382, %381 : vector<2x96xf32>
    %384 = arith.divf %382, %383 : vector<2x96xf32>
    %385 = vector.extract_strided_slice %378 {offsets = [0, 96], sizes = [2, 32], strides = [1, 1]} : vector<2x128xf32> to vector<2x32xf32>
    %386 = math.tanh %385 : vector<2x32xf32>
    %387 = vector.extract_strided_slice %384 {offsets = [0, 32], sizes = [2, 32], strides = [1, 1]} : vector<2x96xf32> to vector<2x32xf32>
    %388 = arith.mulf %387, %366 : vector<2x32xf32>
    %389 = vector.extract_strided_slice %384 {offsets = [0, 0], sizes = [2, 32], strides = [1, 1]} : vector<2x96xf32> to vector<2x32xf32>
    %390 = arith.mulf %389, %386 : vector<2x32xf32>
    %391 = arith.addf %388, %390 : vector<2x32xf32>
    %392 = vector.extract_strided_slice %384 {offsets = [0, 64], sizes = [2, 32], strides = [1, 1]} : vector<2x96xf32> to vector<2x32xf32>
    %393 = math.tanh %391 : vector<2x32xf32>
    %394 = arith.mulf %392, %393 : vector<2x32xf32>
    %395 = vector.extract_strided_slice %394 {offsets = [0, 0], sizes = [2, 16], strides = [1, 1]} : vector<2x32xf32> to vector<2x16xf32>
    %396 = arith.index_cast %c0_i32_144 : i32 to index
    %c0_152 = arith.constant 0 : index
    %c0_153 = arith.constant 0 : index
    %397 = vector.load %arg15[%396, %c0_152, %c0_153] : memref<8x2x16xf32, #tpu.memory_space<vmem>>, vector<1x2x16xf32>
    %398 = vector.shape_cast %397 : vector<1x2x16xf32> to vector<2x16xf32>
    %399 = vector.shape_cast %395 : vector<2x16xf32> to vector<1x2x16xf32>
    tpu.vector_store %arg15[%396, %c0_152, %c0_153], %399 {strides = array<i32>} : memref<8x2x16xf32, #tpu.memory_space<vmem>>, vector<1x2x16xf32>,
    %400 = vector.extract_strided_slice %394 {offsets = [0, 16], sizes = [2, 16], strides = [1, 1]} : vector<2x32xf32> to vector<2x16xf32>
    %c7_i32_154 = arith.constant 7 : i32
    %401 = arith.subi %c7_i32_154, %c0_i32_144 : i32
    %402 = arith.index_cast %401 : i32 to index
    %c0_155 = arith.constant 0 : index
    %c0_156 = arith.constant 0 : index
    %403 = vector.load %arg16[%402, %c0_155, %c0_156] : memref<8x2x16xf32, #tpu.memory_space<vmem>>, vector<1x2x16xf32>
    %404 = vector.shape_cast %403 : vector<1x2x16xf32> to vector<2x16xf32>
    %405 = vector.shape_cast %400 : vector<2x16xf32> to vector<1x2x16xf32>
    tpu.vector_store %arg16[%402, %c0_155, %c0_156], %405 {strides = array<i32>} : memref<8x2x16xf32, #tpu.memory_space<vmem>>, vector<1x2x16xf32>,
    %c1_i32_157 = arith.constant 1 : i32
    %c2_i32_158 = arith.constant 2 : i32
    %406 = arith.muli %c1_i32_157, %c2_i32_158 : i32
    %407 = tpu.assume_multiple %406, 2 : i32
    %408 = arith.index_cast %407 : i32 to index
    %c0_159 = arith.constant 0 : index
    %409 = vector.load %arg14[%408, %c0_159] : memref<16x128xf32, #tpu.memory_space<vmem>>, vector<2x128xf32>
    %c7_i32_160 = arith.constant 7 : i32
    %410 = arith.subi %c7_i32_160, %c1_i32_157 : i32
    %c2_i32_161 = arith.constant 2 : i32
    %411 = arith.muli %410, %c2_i32_161 : i32
    %412 = tpu.assume_multiple %411, 2 : i32
    %413 = arith.index_cast %412 : i32 to index
    %c0_162 = arith.constant 0 : index
    %414 = vector.load %arg14[%413, %c0_162] : memref<16x128xf32, #tpu.memory_space<vmem>>, vector<2x128xf32>
    %415 = arith.select %18, %409, %414 : vector<2x128xi1>, vector<2x128xf32>
    %cst_163 = arith.constant dense<0.000000e+00> : vector<2x128xf32>
    %416 = tpu.matmul %394, %362, %cst_163 {dimension_numbers = #tpu.dot_dimension_numbers<[1], [0], [0], [1], [0, 0, 1, 1], [], []>} : vector<2x32xf32>, vector<32x128xf32>, vector<2x128xf32> -> vector<2x128xf32>
    %417 = arith.addf %415, %416 : vector<2x128xf32>
    %418 = vector.extract_strided_slice %417 {offsets = [0, 0], sizes = [2, 96], strides = [1, 1]} : vector<2x128xf32> to vector<2x96xf32>
    %419 = arith.negf %418 : vector<2x96xf32>
    %420 = math.exp %419 : vector<2x96xf32>
    %cst_164 = arith.constant 1.000000e+00 : f32
    %421 = vector.broadcast %cst_164 : f32 to vector<2x96xf32>
    %422 = arith.addf %421, %420 : vector<2x96xf32>
    %423 = arith.divf %421, %422 : vector<2x96xf32>
    %424 = vector.extract_strided_slice %417 {offsets = [0, 96], sizes = [2, 32], strides = [1, 1]} : vector<2x128xf32> to vector<2x32xf32>
    %425 = math.tanh %424 : vector<2x32xf32>
    %426 = vector.extract_strided_slice %423 {offsets = [0, 32], sizes = [2, 32], strides = [1, 1]} : vector<2x96xf32> to vector<2x32xf32>
    %427 = arith.mulf %426, %391 : vector<2x32xf32>
    %428 = vector.extract_strided_slice %423 {offsets = [0, 0], sizes = [2, 32], strides = [1, 1]} : vector<2x96xf32> to vector<2x32xf32>
    %429 = arith.mulf %428, %425 : vector<2x32xf32>
    %430 = arith.addf %427, %429 : vector<2x32xf32>
    %431 = vector.extract_strided_slice %423 {offsets = [0, 64], sizes = [2, 32], strides = [1, 1]} : vector<2x96xf32> to vector<2x32xf32>
    %432 = math.tanh %430 : vector<2x32xf32>
    %433 = arith.mulf %431, %432 : vector<2x32xf32>
    %434 = vector.extract_strided_slice %433 {offsets = [0, 0], sizes = [2, 16], strides = [1, 1]} : vector<2x32xf32> to vector<2x16xf32>
    %435 = arith.index_cast %c1_i32_157 : i32 to index
    %c0_165 = arith.constant 0 : index
    %c0_166 = arith.constant 0 : index
    %436 = vector.load %arg15[%435, %c0_165, %c0_166] : memref<8x2x16xf32, #tpu.memory_space<vmem>>, vector<1x2x16xf32>
    %437 = vector.shape_cast %436 : vector<1x2x16xf32> to vector<2x16xf32>
    %438 = vector.shape_cast %434 : vector<2x16xf32> to vector<1x2x16xf32>
    tpu.vector_store %arg15[%435, %c0_165, %c0_166], %438 {strides = array<i32>} : memref<8x2x16xf32, #tpu.memory_space<vmem>>, vector<1x2x16xf32>,
    %439 = vector.extract_strided_slice %433 {offsets = [0, 16], sizes = [2, 16], strides = [1, 1]} : vector<2x32xf32> to vector<2x16xf32>
    %c7_i32_167 = arith.constant 7 : i32
    %440 = arith.subi %c7_i32_167, %c1_i32_157 : i32
    %441 = arith.index_cast %440 : i32 to index
    %c0_168 = arith.constant 0 : index
    %c0_169 = arith.constant 0 : index
    %442 = vector.load %arg16[%441, %c0_168, %c0_169] : memref<8x2x16xf32, #tpu.memory_space<vmem>>, vector<1x2x16xf32>
    %443 = vector.shape_cast %442 : vector<1x2x16xf32> to vector<2x16xf32>
    %444 = vector.shape_cast %439 : vector<2x16xf32> to vector<1x2x16xf32>
    tpu.vector_store %arg16[%441, %c0_168, %c0_169], %444 {strides = array<i32>} : memref<8x2x16xf32, #tpu.memory_space<vmem>>, vector<1x2x16xf32>,
    %c2_i32_170 = arith.constant 2 : i32
    %c2_i32_171 = arith.constant 2 : i32
    %445 = arith.muli %c2_i32_170, %c2_i32_171 : i32
    %446 = tpu.assume_multiple %445, 2 : i32
    %447 = arith.index_cast %446 : i32 to index
    %c0_172 = arith.constant 0 : index
    %448 = vector.load %arg14[%447, %c0_172] : memref<16x128xf32, #tpu.memory_space<vmem>>, vector<2x128xf32>
    %c7_i32_173 = arith.constant 7 : i32
    %449 = arith.subi %c7_i32_173, %c2_i32_170 : i32
    %c2_i32_174 = arith.constant 2 : i32
    %450 = arith.muli %449, %c2_i32_174 : i32
    %451 = tpu.assume_multiple %450, 2 : i32
    %452 = arith.index_cast %451 : i32 to index
    %c0_175 = arith.constant 0 : index
    %453 = vector.load %arg14[%452, %c0_175] : memref<16x128xf32, #tpu.memory_space<vmem>>, vector<2x128xf32>
    %454 = arith.select %18, %448, %453 : vector<2x128xi1>, vector<2x128xf32>
    %cst_176 = arith.constant dense<0.000000e+00> : vector<2x128xf32>
    %455 = tpu.matmul %433, %362, %cst_176 {dimension_numbers = #tpu.dot_dimension_numbers<[1], [0], [0], [1], [0, 0, 1, 1], [], []>} : vector<2x32xf32>, vector<32x128xf32>, vector<2x128xf32> -> vector<2x128xf32>
    %456 = arith.addf %454, %455 : vector<2x128xf32>
    %457 = vector.extract_strided_slice %456 {offsets = [0, 0], sizes = [2, 96], strides = [1, 1]} : vector<2x128xf32> to vector<2x96xf32>
    %458 = arith.negf %457 : vector<2x96xf32>
    %459 = math.exp %458 : vector<2x96xf32>
    %cst_177 = arith.constant 1.000000e+00 : f32
    %460 = vector.broadcast %cst_177 : f32 to vector<2x96xf32>
    %461 = arith.addf %460, %459 : vector<2x96xf32>
    %462 = arith.divf %460, %461 : vector<2x96xf32>
    %463 = vector.extract_strided_slice %456 {offsets = [0, 96], sizes = [2, 32], strides = [1, 1]} : vector<2x128xf32> to vector<2x32xf32>
    %464 = math.tanh %463 : vector<2x32xf32>
    %465 = vector.extract_strided_slice %462 {offsets = [0, 32], sizes = [2, 32], strides = [1, 1]} : vector<2x96xf32> to vector<2x32xf32>
    %466 = arith.mulf %465, %430 : vector<2x32xf32>
    %467 = vector.extract_strided_slice %462 {offsets = [0, 0], sizes = [2, 32], strides = [1, 1]} : vector<2x96xf32> to vector<2x32xf32>
    %468 = arith.mulf %467, %464 : vector<2x32xf32>
    %469 = arith.addf %466, %468 : vector<2x32xf32>
    %470 = vector.extract_strided_slice %462 {offsets = [0, 64], sizes = [2, 32], strides = [1, 1]} : vector<2x96xf32> to vector<2x32xf32>
    %471 = math.tanh %469 : vector<2x32xf32>
    %472 = arith.mulf %470, %471 : vector<2x32xf32>
    %473 = vector.extract_strided_slice %472 {offsets = [0, 0], sizes = [2, 16], strides = [1, 1]} : vector<2x32xf32> to vector<2x16xf32>
    %474 = arith.index_cast %c2_i32_170 : i32 to index
    %c0_178 = arith.constant 0 : index
    %c0_179 = arith.constant 0 : index
    %475 = vector.load %arg15[%474, %c0_178, %c0_179] : memref<8x2x16xf32, #tpu.memory_space<vmem>>, vector<1x2x16xf32>
    %476 = vector.shape_cast %475 : vector<1x2x16xf32> to vector<2x16xf32>
    %477 = vector.shape_cast %473 : vector<2x16xf32> to vector<1x2x16xf32>
    tpu.vector_store %arg15[%474, %c0_178, %c0_179], %477 {strides = array<i32>} : memref<8x2x16xf32, #tpu.memory_space<vmem>>, vector<1x2x16xf32>,
    %478 = vector.extract_strided_slice %472 {offsets = [0, 16], sizes = [2, 16], strides = [1, 1]} : vector<2x32xf32> to vector<2x16xf32>
    %c7_i32_180 = arith.constant 7 : i32
    %479 = arith.subi %c7_i32_180, %c2_i32_170 : i32
    %480 = arith.index_cast %479 : i32 to index
    %c0_181 = arith.constant 0 : index
    %c0_182 = arith.constant 0 : index
    %481 = vector.load %arg16[%480, %c0_181, %c0_182] : memref<8x2x16xf32, #tpu.memory_space<vmem>>, vector<1x2x16xf32>
    %482 = vector.shape_cast %481 : vector<1x2x16xf32> to vector<2x16xf32>
    %483 = vector.shape_cast %478 : vector<2x16xf32> to vector<1x2x16xf32>
    tpu.vector_store %arg16[%480, %c0_181, %c0_182], %483 {strides = array<i32>} : memref<8x2x16xf32, #tpu.memory_space<vmem>>, vector<1x2x16xf32>,
    %c3_i32_183 = arith.constant 3 : i32
    %c2_i32_184 = arith.constant 2 : i32
    %484 = arith.muli %c3_i32_183, %c2_i32_184 : i32
    %485 = tpu.assume_multiple %484, 2 : i32
    %486 = arith.index_cast %485 : i32 to index
    %c0_185 = arith.constant 0 : index
    %487 = vector.load %arg14[%486, %c0_185] : memref<16x128xf32, #tpu.memory_space<vmem>>, vector<2x128xf32>
    %c7_i32_186 = arith.constant 7 : i32
    %488 = arith.subi %c7_i32_186, %c3_i32_183 : i32
    %c2_i32_187 = arith.constant 2 : i32
    %489 = arith.muli %488, %c2_i32_187 : i32
    %490 = tpu.assume_multiple %489, 2 : i32
    %491 = arith.index_cast %490 : i32 to index
    %c0_188 = arith.constant 0 : index
    %492 = vector.load %arg14[%491, %c0_188] : memref<16x128xf32, #tpu.memory_space<vmem>>, vector<2x128xf32>
    %493 = arith.select %18, %487, %492 : vector<2x128xi1>, vector<2x128xf32>
    %cst_189 = arith.constant dense<0.000000e+00> : vector<2x128xf32>
    %494 = tpu.matmul %472, %362, %cst_189 {dimension_numbers = #tpu.dot_dimension_numbers<[1], [0], [0], [1], [0, 0, 1, 1], [], []>} : vector<2x32xf32>, vector<32x128xf32>, vector<2x128xf32> -> vector<2x128xf32>
    %495 = arith.addf %493, %494 : vector<2x128xf32>
    %496 = vector.extract_strided_slice %495 {offsets = [0, 0], sizes = [2, 96], strides = [1, 1]} : vector<2x128xf32> to vector<2x96xf32>
    %497 = arith.negf %496 : vector<2x96xf32>
    %498 = math.exp %497 : vector<2x96xf32>
    %cst_190 = arith.constant 1.000000e+00 : f32
    %499 = vector.broadcast %cst_190 : f32 to vector<2x96xf32>
    %500 = arith.addf %499, %498 : vector<2x96xf32>
    %501 = arith.divf %499, %500 : vector<2x96xf32>
    %502 = vector.extract_strided_slice %495 {offsets = [0, 96], sizes = [2, 32], strides = [1, 1]} : vector<2x128xf32> to vector<2x32xf32>
    %503 = math.tanh %502 : vector<2x32xf32>
    %504 = vector.extract_strided_slice %501 {offsets = [0, 32], sizes = [2, 32], strides = [1, 1]} : vector<2x96xf32> to vector<2x32xf32>
    %505 = arith.mulf %504, %469 : vector<2x32xf32>
    %506 = vector.extract_strided_slice %501 {offsets = [0, 0], sizes = [2, 32], strides = [1, 1]} : vector<2x96xf32> to vector<2x32xf32>
    %507 = arith.mulf %506, %503 : vector<2x32xf32>
    %508 = arith.addf %505, %507 : vector<2x32xf32>
    %509 = vector.extract_strided_slice %501 {offsets = [0, 64], sizes = [2, 32], strides = [1, 1]} : vector<2x96xf32> to vector<2x32xf32>
    %510 = math.tanh %508 : vector<2x32xf32>
    %511 = arith.mulf %509, %510 : vector<2x32xf32>
    %512 = vector.extract_strided_slice %511 {offsets = [0, 0], sizes = [2, 16], strides = [1, 1]} : vector<2x32xf32> to vector<2x16xf32>
    %513 = arith.index_cast %c3_i32_183 : i32 to index
    %c0_191 = arith.constant 0 : index
    %c0_192 = arith.constant 0 : index
    %514 = vector.load %arg15[%513, %c0_191, %c0_192] : memref<8x2x16xf32, #tpu.memory_space<vmem>>, vector<1x2x16xf32>
    %515 = vector.shape_cast %514 : vector<1x2x16xf32> to vector<2x16xf32>
    %516 = vector.shape_cast %512 : vector<2x16xf32> to vector<1x2x16xf32>
    tpu.vector_store %arg15[%513, %c0_191, %c0_192], %516 {strides = array<i32>} : memref<8x2x16xf32, #tpu.memory_space<vmem>>, vector<1x2x16xf32>,
    %517 = vector.extract_strided_slice %511 {offsets = [0, 16], sizes = [2, 16], strides = [1, 1]} : vector<2x32xf32> to vector<2x16xf32>
    %c7_i32_193 = arith.constant 7 : i32
    %518 = arith.subi %c7_i32_193, %c3_i32_183 : i32
    %519 = arith.index_cast %518 : i32 to index
    %c0_194 = arith.constant 0 : index
    %c0_195 = arith.constant 0 : index
    %520 = vector.load %arg16[%519, %c0_194, %c0_195] : memref<8x2x16xf32, #tpu.memory_space<vmem>>, vector<1x2x16xf32>
    %521 = vector.shape_cast %520 : vector<1x2x16xf32> to vector<2x16xf32>
    %522 = vector.shape_cast %517 : vector<2x16xf32> to vector<1x2x16xf32>
    tpu.vector_store %arg16[%519, %c0_194, %c0_195], %522 {strides = array<i32>} : memref<8x2x16xf32, #tpu.memory_space<vmem>>, vector<1x2x16xf32>,
    %c4_i32_196 = arith.constant 4 : i32
    %c2_i32_197 = arith.constant 2 : i32
    %523 = arith.muli %c4_i32_196, %c2_i32_197 : i32
    %524 = tpu.assume_multiple %523, 2 : i32
    %525 = arith.index_cast %524 : i32 to index
    %c0_198 = arith.constant 0 : index
    %526 = vector.load %arg14[%525, %c0_198] : memref<16x128xf32, #tpu.memory_space<vmem>>, vector<2x128xf32>
    %c7_i32_199 = arith.constant 7 : i32
    %527 = arith.subi %c7_i32_199, %c4_i32_196 : i32
    %c2_i32_200 = arith.constant 2 : i32
    %528 = arith.muli %527, %c2_i32_200 : i32
    %529 = tpu.assume_multiple %528, 2 : i32
    %530 = arith.index_cast %529 : i32 to index
    %c0_201 = arith.constant 0 : index
    %531 = vector.load %arg14[%530, %c0_201] : memref<16x128xf32, #tpu.memory_space<vmem>>, vector<2x128xf32>
    %532 = arith.select %18, %526, %531 : vector<2x128xi1>, vector<2x128xf32>
    %cst_202 = arith.constant dense<0.000000e+00> : vector<2x128xf32>
    %533 = tpu.matmul %511, %362, %cst_202 {dimension_numbers = #tpu.dot_dimension_numbers<[1], [0], [0], [1], [0, 0, 1, 1], [], []>} : vector<2x32xf32>, vector<32x128xf32>, vector<2x128xf32> -> vector<2x128xf32>
    %534 = arith.addf %532, %533 : vector<2x128xf32>
    %535 = vector.extract_strided_slice %534 {offsets = [0, 0], sizes = [2, 96], strides = [1, 1]} : vector<2x128xf32> to vector<2x96xf32>
    %536 = arith.negf %535 : vector<2x96xf32>
    %537 = math.exp %536 : vector<2x96xf32>
    %cst_203 = arith.constant 1.000000e+00 : f32
    %538 = vector.broadcast %cst_203 : f32 to vector<2x96xf32>
    %539 = arith.addf %538, %537 : vector<2x96xf32>
    %540 = arith.divf %538, %539 : vector<2x96xf32>
    %541 = vector.extract_strided_slice %534 {offsets = [0, 96], sizes = [2, 32], strides = [1, 1]} : vector<2x128xf32> to vector<2x32xf32>
    %542 = math.tanh %541 : vector<2x32xf32>
    %543 = vector.extract_strided_slice %540 {offsets = [0, 32], sizes = [2, 32], strides = [1, 1]} : vector<2x96xf32> to vector<2x32xf32>
    %544 = arith.mulf %543, %508 : vector<2x32xf32>
    %545 = vector.extract_strided_slice %540 {offsets = [0, 0], sizes = [2, 32], strides = [1, 1]} : vector<2x96xf32> to vector<2x32xf32>
    %546 = arith.mulf %545, %542 : vector<2x32xf32>
    %547 = arith.addf %544, %546 : vector<2x32xf32>
    %548 = vector.extract_strided_slice %540 {offsets = [0, 64], sizes = [2, 32], strides = [1, 1]} : vector<2x96xf32> to vector<2x32xf32>
    %549 = math.tanh %547 : vector<2x32xf32>
    %550 = arith.mulf %548, %549 : vector<2x32xf32>
    %551 = vector.extract_strided_slice %550 {offsets = [0, 0], sizes = [2, 16], strides = [1, 1]} : vector<2x32xf32> to vector<2x16xf32>
    %552 = arith.index_cast %c4_i32_196 : i32 to index
    %c0_204 = arith.constant 0 : index
    %c0_205 = arith.constant 0 : index
    %553 = vector.load %arg15[%552, %c0_204, %c0_205] : memref<8x2x16xf32, #tpu.memory_space<vmem>>, vector<1x2x16xf32>
    %554 = vector.shape_cast %553 : vector<1x2x16xf32> to vector<2x16xf32>
    %555 = vector.shape_cast %551 : vector<2x16xf32> to vector<1x2x16xf32>
    tpu.vector_store %arg15[%552, %c0_204, %c0_205], %555 {strides = array<i32>} : memref<8x2x16xf32, #tpu.memory_space<vmem>>, vector<1x2x16xf32>,
    %556 = vector.extract_strided_slice %550 {offsets = [0, 16], sizes = [2, 16], strides = [1, 1]} : vector<2x32xf32> to vector<2x16xf32>
    %c7_i32_206 = arith.constant 7 : i32
    %557 = arith.subi %c7_i32_206, %c4_i32_196 : i32
    %558 = arith.index_cast %557 : i32 to index
    %c0_207 = arith.constant 0 : index
    %c0_208 = arith.constant 0 : index
    %559 = vector.load %arg16[%558, %c0_207, %c0_208] : memref<8x2x16xf32, #tpu.memory_space<vmem>>, vector<1x2x16xf32>
    %560 = vector.shape_cast %559 : vector<1x2x16xf32> to vector<2x16xf32>
    %561 = vector.shape_cast %556 : vector<2x16xf32> to vector<1x2x16xf32>
    tpu.vector_store %arg16[%558, %c0_207, %c0_208], %561 {strides = array<i32>} : memref<8x2x16xf32, #tpu.memory_space<vmem>>, vector<1x2x16xf32>,
    %c5_i32_209 = arith.constant 5 : i32
    %c2_i32_210 = arith.constant 2 : i32
    %562 = arith.muli %c5_i32_209, %c2_i32_210 : i32
    %563 = tpu.assume_multiple %562, 2 : i32
    %564 = arith.index_cast %563 : i32 to index
    %c0_211 = arith.constant 0 : index
    %565 = vector.load %arg14[%564, %c0_211] : memref<16x128xf32, #tpu.memory_space<vmem>>, vector<2x128xf32>
    %c7_i32_212 = arith.constant 7 : i32
    %566 = arith.subi %c7_i32_212, %c5_i32_209 : i32
    %c2_i32_213 = arith.constant 2 : i32
    %567 = arith.muli %566, %c2_i32_213 : i32
    %568 = tpu.assume_multiple %567, 2 : i32
    %569 = arith.index_cast %568 : i32 to index
    %c0_214 = arith.constant 0 : index
    %570 = vector.load %arg14[%569, %c0_214] : memref<16x128xf32, #tpu.memory_space<vmem>>, vector<2x128xf32>
    %571 = arith.select %18, %565, %570 : vector<2x128xi1>, vector<2x128xf32>
    %cst_215 = arith.constant dense<0.000000e+00> : vector<2x128xf32>
    %572 = tpu.matmul %550, %362, %cst_215 {dimension_numbers = #tpu.dot_dimension_numbers<[1], [0], [0], [1], [0, 0, 1, 1], [], []>} : vector<2x32xf32>, vector<32x128xf32>, vector<2x128xf32> -> vector<2x128xf32>
    %573 = arith.addf %571, %572 : vector<2x128xf32>
    %574 = vector.extract_strided_slice %573 {offsets = [0, 0], sizes = [2, 96], strides = [1, 1]} : vector<2x128xf32> to vector<2x96xf32>
    %575 = arith.negf %574 : vector<2x96xf32>
    %576 = math.exp %575 : vector<2x96xf32>
    %cst_216 = arith.constant 1.000000e+00 : f32
    %577 = vector.broadcast %cst_216 : f32 to vector<2x96xf32>
    %578 = arith.addf %577, %576 : vector<2x96xf32>
    %579 = arith.divf %577, %578 : vector<2x96xf32>
    %580 = vector.extract_strided_slice %573 {offsets = [0, 96], sizes = [2, 32], strides = [1, 1]} : vector<2x128xf32> to vector<2x32xf32>
    %581 = math.tanh %580 : vector<2x32xf32>
    %582 = vector.extract_strided_slice %579 {offsets = [0, 32], sizes = [2, 32], strides = [1, 1]} : vector<2x96xf32> to vector<2x32xf32>
    %583 = arith.mulf %582, %547 : vector<2x32xf32>
    %584 = vector.extract_strided_slice %579 {offsets = [0, 0], sizes = [2, 32], strides = [1, 1]} : vector<2x96xf32> to vector<2x32xf32>
    %585 = arith.mulf %584, %581 : vector<2x32xf32>
    %586 = arith.addf %583, %585 : vector<2x32xf32>
    %587 = vector.extract_strided_slice %579 {offsets = [0, 64], sizes = [2, 32], strides = [1, 1]} : vector<2x96xf32> to vector<2x32xf32>
    %588 = math.tanh %586 : vector<2x32xf32>
    %589 = arith.mulf %587, %588 : vector<2x32xf32>
    %590 = vector.extract_strided_slice %589 {offsets = [0, 0], sizes = [2, 16], strides = [1, 1]} : vector<2x32xf32> to vector<2x16xf32>
    %591 = arith.index_cast %c5_i32_209 : i32 to index
    %c0_217 = arith.constant 0 : index
    %c0_218 = arith.constant 0 : index
    %592 = vector.load %arg15[%591, %c0_217, %c0_218] : memref<8x2x16xf32, #tpu.memory_space<vmem>>, vector<1x2x16xf32>
    %593 = vector.shape_cast %592 : vector<1x2x16xf32> to vector<2x16xf32>
    %594 = vector.shape_cast %590 : vector<2x16xf32> to vector<1x2x16xf32>
    tpu.vector_store %arg15[%591, %c0_217, %c0_218], %594 {strides = array<i32>} : memref<8x2x16xf32, #tpu.memory_space<vmem>>, vector<1x2x16xf32>,
    %595 = vector.extract_strided_slice %589 {offsets = [0, 16], sizes = [2, 16], strides = [1, 1]} : vector<2x32xf32> to vector<2x16xf32>
    %c7_i32_219 = arith.constant 7 : i32
    %596 = arith.subi %c7_i32_219, %c5_i32_209 : i32
    %597 = arith.index_cast %596 : i32 to index
    %c0_220 = arith.constant 0 : index
    %c0_221 = arith.constant 0 : index
    %598 = vector.load %arg16[%597, %c0_220, %c0_221] : memref<8x2x16xf32, #tpu.memory_space<vmem>>, vector<1x2x16xf32>
    %599 = vector.shape_cast %598 : vector<1x2x16xf32> to vector<2x16xf32>
    %600 = vector.shape_cast %595 : vector<2x16xf32> to vector<1x2x16xf32>
    tpu.vector_store %arg16[%597, %c0_220, %c0_221], %600 {strides = array<i32>} : memref<8x2x16xf32, #tpu.memory_space<vmem>>, vector<1x2x16xf32>,
    %c6_i32_222 = arith.constant 6 : i32
    %c2_i32_223 = arith.constant 2 : i32
    %601 = arith.muli %c6_i32_222, %c2_i32_223 : i32
    %602 = tpu.assume_multiple %601, 2 : i32
    %603 = arith.index_cast %602 : i32 to index
    %c0_224 = arith.constant 0 : index
    %604 = vector.load %arg14[%603, %c0_224] : memref<16x128xf32, #tpu.memory_space<vmem>>, vector<2x128xf32>
    %c7_i32_225 = arith.constant 7 : i32
    %605 = arith.subi %c7_i32_225, %c6_i32_222 : i32
    %c2_i32_226 = arith.constant 2 : i32
    %606 = arith.muli %605, %c2_i32_226 : i32
    %607 = tpu.assume_multiple %606, 2 : i32
    %608 = arith.index_cast %607 : i32 to index
    %c0_227 = arith.constant 0 : index
    %609 = vector.load %arg14[%608, %c0_227] : memref<16x128xf32, #tpu.memory_space<vmem>>, vector<2x128xf32>
    %610 = arith.select %18, %604, %609 : vector<2x128xi1>, vector<2x128xf32>
    %cst_228 = arith.constant dense<0.000000e+00> : vector<2x128xf32>
    %611 = tpu.matmul %589, %362, %cst_228 {dimension_numbers = #tpu.dot_dimension_numbers<[1], [0], [0], [1], [0, 0, 1, 1], [], []>} : vector<2x32xf32>, vector<32x128xf32>, vector<2x128xf32> -> vector<2x128xf32>
    %612 = arith.addf %610, %611 : vector<2x128xf32>
    %613 = vector.extract_strided_slice %612 {offsets = [0, 0], sizes = [2, 96], strides = [1, 1]} : vector<2x128xf32> to vector<2x96xf32>
    %614 = arith.negf %613 : vector<2x96xf32>
    %615 = math.exp %614 : vector<2x96xf32>
    %cst_229 = arith.constant 1.000000e+00 : f32
    %616 = vector.broadcast %cst_229 : f32 to vector<2x96xf32>
    %617 = arith.addf %616, %615 : vector<2x96xf32>
    %618 = arith.divf %616, %617 : vector<2x96xf32>
    %619 = vector.extract_strided_slice %612 {offsets = [0, 96], sizes = [2, 32], strides = [1, 1]} : vector<2x128xf32> to vector<2x32xf32>
    %620 = math.tanh %619 : vector<2x32xf32>
    %621 = vector.extract_strided_slice %618 {offsets = [0, 32], sizes = [2, 32], strides = [1, 1]} : vector<2x96xf32> to vector<2x32xf32>
    %622 = arith.mulf %621, %586 : vector<2x32xf32>
    %623 = vector.extract_strided_slice %618 {offsets = [0, 0], sizes = [2, 32], strides = [1, 1]} : vector<2x96xf32> to vector<2x32xf32>
    %624 = arith.mulf %623, %620 : vector<2x32xf32>
    %625 = arith.addf %622, %624 : vector<2x32xf32>
    %626 = vector.extract_strided_slice %618 {offsets = [0, 64], sizes = [2, 32], strides = [1, 1]} : vector<2x96xf32> to vector<2x32xf32>
    %627 = math.tanh %625 : vector<2x32xf32>
    %628 = arith.mulf %626, %627 : vector<2x32xf32>
    %629 = vector.extract_strided_slice %628 {offsets = [0, 0], sizes = [2, 16], strides = [1, 1]} : vector<2x32xf32> to vector<2x16xf32>
    %630 = arith.index_cast %c6_i32_222 : i32 to index
    %c0_230 = arith.constant 0 : index
    %c0_231 = arith.constant 0 : index
    %631 = vector.load %arg15[%630, %c0_230, %c0_231] : memref<8x2x16xf32, #tpu.memory_space<vmem>>, vector<1x2x16xf32>
    %632 = vector.shape_cast %631 : vector<1x2x16xf32> to vector<2x16xf32>
    %633 = vector.shape_cast %629 : vector<2x16xf32> to vector<1x2x16xf32>
    tpu.vector_store %arg15[%630, %c0_230, %c0_231], %633 {strides = array<i32>} : memref<8x2x16xf32, #tpu.memory_space<vmem>>, vector<1x2x16xf32>,
    %634 = vector.extract_strided_slice %628 {offsets = [0, 16], sizes = [2, 16], strides = [1, 1]} : vector<2x32xf32> to vector<2x16xf32>
    %c7_i32_232 = arith.constant 7 : i32
    %635 = arith.subi %c7_i32_232, %c6_i32_222 : i32
    %636 = arith.index_cast %635 : i32 to index
    %c0_233 = arith.constant 0 : index
    %c0_234 = arith.constant 0 : index
    %637 = vector.load %arg16[%636, %c0_233, %c0_234] : memref<8x2x16xf32, #tpu.memory_space<vmem>>, vector<1x2x16xf32>
    %638 = vector.shape_cast %637 : vector<1x2x16xf32> to vector<2x16xf32>
    %639 = vector.shape_cast %634 : vector<2x16xf32> to vector<1x2x16xf32>
    tpu.vector_store %arg16[%636, %c0_233, %c0_234], %639 {strides = array<i32>} : memref<8x2x16xf32, #tpu.memory_space<vmem>>, vector<1x2x16xf32>,
    %c7_i32_235 = arith.constant 7 : i32
    %c2_i32_236 = arith.constant 2 : i32
    %640 = arith.muli %c7_i32_235, %c2_i32_236 : i32
    %641 = tpu.assume_multiple %640, 2 : i32
    %642 = arith.index_cast %641 : i32 to index
    %c0_237 = arith.constant 0 : index
    %643 = vector.load %arg14[%642, %c0_237] : memref<16x128xf32, #tpu.memory_space<vmem>>, vector<2x128xf32>
    %c7_i32_238 = arith.constant 7 : i32
    %644 = arith.subi %c7_i32_238, %c7_i32_235 : i32
    %c2_i32_239 = arith.constant 2 : i32
    %645 = arith.muli %644, %c2_i32_239 : i32
    %646 = tpu.assume_multiple %645, 2 : i32
    %647 = arith.index_cast %646 : i32 to index
    %c0_240 = arith.constant 0 : index
    %648 = vector.load %arg14[%647, %c0_240] : memref<16x128xf32, #tpu.memory_space<vmem>>, vector<2x128xf32>
    %649 = arith.select %18, %643, %648 : vector<2x128xi1>, vector<2x128xf32>
    %cst_241 = arith.constant dense<0.000000e+00> : vector<2x128xf32>
    %650 = tpu.matmul %628, %362, %cst_241 {dimension_numbers = #tpu.dot_dimension_numbers<[1], [0], [0], [1], [0, 0, 1, 1], [], []>} : vector<2x32xf32>, vector<32x128xf32>, vector<2x128xf32> -> vector<2x128xf32>
    %651 = arith.addf %649, %650 : vector<2x128xf32>
    %652 = vector.extract_strided_slice %651 {offsets = [0, 0], sizes = [2, 96], strides = [1, 1]} : vector<2x128xf32> to vector<2x96xf32>
    %653 = arith.negf %652 : vector<2x96xf32>
    %654 = math.exp %653 : vector<2x96xf32>
    %cst_242 = arith.constant 1.000000e+00 : f32
    %655 = vector.broadcast %cst_242 : f32 to vector<2x96xf32>
    %656 = arith.addf %655, %654 : vector<2x96xf32>
    %657 = arith.divf %655, %656 : vector<2x96xf32>
    %658 = vector.extract_strided_slice %651 {offsets = [0, 96], sizes = [2, 32], strides = [1, 1]} : vector<2x128xf32> to vector<2x32xf32>
    %659 = math.tanh %658 : vector<2x32xf32>
    %660 = vector.extract_strided_slice %657 {offsets = [0, 32], sizes = [2, 32], strides = [1, 1]} : vector<2x96xf32> to vector<2x32xf32>
    %661 = arith.mulf %660, %625 : vector<2x32xf32>
    %662 = vector.extract_strided_slice %657 {offsets = [0, 0], sizes = [2, 32], strides = [1, 1]} : vector<2x96xf32> to vector<2x32xf32>
    %663 = arith.mulf %662, %659 : vector<2x32xf32>
    %664 = arith.addf %661, %663 : vector<2x32xf32>
    %665 = vector.extract_strided_slice %657 {offsets = [0, 64], sizes = [2, 32], strides = [1, 1]} : vector<2x96xf32> to vector<2x32xf32>
    %666 = math.tanh %664 : vector<2x32xf32>
    %667 = arith.mulf %665, %666 : vector<2x32xf32>
    %668 = vector.extract_strided_slice %667 {offsets = [0, 0], sizes = [2, 16], strides = [1, 1]} : vector<2x32xf32> to vector<2x16xf32>
    %669 = arith.index_cast %c7_i32_235 : i32 to index
    %c0_243 = arith.constant 0 : index
    %c0_244 = arith.constant 0 : index
    %670 = vector.load %arg15[%669, %c0_243, %c0_244] : memref<8x2x16xf32, #tpu.memory_space<vmem>>, vector<1x2x16xf32>
    %671 = vector.shape_cast %670 : vector<1x2x16xf32> to vector<2x16xf32>
    %672 = vector.shape_cast %668 : vector<2x16xf32> to vector<1x2x16xf32>
    tpu.vector_store %arg15[%669, %c0_243, %c0_244], %672 {strides = array<i32>} : memref<8x2x16xf32, #tpu.memory_space<vmem>>, vector<1x2x16xf32>,
    %673 = vector.extract_strided_slice %667 {offsets = [0, 16], sizes = [2, 16], strides = [1, 1]} : vector<2x32xf32> to vector<2x16xf32>
    %c7_i32_245 = arith.constant 7 : i32
    %674 = arith.subi %c7_i32_245, %c7_i32_235 : i32
    %675 = arith.index_cast %674 : i32 to index
    %c0_246 = arith.constant 0 : index
    %c0_247 = arith.constant 0 : index
    %676 = vector.load %arg16[%675, %c0_246, %c0_247] : memref<8x2x16xf32, #tpu.memory_space<vmem>>, vector<1x2x16xf32>
    %677 = vector.shape_cast %676 : vector<1x2x16xf32> to vector<2x16xf32>
    %678 = vector.shape_cast %673 : vector<2x16xf32> to vector<1x2x16xf32>
    tpu.vector_store %arg16[%675, %c0_246, %c0_247], %678 {strides = array<i32>} : memref<8x2x16xf32, #tpu.memory_space<vmem>>, vector<1x2x16xf32>,
    %c8_i32_248 = arith.constant 8 : i32
    %c1_249 = arith.constant 1 : index
    %c0_250 = arith.constant 0 : index
    %c0_251 = arith.constant 0 : index
    %679 = vector.load %arg12[%c1_249, %c0_250, %c0_251] : memref<2x2x32xf32, #tpu.memory_space<vmem>>, vector<1x2x32xf32>
    %680 = vector.shape_cast %679 : vector<1x2x32xf32> to vector<2x32xf32>
    %681 = vector.shape_cast %667 : vector<2x32xf32> to vector<1x2x32xf32>
    tpu.vector_store %arg12[%c1_249, %c0_250, %c0_251], %681 {strides = array<i32>} : memref<2x2x32xf32, #tpu.memory_space<vmem>>, vector<1x2x32xf32>,
    %c1_252 = arith.constant 1 : index
    %c0_253 = arith.constant 0 : index
    %c0_254 = arith.constant 0 : index
    %682 = vector.load %arg13[%c1_252, %c0_253, %c0_254] : memref<2x2x32xf32, #tpu.memory_space<vmem>>, vector<1x2x32xf32>
    %683 = vector.shape_cast %682 : vector<1x2x32xf32> to vector<2x32xf32>
    %684 = vector.shape_cast %664 : vector<2x32xf32> to vector<1x2x32xf32>
    tpu.vector_store %arg13[%c1_252, %c0_253, %c0_254], %684 {strides = array<i32>} : memref<2x2x32xf32, #tpu.memory_space<vmem>>, vector<1x2x32xf32>,
    %c0_255 = arith.constant 0 : index
    %c0_256 = arith.constant 0 : index
    %c0_257 = arith.constant 0 : index
    %685 = vector.load %arg15[%c0_255, %c0_256, %c0_257] : memref<8x2x16xf32, #tpu.memory_space<vmem>>, vector<8x2x16xf32>
    %686 = vector.shape_cast %685 : vector<8x2x16xf32> to vector<16x16xf32>
    %c0_258 = arith.constant 0 : index
    %c0_259 = arith.constant 0 : index
    %c0_260 = arith.constant 0 : index
    %687 = vector.load %arg16[%c0_258, %c0_259, %c0_260] : memref<8x2x16xf32, #tpu.memory_space<vmem>>, vector<8x2x16xf32>
    %688 = vector.shape_cast %687 : vector<8x2x16xf32> to vector<16x16xf32>
    %c0_261 = arith.constant 0 : index
    %c0_262 = arith.constant 0 : index
    %689 = vector.load %arg9[%c0_261, %c0_262] : memref<32x4xf32, #tpu.memory_space<vmem>>, vector<16x4xf32>
    %cst_263 = arith.constant dense<0.000000e+00> : vector<16x4xf32>
    %690 = tpu.matmul %686, %689, %cst_263 {dimension_numbers = #tpu.dot_dimension_numbers<[1], [0], [0], [1], [0, 0, 1, 1], [], []>} : vector<16x16xf32>, vector<16x4xf32>, vector<16x4xf32> -> vector<16x4xf32>
    %c16_264 = arith.constant 16 : index
    %c0_265 = arith.constant 0 : index
    %691 = vector.load %arg9[%c16_264, %c0_265] : memref<32x4xf32, #tpu.memory_space<vmem>>, vector<16x4xf32>
    %cst_266 = arith.constant dense<0.000000e+00> : vector<16x4xf32>
    %692 = tpu.matmul %688, %691, %cst_266 {dimension_numbers = #tpu.dot_dimension_numbers<[1], [0], [0], [1], [0, 0, 1, 1], [], []>} : vector<16x16xf32>, vector<16x4xf32>, vector<16x4xf32> -> vector<16x4xf32>
    %693 = arith.addf %690, %692 : vector<16x4xf32>
    %c0_267 = arith.constant 0 : index
    %c0_268 = arith.constant 0 : index
    %694 = vector.load %arg10[%c0_267, %c0_268] : memref<1x4xf32, #tpu.memory_space<vmem>>, vector<1x4xf32>
    %695 = vector.broadcast %694 : vector<1x4xf32> to vector<16x4xf32>
    %696 = arith.addf %693, %695 : vector<16x4xf32>
    %c0_269 = arith.constant 0 : index
    %c0_270 = arith.constant 0 : index
    %697 = vector.load %arg11[%c0_269, %c0_270] : memref<16x4xf32, #tpu.memory_space<vmem>>, vector<16x4xf32>
    tpu.vector_store %arg11[%c0_269, %c0_270], %696 {strides = array<i32>} : memref<16x4xf32, #tpu.memory_space<vmem>>, vector<16x4xf32>,
    return
  }
}

</mosaic_0001>

<llo_original>
// kernel: tpu_custom_call.1
$region0: #{tpu_custom_call.1}
  #allocation0 [shape = 'u32[]', space=smem, size = 0x4, offset = 0x4, fixed_abs, tag = 'smem constant byte address 0x4 - core index']
  #allocation1 [shape = 'u32[144,128]{1,0:T(1,128)}', space=vmem, size = 0x12000, scoped, tag = 'internal scratch']
  #allocation2 [shape = 'f32[16,128]{1,0:T(8,128)}', space=vmem, size = 0x2000, scoped, tag = 'scratch operand']
  #allocation3 [shape = 'f32[8,2,16]{2,1,0:T(2,128)}', space=vmem, size = 0x2000, scoped, tag = 'scratch operand']
  #allocation4 [shape = 'f32[8,2,16]{2,1,0:T(2,128)}', space=vmem, size = 0x2000, scoped, tag = 'scratch operand']
  %s0 = inlined_call_operand.vmem [shape: f32[16,8], index: 0, kind: input, shape index: {}]
  %s1 = inlined_call_operand.hbm [shape: f32[8,128], index: 1, kind: input, shape index: {}]
  %s2 = inlined_call_operand.vmem [shape: f32[32,128], index: 2, kind: input, shape index: {}]
  %s3 = inlined_call_operand.vmem [shape: f32[32,128], index: 3, kind: input, shape index: {}]
  %s4 = inlined_call_operand.hbm [shape: f32[32,128], index: 4, kind: input, shape index: {}]
  %s5 = inlined_call_operand.vmem [shape: f32[1,128], index: 5, kind: input, shape index: {}]
  %s6 = inlined_call_operand.vmem [shape: f32[1,128], index: 6, kind: input, shape index: {}]
  %s7 = inlined_call_operand.vmem [shape: f32[2,2,32], index: 7, kind: input, shape index: {}]
  %s8 = inlined_call_operand.vmem [shape: f32[2,2,32], index: 8, kind: input, shape index: {}]
  %s9 = inlined_call_operand.vmem [shape: f32[32,4], index: 9, kind: input, shape index: {}]
  %s10 = inlined_call_operand.vmem [shape: f32[1,4], index: 10, kind: input, shape index: {}]
  %s11 = inlined_call_operand.vmem [shape: f32[16,4], index: 11, kind: output, shape index: {0}]
  %s12 = inlined_call_operand.hbm [shape: f32[2,2,32], index: 12, kind: output, shape index: {1}]
  %s13 = inlined_call_operand.hbm [shape: f32[2,2,32], index: 13, kind: output, shape index: {2}]
  %14 = xla_tuple %s11, %s12, %s13
  %s15 = sld [smem:[#allocation0]]
  $region78: #{tpu_custom_call.1} parent=0
    _
  %s17 = ssub.s32 1, %s15
  %s18 = scalar_select 0, %s17, %s15
  $region1: #{tpu_custom_call.1} parent=0
    #allocation5 [shape = 'u8[4096]{0}', space=vmem, size = 0x1000, scoped, tag = 'input window, operand 1, single buffered']
    #allocation6 [shape = 's32[1]{0}', space=sflag, size = 0x4, scoped, tag = 'scoped memory for tpu_custom_call.1']
    #allocation7 [shape = 's32[1]{0}', space=sflag, size = 0x4, scoped, tag = 'scoped memory for tpu_custom_call.1']
    #allocation8 [shape = 'u8[16384]{0}', space=vmem, size = 0x4000, scoped, tag = 'input window, operand 4, single buffered']
    #allocation9 [shape = 's32[1]{0}', space=sflag, size = 0x4, scoped, tag = 'scoped memory for tpu_custom_call.1']
    #allocation10 [shape = 'u8[2048]{0}', space=vmem, size = 0x800, scoped, tag = 'output window, operand 1, single buffered']
    #allocation11 [shape = 'u8[2048]{0}', space=vmem, size = 0x800, scoped, tag = 'output window, operand 2, single buffered']
    #allocation12 [shape = 's32[1]{0}', space=sflag, size = 0x4, scoped, tag = 'scoped memory for tpu_custom_call.1']
    %19 = vsyncpa [#allocation6], 0
    %20 = vsyncpa [#allocation9], 0
    %21 = vsyncpa [#allocation7], 0
    %22 = vsyncpa [#allocation12], 0
    // Predicated region
    $region2: #{tpu_custom_call.1} parent=1 // pred_check
      _
    $region3: #{tpu_custom_call.1} parent=1 // pred_check_branch
      %24 = sbr.rel (0) target = $region5
    $region4: #{tpu_custom_call.1} parent=1 // pred_region
      _
    $region5: #{tpu_custom_call.1} parent=1 // pred_fallthru
      _
    // Predicated region
    $region6: #{tpu_custom_call.1} parent=1 // pred_check
      _
    $region7: #{tpu_custom_call.1} parent=1 // pred_check_branch
      %26 = sbr.rel (0) target = $region9
    $region8: #{tpu_custom_call.1} parent=1 // pred_region
      %s28 = ssub.s32 128, 128
      %29 = vsyncadd [#allocation6], %s28
      %s31 = sshll.u32 [#allocation5], 4
      %s32 = int_to_ptr.vmem [resolvable:$true] %s31
      %34 = dma.hbm_to_vmem [thread:$0]  %s1, 128, %s32, [#allocation6]
    $region9: #{tpu_custom_call.1} parent=1 // pred_fallthru
      _
    // Predicated region
    $region10: #{tpu_custom_call.1} parent=1 // pred_check
      _
    $region11: #{tpu_custom_call.1} parent=1 // pred_check_branch
      %36 = sbr.rel (0) target = $region13
    $region12: #{tpu_custom_call.1} parent=1 // pred_region
      _
    $region13: #{tpu_custom_call.1} parent=1 // pred_fallthru
      _
    // Predicated region
    $region14: #{tpu_custom_call.1} parent=1 // pred_check
      _
    $region15: #{tpu_custom_call.1} parent=1 // pred_check_branch
      %38 = sbr.rel (0) target = $region17
    $region16: #{tpu_custom_call.1} parent=1 // pred_region
      _
    $region17: #{tpu_custom_call.1} parent=1 // pred_fallthru
      _
    // Predicated region
    $region18: #{tpu_custom_call.1} parent=1 // pred_check
      _
    $region19: #{tpu_custom_call.1} parent=1 // pred_check_branch
      %40 = sbr.rel (0) target = $region21
    $region20: #{tpu_custom_call.1} parent=1 // pred_region
      %s42 = ssub.s32 512, 512
      %43 = vsyncadd [#allocation9], %s42
      %s44 = sshll.u32 [#allocation8], 4
      %s45 = int_to_ptr.vmem [resolvable:$true] %s44
      %50 = dma.hbm_to_vmem [thread:$0]  %s4, 512, %s45, [#allocation9], 128, 128, 8
    $region21: #{tpu_custom_call.1} parent=1 // pred_fallthru
      _
    // Predicated region
    $region22: #{tpu_custom_call.1} parent=1 // pred_check
      _
    $region23: #{tpu_custom_call.1} parent=1 // pred_check_branch
      %52 = sbr.rel (0) target = $region25
    $region24: #{tpu_custom_call.1} parent=1 // pred_region
      _
    $region25: #{tpu_custom_call.1} parent=1 // pred_fallthru
      _
    // Predicated region
    $region26: #{tpu_custom_call.1} parent=1 // pred_check
      _
    $region27: #{tpu_custom_call.1} parent=1 // pred_check_branch
      %54 = sbr.rel (0) target = $region29
    $region28: #{tpu_custom_call.1} parent=1 // pred_region
      _
    $region29: #{tpu_custom_call.1} parent=1 // pred_fallthru
      _
    // Predicated region
    $region30: #{tpu_custom_call.1} parent=1 // pred_check
      _
    $region31: #{tpu_custom_call.1} parent=1 // pred_check_branch
      %56 = sbr.rel (0) target = $region33
    $region32: #{tpu_custom_call.1} parent=1 // pred_region
      _
    $region33: #{tpu_custom_call.1} parent=1 // pred_fallthru
      _
    // Predicated region
    $region34: #{tpu_custom_call.1} parent=1 // pred_check
      _
    $region35: #{tpu_custom_call.1} parent=1 // pred_check_branch
      %58 = sbr.rel (0) target = $region37
    $region36: #{tpu_custom_call.1} parent=1 // pred_region
      _
    $region37: #{tpu_custom_call.1} parent=1 // pred_fallthru
      _
    // Predicated region
    $region38: #{tpu_custom_call.1} parent=1 // pred_check
      _
    $region39: #{tpu_custom_call.1} parent=1 // pred_check_branch
      %60 = sbr.rel (0) target = $region41
    $region40: #{tpu_custom_call.1} parent=1 // pred_region
      _
    $region41: #{tpu_custom_call.1} parent=1 // pred_fallthru
      _
    // Predicated region
    $region42: #{tpu_custom_call.1} parent=1 // pred_check
      _
    $region43: #{tpu_custom_call.1} parent=1 // pred_check_branch
      %62 = sbr.rel (0) target = $region45
    $region44: #{tpu_custom_call.1} parent=1 // pred_region
      _
    $region45: #{tpu_custom_call.1} parent=1 // pred_fallthru
      _
    // Predicated region
    $region46: #{tpu_custom_call.1} parent=1 // pred_check
      _
    $region47: #{tpu_custom_call.1} parent=1 // pred_check_branch
      %64 = sbr.rel (0) target = $region49
    $region48: #{tpu_custom_call.1} parent=1 // pred_region
      %65 = dma.done [#allocation6], 128
    $region49: #{tpu_custom_call.1} parent=1 // pred_fallthru
      _
    // Predicated region
    $region50: #{tpu_custom_call.1} parent=1 // pred_check
      _
    $region51: #{tpu_custom_call.1} parent=1 // pred_check_branch
      %67 = sbr.rel (0) target = $region53
    $region52: #{tpu_custom_call.1} parent=1 // pred_region
      %68 = dma.done [#allocation9], 512
    $region53: #{tpu_custom_call.1} parent=1 // pred_fallthru
      _
    %v69 = vlaneseq
    %v70 = vand.u32 %v69, 127
    %vm71 = vcmp.lt.s32.totalorder %v70, 0
    %v72 = vsub.s32 0, %v70
    %v73 = vsel %vm71, %v72, %v70
    %v74 = vshrl.u32 %v73, 5
    %v75 = vand.u32 %v73, 31
    %v76 = vsub.s32 0, %v75
    %v77 = vsel %vm71, %v76, %v75
    %vm78 = vcmp.ne.s32.totalorder %v77, 0
    %vm79 = vcmp.lt.s32.totalorder %v77, 0
    %vm80 = vmand %vm79, %vm78
    %v81 = vadd.s32 %v77, 32
    %v82 = vsel %vm80, %v81, %v77
    %vm83 = vcmp.lt.s32.totalorder %v82, 16
    %v84 = vld [vmem:[%s5] sm:$0x1]
    %v85 = vld [vmem:[%s0] sm:$0xff]
    %v86 = vld [vmem:[%s0 + $0x8] sm:$0xff]
    %v87 = vld [vmem:[#allocation5] sm:$0xff]
    %v89 = vlaneseq
    %v90 = vshrl.u32 %v89, 7
    %v91 = vsub.s32 0, %v90
    %v92 = vrot.slane %v84, %v91
    %vm94 = vcmask 64512
    %v96 = vsel %vm94, %v85, 0
    %v99 = vsel %vm94, %v86, 0
    %101 = vmatprep.subr.mxu0 0.0
    %102 = vmatpush1.msra.mxu0 %v87
    %103 = vmatprep.subr.mxu0 0.0
    %104 = vmatpush1.msra.mxu0 0.0
    %105 = vmatprep.subr.mxu0 0.0
    %106 = vmatpush1.msra.mxu0 0.0
    %107 = vmatprep.subr.mxu0 0.0
    %108 = vmatpush1.msra.mxu0 0.0
    %109 = vmatprep.subr.mxu0 0.0
    %110 = vmatpush1.msra.mxu0 0.0
    %111 = vmatprep.subr.mxu0 0.0
    %112 = vmatpush1.msra.mxu0 0.0
    %113 = vmatprep.subr.mxu0 0.0
    %114 = vmatpush1.msra.mxu0 0.0
    %115 = vmatprep.subr.mxu0 0.0
    %116 = vmatpush1.msra.mxu0 0.0
    %117 = vmatprep.subr.mxu0 0.0
    %118 = vmatpush1.msra.mxu0 0.0
    %119 = vmatprep.subr.mxu0 0.0
    %120 = vmatpush1.msra.mxu0 0.0
    %121 = vmatprep.subr.mxu0 0.0
    %122 = vmatpush1.msra.mxu0 0.0
    %123 = vmatprep.subr.mxu0 0.0
    %124 = vmatpush1.msra.mxu0 0.0
    %125 = vmatprep.subr.mxu0 0.0
    %126 = vmatpush1.msra.mxu0 0.0
    %127 = vmatprep.subr.mxu0 0.0
    %128 = vmatpush1.msra.mxu0 0.0
    %129 = vmatprep.subr.mxu0 0.0
    %130 = vmatpush1.msra.mxu0 0.0
    %131 = vmatprep.subr.mxu0 0.0
    %132 = vmatpush1.msra.mxu0 0.0
    %133 = vmatprep.subr.mxu0 0.0
    %134 = vmatpush1.msra.mxu0 0.0
    %135 = vmatprep.subr.mxu0 0.0
    %136 = vmatpush1.msra.mxu0 0.0
    %137 = vmatprep.subr.mxu0 0.0
    %138 = vmatpush1.msra.mxu0 0.0
    %139 = vmatprep.subr.mxu0 0.0
    %140 = vmatpush1.msra.mxu0 0.0
    %141 = vmatprep.subr.mxu0 0.0
    %142 = vmatpush1.msra.mxu0 0.0
    %143 = vmatprep.subr.mxu0 0.0
    %144 = vmatpush1.msra.mxu0 0.0
    %145 = vmatprep.subr.mxu0 0.0
    %146 = vmatpush1.msra.mxu0 0.0
    %147 = vmatprep.subr.mxu0 0.0
    %148 = vmatpush1.msra.mxu0 0.0
    %149 = vmatprep.subr.mxu0 0.0
    %150 = vmatpush1.msra.mxu0 0.0
    %151 = vmatprep.subr.mxu0 0.0
    %152 = vmatpush1.msra.mxu0 0.0
    %153 = vmatprep.subr.mxu0 0.0
    %154 = vmatpush1.msra.mxu0 0.0
    %155 = vmatprep.subr.mxu0 0.0
    %156 = vmatpush1.msra.mxu0 0.0
    %157 = vmatprep.subr.mxu0 0.0
    %158 = vmatpush1.msra.mxu0 0.0
    %159 = vmatprep.subr.mxu0 0.0
    %160 = vmatpush1.msra.mxu0 0.0
    %161 = vmatprep.subr.mxu0 0.0
    %162 = vmatpush1.msra.mxu0 0.0
    %163 = vmatprep.subr.mxu0 0.0
    %164 = vmatpush1.msra.mxu0 0.0
    %165 = vmatprep.mubr.f32.mxu0 0.0
    %166 = vmatmul.mubr.f32.gmra.mrb[0].mxu0 %v96
    %v167 = vpop.f32.mrb[0].mxu0
    %v168 = vadd.f32 %v92, %v167
    %v169 = vpop.f32.mrb[0].mxu0
    %170 = vmatprep.mubr.f32.mxu0 0.0
    %171 = vmatmul.mubr.f32.gmra.mrb[0].mxu0 %v99
    %v172 = vpop.f32.mrb[0].mxu0
    %v173 = vadd.f32 %v92, %v172
    %v174 = vpop.f32.mrb[0].mxu0
    %175 = vdwg.mxu0
    %176 = vst [vmem:[#allocation2] sm:$0xff] %v168
    %177 = vst [vmem:[#allocation2 + $0x8] sm:$0xff] %v173
    %v178 = vld [vmem:[%s3] sm:$0xff]
    %v179 = vld [vmem:[%s3 + $0x8] sm:$0xff]
    %v180 = vld [vmem:[%s3 + $0x10] sm:$0xff]
    %v181 = vld [vmem:[%s3 + $0x18] sm:$0xff]
    %v182 = vld [vmem:[%s7] sm:$0x3]
    %v183 = vld [vmem:[%s8] sm:$0x3]
    %v184 = vld [vmem:[#allocation2] sm:$0x3]
    %s185 = scalar_lea.vmem [#allocation2], 14
    %v186 = vld [vmem:[%s185] sm:$0x3]
    %v187 = vsel %vm83, %v184, %v186
    %vm188 = vcmask 261120
    %v190 = vsel %vm188, %v182, 0
    %192 = vmatprep.subr.mxu0 0.0
    %193 = vmatpush1.msra.mxu0 %v178
    %194 = vmatprep.subr.mxu0 0.0
    %195 = vmatpush1.msra.mxu0 %v179
    %196 = vmatprep.subr.mxu0 0.0
    %197 = vmatpush1.msra.mxu0 %v180
    %198 = vmatprep.subr.mxu0 0.0
    %199 = vmatpush1.msra.mxu0 %v181
    %200 = vmatprep.subr.mxu0 0.0
    %201 = vmatpush1.msra.mxu0 0.0
    %202 = vmatprep.subr.mxu0 0.0
    %203 = vmatpush1.msra.mxu0 0.0
    %204 = vmatprep.subr.mxu0 0.0
    %205 = vmatpush1.msra.mxu0 0.0
    %206 = vmatprep.subr.mxu0 0.0
    %207 = vmatpush1.msra.mxu0 0.0
    %208 = vmatprep.subr.mxu0 0.0
    %209 = vmatpush1.msra.mxu0 0.0
    %210 = vmatprep.subr.mxu0 0.0
    %211 = vmatpush1.msra.mxu0 0.0
    %212 = vmatprep.subr.mxu0 0.0
    %213 = vmatpush1.msra.mxu0 0.0
    %214 = vmatprep.subr.mxu0 0.0
    %215 = vmatpush1.msra.mxu0 0.0
    %216 = vmatprep.subr.mxu0 0.0
    %217 = vmatpush1.msra.mxu0 0.0
    %218 = vmatprep.subr.mxu0 0.0
    %219 = vmatpush1.msra.mxu0 0.0
    %220 = vmatprep.subr.mxu0 0.0
    %221 = vmatpush1.msra.mxu0 0.0
    %222 = vmatprep.subr.mxu0 0.0
    %223 = vmatpush1.msra.mxu0 0.0
    %224 = vmatprep.subr.mxu0 0.0
    %225 = vmatpush1.msra.mxu0 0.0
    %226 = vmatprep.subr.mxu0 0.0
    %227 = vmatpush1.msra.mxu0 0.0
    %228 = vmatprep.subr.mxu0 0.0
    %229 = vmatpush1.msra.mxu0 0.0
    %230 = vmatprep.subr.mxu0 0.0
    %231 = vmatpush1.msra.mxu0 0.0
    %232 = vmatprep.subr.mxu0 0.0
    %233 = vmatpush1.msra.mxu0 0.0
    %234 = vmatprep.subr.mxu0 0.0
    %235 = vmatpush1.msra.mxu0 0.0
    %236 = vmatprep.subr.mxu0 0.0
    %237 = vmatpush1.msra.mxu0 0.0
    %238 = vmatprep.subr.mxu0 0.0
    %239 = vmatpush1.msra.mxu0 0.0
    %240 = vmatprep.subr.mxu0 0.0
    %241 = vmatpush1.msra.mxu0 0.0
    %242 = vmatprep.subr.mxu0 0.0
    %243 = vmatpush1.msra.mxu0 0.0
    %244 = vmatprep.subr.mxu0 0.0
    %245 = vmatpush1.msra.mxu0 0.0
    %246 = vmatprep.subr.mxu0 0.0
    %247 = vmatpush1.msra.mxu0 0.0
    %248 = vmatprep.subr.mxu0 0.0
    %249 = vmatpush1.msra.mxu0 0.0
    %250 = vmatprep.subr.mxu0 0.0
    %251 = vmatpush1.msra.mxu0 0.0
    %252 = vmatprep.subr.mxu0 0.0
    %253 = vmatpush1.msra.mxu0 0.0
    %254 = vmatprep.subr.mxu0 0.0
    %255 = vmatpush1.msra.mxu0 0.0
    %256 = vmatprep.mubr.f32.mxu0 0.0
    %257 = vmatmul.mubr.f32.gmra.mrb[0].mxu0 %v190
    %v258 = vpop.f32.mrb[0].mxu0
    %v259 = vadd.f32 0.0, %v258
    %v260 = vpop.f32.mrb[0].mxu0
    %261 = vdwg.mxu0
    %v262 = vadd.f32 %v187, %v259
    %v263 = vxor.u32 %v262, 2147483648
    %v264 = vmul.f32 %v263, 1.442695
    %v265 = vpow.pop %v264
    %v266 = vadd.f32 %v265, 1.0
    %v267 = vrcp.pop %v266
    %v268 = vmul.f32 1.0, %v267
    %v269 = vtanh.pop %v262
    %271 = vrot.lane.b32.xlu0 %v183, 32
    %v272 = vpop.permute.xlu0 %271
    %v274 = vmul.f32 %v268, %v272
    %276 = vrot.lane.b32.xlu0 %v269, 32
    %v277 = vpop.permute.xlu0 %276
    %v279 = vmul.f32 %v268, %v277
    %281 = vrot.lane.b32.xlu0 %v279, 32
    %v282 = vpop.permute.xlu0 %281
    %v284 = vadd.f32 %v274, %v282
    %v285 = vtanh.pop %v284
    %287 = vrot.lane.b32.xlu0 %v285, 32
    %v288 = vpop.permute.xlu0 %287
    %v290 = vmul.f32 %v268, %v288
    %292 = vrot.lane.b32.xlu0 %v290, 64
    %v293 = vpop.permute.xlu0 %292
    %vm295 = vcmask 123904
    %296 = vst.msk [vmem:[#allocation3] sm:$0x3] %vm295, %v293
    %297 = vrot.lane.b32.xlu0 %v290, 48
    %v298 = vpop.permute.xlu0 %297
    %s300 = scalar_lea.vmem [#allocation4], 14
    %301 = vst.msk [vmem:[%s300] sm:$0x3] %vm295, %v298
    %s302 = scalar_lea.vmem [#allocation2], 2
    %v303 = vld [vmem:[%s302] sm:$0x3]
    %s304 = scalar_lea.vmem [#allocation2], 12
    %v305 = vld [vmem:[%s304] sm:$0x3]
    %v306 = vsel %vm83, %v303, %v305
    %v307 = vsel %vm188, %v293, 0
    %309 = vmatprep.subr.mxu0 0.0
    %310 = vmatpush1.msra.mxu0 %v178
    %311 = vmatprep.subr.mxu0 0.0
    %312 = vmatpush1.msra.mxu0 %v179
    %313 = vmatprep.subr.mxu0 0.0
    %314 = vmatpush1.msra.mxu0 %v180
    %315 = vmatprep.subr.mxu0 0.0
    %316 = vmatpush1.msra.mxu0 %v181
    %317 = vmatprep.subr.mxu0 0.0
    %318 = vmatpush1.msra.mxu0 0.0
    %319 = vmatprep.subr.mxu0 0.0
    %320 = vmatpush1.msra.mxu0 0.0
    %321 = vmatprep.subr.mxu0 0.0
    %322 = vmatpush1.msra.mxu0 0.0
    %323 = vmatprep.subr.mxu0 0.0
    %324 = vmatpush1.msra.mxu0 0.0
    %325 = vmatprep.subr.mxu0 0.0
    %326 = vmatpush1.msra.mxu0 0.0
    %327 = vmatprep.subr.mxu0 0.0
    %328 = vmatpush1.msra.mxu0 0.0
    %329 = vmatprep.subr.mxu0 0.0
    %330 = vmatpush1.msra.mxu0 0.0
    %331 = vmatprep.subr.mxu0 0.0
    %332 = vmatpush1.msra.mxu0 0.0
    %333 = vmatprep.subr.mxu0 0.0
    %334 = vmatpush1.msra.mxu0 0.0
    %335 = vmatprep.subr.mxu0 0.0
    %336 = vmatpush1.msra.mxu0 0.0
    %337 = vmatprep.subr.mxu0 0.0
    %338 = vmatpush1.msra.mxu0 0.0
    %339 = vmatprep.subr.mxu0 0.0
    %340 = vmatpush1.msra.mxu0 0.0
    %341 = vmatprep.subr.mxu0 0.0
    %342 = vmatpush1.msra.mxu0 0.0
    %343 = vmatprep.subr.mxu0 0.0
    %344 = vmatpush1.msra.mxu0 0.0
    %345 = vmatprep.subr.mxu0 0.0
    %346 = vmatpush1.msra.mxu0 0.0
    %347 = vmatprep.subr.mxu0 0.0
    %348 = vmatpush1.msra.mxu0 0.0
    %349 = vmatprep.subr.mxu0 0.0
    %350 = vmatpush1.msra.mxu0 0.0
    %351 = vmatprep.subr.mxu0 0.0
    %352 = vmatpush1.msra.mxu0 0.0
    %353 = vmatprep.subr.mxu0 0.0
    %354 = vmatpush1.msra.mxu0 0.0
    %355 = vmatprep.subr.mxu0 0.0
    %356 = vmatpush1.msra.mxu0 0.0
    %357 = vmatprep.subr.mxu0 0.0
    %358 = vmatpush1.msra.mxu0 0.0
    %359 = vmatprep.subr.mxu0 0.0
    %360 = vmatpush1.msra.mxu0 0.0
    %361 = vmatprep.subr.mxu0 0.0
    %362 = vmatpush1.msra.mxu0 0.0
    %363 = vmatprep.subr.mxu0 0.0
    %364 = vmatpush1.msra.mxu0 0.0
    %365 = vmatprep.subr.mxu0 0.0
    %366 = vmatpush1.msra.mxu0 0.0
    %367 = vmatprep.subr.mxu0 0.0
    %368 = vmatpush1.msra.mxu0 0.0
    %369 = vmatprep.subr.mxu0 0.0
    %370 = vmatpush1.msra.mxu0 0.0
    %371 = vmatprep.subr.mxu0 0.0
    %372 = vmatpush1.msra.mxu0 0.0
    %373 = vmatprep.mubr.f32.mxu0 0.0
    %374 = vmatmul.mubr.f32.gmra.mrb[0].mxu0 %v307
    %v375 = vpop.f32.mrb[0].mxu0
    %v376 = vadd.f32 0.0, %v375
    %v377 = vpop.f32.mrb[0].mxu0
    %378 = vdwg.mxu0
    %v379 = vadd.f32 %v306, %v376
    %v380 = vxor.u32 %v379, 2147483648
    %v381 = vmul.f32 %v380, 1.442695
    %v382 = vpow.pop %v381
    %v383 = vadd.f32 %v382, 1.0
    %v384 = vrcp.pop %v383
    %v385 = vmul.f32 1.0, %v384
    %v386 = vtanh.pop %v379
    %v387 = vmul.f32 %v385, %v284
    %389 = vrot.lane.b32.xlu0 %v386, 32
    %v390 = vpop.permute.xlu0 %389
    %v392 = vmul.f32 %v385, %v390
    %394 = vrot.lane.b32.xlu0 %v392, 32
    %v395 = vpop.permute.xlu0 %394
    %v397 = vadd.f32 %v387, %v395
    %v398 = vtanh.pop %v397
    %400 = vrot.lane.b32.xlu0 %v398, 32
    %v401 = vpop.permute.xlu0 %400
    %v403 = vmul.f32 %v385, %v401
    %405 = vrot.lane.b32.xlu0 %v403, 64
    %v406 = vpop.permute.xlu0 %405
    %s408 = scalar_lea.vmem [#allocation3], 2
    %409 = vst.msk [vmem:[%s408] sm:$0x3] %vm295, %v406
    %410 = vrot.lane.b32.xlu0 %v403, 48
    %v411 = vpop.permute.xlu0 %410
    %s413 = scalar_lea.vmem [#allocation4], 12
    %414 = vst.msk [vmem:[%s413] sm:$0x3] %vm295, %v411
    %s415 = scalar_lea.vmem [#allocation2], 4
    %v416 = vld [vmem:[%s415] sm:$0x3]
    %s417 = scalar_lea.vmem [#allocation2], 10
    %v418 = vld [vmem:[%s417] sm:$0x3]
    %v419 = vsel %vm83, %v416, %v418
    %v420 = vsel %vm188, %v406, 0
    %422 = vmatprep.subr.mxu0 0.0
    %423 = vmatpush1.msra.mxu0 %v178
    %424 = vmatprep.subr.mxu0 0.0
    %425 = vmatpush1.msra.mxu0 %v179
    %426 = vmatprep.subr.mxu0 0.0
    %427 = vmatpush1.msra.mxu0 %v180
    %428 = vmatprep.subr.mxu0 0.0
    %429 = vmatpush1.msra.mxu0 %v181
    %430 = vmatprep.subr.mxu0 0.0
    %431 = vmatpush1.msra.mxu0 0.0
    %432 = vmatprep.subr.mxu0 0.0
    %433 = vmatpush1.msra.mxu0 0.0
    %434 = vmatprep.subr.mxu0 0.0
    %435 = vmatpush1.msra.mxu0 0.0
    %436 = vmatprep.subr.mxu0 0.0
    %437 = vmatpush1.msra.mxu0 0.0
    %438 = vmatprep.subr.mxu0 0.0
    %439 = vmatpush1.msra.mxu0 0.0
    %440 = vmatprep.subr.mxu0 0.0
    %441 = vmatpush1.msra.mxu0 0.0
    %442 = vmatprep.subr.mxu0 0.0
    %443 = vmatpush1.msra.mxu0 0.0
    %444 = vmatprep.subr.mxu0 0.0
    %445 = vmatpush1.msra.mxu0 0.0
    %446 = vmatprep.subr.mxu0 0.0
    %447 = vmatpush1.msra.mxu0 0.0
    %448 = vmatprep.subr.mxu0 0.0
    %449 = vmatpush1.msra.mxu0 0.0
    %450 = vmatprep.subr.mxu0 0.0
    %451 = vmatpush1.msra.mxu0 0.0
    %452 = vmatprep.subr.mxu0 0.0
    %453 = vmatpush1.msra.mxu0 0.0
    %454 = vmatprep.subr.mxu0 0.0
    %455 = vmatpush1.msra.mxu0 0.0
    %456 = vmatprep.subr.mxu0 0.0
    %457 = vmatpush1.msra.mxu0 0.0
    %458 = vmatprep.subr.mxu0 0.0
    %459 = vmatpush1.msra.mxu0 0.0
    %460 = vmatprep.subr.mxu0 0.0
    %461 = vmatpush1.msra.mxu0 0.0
    %462 = vmatprep.subr.mxu0 0.0
    %463 = vmatpush1.msra.mxu0 0.0
    %464 = vmatprep.subr.mxu0 0.0
    %465 = vmatpush1.msra.mxu0 0.0
    %466 = vmatprep.subr.mxu0 0.0
    %467 = vmatpush1.msra.mxu0 0.0
    %468 = vmatprep.subr.mxu0 0.0
    %469 = vmatpush1.msra.mxu0 0.0
    %470 = vmatprep.subr.mxu0 0.0
    %471 = vmatpush1.msra.mxu0 0.0
    %472 = vmatprep.subr.mxu0 0.0
    %473 = vmatpush1.msra.mxu0 0.0
    %474 = vmatprep.subr.mxu0 0.0
    %475 = vmatpush1.msra.mxu0 0.0
    %476 = vmatprep.subr.mxu0 0.0
    %477 = vmatpush1.msra.mxu0 0.0
    %478 = vmatprep.subr.mxu0 0.0
    %479 = vmatpush1.msra.mxu0 0.0
    %480 = vmatprep.subr.mxu0 0.0
    %481 = vmatpush1.msra.mxu0 0.0
    %482 = vmatprep.subr.mxu0 0.0
    %483 = vmatpush1.msra.mxu0 0.0
    %484 = vmatprep.subr.mxu0 0.0
    %485 = vmatpush1.msra.mxu0 0.0
    %486 = vmatprep.mubr.f32.mxu0 0.0
    %487 = vmatmul.mubr.f32.gmra.mrb[0].mxu0 %v420
    %v488 = vpop.f32.mrb[0].mxu0
    %v489 = vadd.f32 0.0, %v488
    %v490 = vpop.f32.mrb[0].mxu0
    %491 = vdwg.mxu0
    %v492 = vadd.f32 %v419, %v489
    %v493 = vxor.u32 %v492, 2147483648
    %v494 = vmul.f32 %v493, 1.442695
    %v495 = vpow.pop %v494
    %v496 = vadd.f32 %v495, 1.0
    %v497 = vrcp.pop %v496
    %v498 = vmul.f32 1.0, %v497
    %v499 = vtanh.pop %v492
    %v500 = vmul.f32 %v498, %v397
    %502 = vrot.lane.b32.xlu0 %v499, 32
    %v503 = vpop.permute.xlu0 %502
    %v505 = vmul.f32 %v498, %v503
    %507 = vrot.lane.b32.xlu0 %v505, 32
    %v508 = vpop.permute.xlu0 %507
    %v510 = vadd.f32 %v500, %v508
    %v511 = vtanh.pop %v510
    %513 = vrot.lane.b32.xlu0 %v511, 32
    %v514 = vpop.permute.xlu0 %513
    %v516 = vmul.f32 %v498, %v514
    %518 = vrot.lane.b32.xlu0 %v516, 64
    %v519 = vpop.permute.xlu0 %518
    %s521 = scalar_lea.vmem [#allocation3], 4
    %522 = vst.msk [vmem:[%s521] sm:$0x3] %vm295, %v519
    %523 = vrot.lane.b32.xlu0 %v516, 48
    %v524 = vpop.permute.xlu0 %523
    %s526 = scalar_lea.vmem [#allocation4], 10
    %527 = vst.msk [vmem:[%s526] sm:$0x3] %vm295, %v524
    %s528 = scalar_lea.vmem [#allocation2], 6
    %v529 = vld [vmem:[%s528] sm:$0x3]
    %s530 = scalar_lea.vmem [#allocation2], 8
    %v531 = vld [vmem:[%s530] sm:$0x3]
    %v532 = vsel %vm83, %v529, %v531
    %v533 = vsel %vm188, %v519, 0
    %535 = vmatprep.subr.mxu0 0.0
    %536 = vmatpush1.msra.mxu0 %v178
    %537 = vmatprep.subr.mxu0 0.0
    %538 = vmatpush1.msra.mxu0 %v179
    %539 = vmatprep.subr.mxu0 0.0
    %540 = vmatpush1.msra.mxu0 %v180
    %541 = vmatprep.subr.mxu0 0.0
    %542 = vmatpush1.msra.mxu0 %v181
    %543 = vmatprep.subr.mxu0 0.0
    %544 = vmatpush1.msra.mxu0 0.0
    %545 = vmatprep.subr.mxu0 0.0
    %546 = vmatpush1.msra.mxu0 0.0
    %547 = vmatprep.subr.mxu0 0.0
    %548 = vmatpush1.msra.mxu0 0.0
    %549 = vmatprep.subr.mxu0 0.0
    %550 = vmatpush1.msra.mxu0 0.0
    %551 = vmatprep.subr.mxu0 0.0
    %552 = vmatpush1.msra.mxu0 0.0
    %553 = vmatprep.subr.mxu0 0.0
    %554 = vmatpush1.msra.mxu0 0.0
    %555 = vmatprep.subr.mxu0 0.0
    %556 = vmatpush1.msra.mxu0 0.0
    %557 = vmatprep.subr.mxu0 0.0
    %558 = vmatpush1.msra.mxu0 0.0
    %559 = vmatprep.subr.mxu0 0.0
    %560 = vmatpush1.msra.mxu0 0.0
    %561 = vmatprep.subr.mxu0 0.0
    %562 = vmatpush1.msra.mxu0 0.0
    %563 = vmatprep.subr.mxu0 0.0
    %564 = vmatpush1.msra.mxu0 0.0
    %565 = vmatprep.subr.mxu0 0.0
    %566 = vmatpush1.msra.mxu0 0.0
    %567 = vmatprep.subr.mxu0 0.0
    %568 = vmatpush1.msra.mxu0 0.0
    %569 = vmatprep.subr.mxu0 0.0
    %570 = vmatpush1.msra.mxu0 0.0
    %571 = vmatprep.subr.mxu0 0.0
    %572 = vmatpush1.msra.mxu0 0.0
    %573 = vmatprep.subr.mxu0 0.0
    %574 = vmatpush1.msra.mxu0 0.0
    %575 = vmatprep.subr.mxu0 0.0
    %576 = vmatpush1.msra.mxu0 0.0
    %577 = vmatprep.subr.mxu0 0.0
    %578 = vmatpush1.msra.mxu0 0.0
    %579 = vmatprep.subr.mxu0 0.0
    %580 = vmatpush1.msra.mxu0 0.0
    %581 = vmatprep.subr.mxu0 0.0
    %582 = vmatpush1.msra.mxu0 0.0
    %583 = vmatprep.subr.mxu0 0.0
    %584 = vmatpush1.msra.mxu0 0.0
    %585 = vmatprep.subr.mxu0 0.0
    %586 = vmatpush1.msra.mxu0 0.0
    %587 = vmatprep.subr.mxu0 0.0
    %588 = vmatpush1.msra.mxu0 0.0
    %589 = vmatprep.subr.mxu0 0.0
    %590 = vmatpush1.msra.mxu0 0.0
    %591 = vmatprep.subr.mxu0 0.0
    %592 = vmatpush1.msra.mxu0 0.0
    %593 = vmatprep.subr.mxu0 0.0
    %594 = vmatpush1.msra.mxu0 0.0
    %595 = vmatprep.subr.mxu0 0.0
    %596 = vmatpush1.msra.mxu0 0.0
    %597 = vmatprep.subr.mxu0 0.0
    %598 = vmatpush1.msra.mxu0 0.0
    %599 = vmatprep.mubr.f32.mxu0 0.0
    %600 = vmatmul.mubr.f32.gmra.mrb[0].mxu0 %v533
    %v601 = vpop.f32.mrb[0].mxu0
    %v602 = vadd.f32 0.0, %v601
    %v603 = vpop.f32.mrb[0].mxu0
    %604 = vdwg.mxu0
    %v605 = vadd.f32 %v532, %v602
    %v606 = vxor.u32 %v605, 2147483648
    %v607 = vmul.f32 %v606, 1.442695
    %v608 = vpow.pop %v607
    %v609 = vadd.f32 %v608, 1.0
    %v610 = vrcp.pop %v609
    %v611 = vmul.f32 1.0, %v610
    %v612 = vtanh.pop %v605
    %v613 = vmul.f32 %v611, %v510
    %615 = vrot.lane.b32.xlu0 %v612, 32
    %v616 = vpop.permute.xlu0 %615
    %v618 = vmul.f32 %v611, %v616
    %620 = vrot.lane.b32.xlu0 %v618, 32
    %v621 = vpop.permute.xlu0 %620
    %v623 = vadd.f32 %v613, %v621
    %v624 = vtanh.pop %v623
    %626 = vrot.lane.b32.xlu0 %v624, 32
    %v627 = vpop.permute.xlu0 %626
    %v629 = vmul.f32 %v611, %v627
    %631 = vrot.lane.b32.xlu0 %v629, 64
    %v632 = vpop.permute.xlu0 %631
    %s634 = scalar_lea.vmem [#allocation3], 6
    %635 = vst.msk [vmem:[%s634] sm:$0x3] %vm295, %v632
    %636 = vrot.lane.b32.xlu0 %v629, 48
    %v637 = vpop.permute.xlu0 %636
    %s639 = scalar_lea.vmem [#allocation4], 8
    %640 = vst.msk [vmem:[%s639] sm:$0x3] %vm295, %v637
    %v641 = vld [vmem:[%s530] sm:$0x3]
    %v642 = vld [vmem:[%s528] sm:$0x3]
    %v643 = vsel %vm83, %v641, %v642
    %v644 = vsel %vm188, %v632, 0
    %646 = vmatprep.subr.mxu0 0.0
    %647 = vmatpush1.msra.mxu0 %v178
    %648 = vmatprep.subr.mxu0 0.0
    %649 = vmatpush1.msra.mxu0 %v179
    %650 = vmatprep.subr.mxu0 0.0
    %651 = vmatpush1.msra.mxu0 %v180
    %652 = vmatprep.subr.mxu0 0.0
    %653 = vmatpush1.msra.mxu0 %v181
    %654 = vmatprep.subr.mxu0 0.0
    %655 = vmatpush1.msra.mxu0 0.0
    %656 = vmatprep.subr.mxu0 0.0
    %657 = vmatpush1.msra.mxu0 0.0
    %658 = vmatprep.subr.mxu0 0.0
    %659 = vmatpush1.msra.mxu0 0.0
    %660 = vmatprep.subr.mxu0 0.0
    %661 = vmatpush1.msra.mxu0 0.0
    %662 = vmatprep.subr.mxu0 0.0
    %663 = vmatpush1.msra.mxu0 0.0
    %664 = vmatprep.subr.mxu0 0.0
    %665 = vmatpush1.msra.mxu0 0.0
    %666 = vmatprep.subr.mxu0 0.0
    %667 = vmatpush1.msra.mxu0 0.0
    %668 = vmatprep.subr.mxu0 0.0
    %669 = vmatpush1.msra.mxu0 0.0
    %670 = vmatprep.subr.mxu0 0.0
    %671 = vmatpush1.msra.mxu0 0.0
    %672 = vmatprep.subr.mxu0 0.0
    %673 = vmatpush1.msra.mxu0 0.0
    %674 = vmatprep.subr.mxu0 0.0
    %675 = vmatpush1.msra.mxu0 0.0
    %676 = vmatprep.subr.mxu0 0.0
    %677 = vmatpush1.msra.mxu0 0.0
    %678 = vmatprep.subr.mxu0 0.0
    %679 = vmatpush1.msra.mxu0 0.0
    %680 = vmatprep.subr.mxu0 0.0
    %681 = vmatpush1.msra.mxu0 0.0
    %682 = vmatprep.subr.mxu0 0.0
    %683 = vmatpush1.msra.mxu0 0.0
    %684 = vmatprep.subr.mxu0 0.0
    %685 = vmatpush1.msra.mxu0 0.0
    %686 = vmatprep.subr.mxu0 0.0
    %687 = vmatpush1.msra.mxu0 0.0
    %688 = vmatprep.subr.mxu0 0.0
    %689 = vmatpush1.msra.mxu0 0.0
    %690 = vmatprep.subr.mxu0 0.0
    %691 = vmatpush1.msra.mxu0 0.0
    %692 = vmatprep.subr.mxu0 0.0
    %693 = vmatpush1.msra.mxu0 0.0
    %694 = vmatprep.subr.mxu0 0.0
    %695 = vmatpush1.msra.mxu0 0.0
    %696 = vmatprep.subr.mxu0 0.0
    %697 = vmatpush1.msra.mxu0 0.0
    %698 = vmatprep.subr.mxu0 0.0
    %699 = vmatpush1.msra.mxu0 0.0
    %700 = vmatprep.subr.mxu0 0.0
    %701 = vmatpush1.msra.mxu0 0.0
    %702 = vmatprep.subr.mxu0 0.0
    %703 = vmatpush1.msra.mxu0 0.0
    %704 = vmatprep.subr.mxu0 0.0
    %705 = vmatpush1.msra.mxu0 0.0
    %706 = vmatprep.subr.mxu0 0.0
    %707 = vmatpush1.msra.mxu0 0.0
    %708 = vmatprep.subr.mxu0 0.0
    %709 = vmatpush1.msra.mxu0 0.0
    %710 = vmatprep.mubr.f32.mxu0 0.0
    %711 = vmatmul.mubr.f32.gmra.mrb[0].mxu0 %v644
    %v712 = vpop.f32.mrb[0].mxu0
    %v713 = vadd.f32 0.0, %v712
    %v714 = vpop.f32.mrb[0].mxu0
    %715 = vdwg.mxu0
    %v716 = vadd.f32 %v643, %v713
    %v717 = vxor.u32 %v716, 2147483648
    %v718 = vmul.f32 %v717, 1.442695
    %v719 = vpow.pop %v718
    %v720 = vadd.f32 %v719, 1.0
    %v721 = vrcp.pop %v720
    %v722 = vmul.f32 1.0, %v721
    %v723 = vtanh.pop %v716
    %v724 = vmul.f32 %v722, %v623
    %726 = vrot.lane.b32.xlu0 %v723, 32
    %v727 = vpop.permute.xlu0 %726
    %v729 = vmul.f32 %v722, %v727
    %731 = vrot.lane.b32.xlu0 %v729, 32
    %v732 = vpop.permute.xlu0 %731
    %v734 = vadd.f32 %v724, %v732
    %v735 = vtanh.pop %v734
    %737 = vrot.lane.b32.xlu0 %v735, 32
    %v738 = vpop.permute.xlu0 %737
    %v740 = vmul.f32 %v722, %v738
    %742 = vrot.lane.b32.xlu0 %v740, 64
    %v743 = vpop.permute.xlu0 %742
    %s745 = scalar_lea.vmem [#allocation3], 8
    %746 = vst.msk [vmem:[%s745] sm:$0x3] %vm295, %v743
    %747 = vrot.lane.b32.xlu0 %v740, 48
    %v748 = vpop.permute.xlu0 %747
    %s750 = scalar_lea.vmem [#allocation4], 6
    %751 = vst.msk [vmem:[%s750] sm:$0x3] %vm295, %v748
    %v752 = vld [vmem:[%s417] sm:$0x3]
    %v753 = vld [vmem:[%s415] sm:$0x3]
    %v754 = vsel %vm83, %v752, %v753
    %v755 = vsel %vm188, %v743, 0
    %757 = vmatprep.subr.mxu0 0.0
    %758 = vmatpush1.msra.mxu0 %v178
    %759 = vmatprep.subr.mxu0 0.0
    %760 = vmatpush1.msra.mxu0 %v179
    %761 = vmatprep.subr.mxu0 0.0
    %762 = vmatpush1.msra.mxu0 %v180
    %763 = vmatprep.subr.mxu0 0.0
    %764 = vmatpush1.msra.mxu0 %v181
    %765 = vmatprep.subr.mxu0 0.0
    %766 = vmatpush1.msra.mxu0 0.0
    %767 = vmatprep.subr.mxu0 0.0
    %768 = vmatpush1.msra.mxu0 0.0
    %769 = vmatprep.subr.mxu0 0.0
    %770 = vmatpush1.msra.mxu0 0.0
    %771 = vmatprep.subr.mxu0 0.0
    %772 = vmatpush1.msra.mxu0 0.0
    %773 = vmatprep.subr.mxu0 0.0
    %774 = vmatpush1.msra.mxu0 0.0
    %775 = vmatprep.subr.mxu0 0.0
    %776 = vmatpush1.msra.mxu0 0.0
    %777 = vmatprep.subr.mxu0 0.0
    %778 = vmatpush1.msra.mxu0 0.0
    %779 = vmatprep.subr.mxu0 0.0
    %780 = vmatpush1.msra.mxu0 0.0
    %781 = vmatprep.subr.mxu0 0.0
    %782 = vmatpush1.msra.mxu0 0.0
    %783 = vmatprep.subr.mxu0 0.0
    %784 = vmatpush1.msra.mxu0 0.0
    %785 = vmatprep.subr.mxu0 0.0
    %786 = vmatpush1.msra.mxu0 0.0
    %787 = vmatprep.subr.mxu0 0.0
    %788 = vmatpush1.msra.mxu0 0.0
    %789 = vmatprep.subr.mxu0 0.0
    %790 = vmatpush1.msra.mxu0 0.0
    %791 = vmatprep.subr.mxu0 0.0
    %792 = vmatpush1.msra.mxu0 0.0
    %793 = vmatprep.subr.mxu0 0.0
    %794 = vmatpush1.msra.mxu0 0.0
    %795 = vmatprep.subr.mxu0 0.0
    %796 = vmatpush1.msra.mxu0 0.0
    %797 = vmatprep.subr.mxu0 0.0
    %798 = vmatpush1.msra.mxu0 0.0
    %799 = vmatprep.subr.mxu0 0.0
    %800 = vmatpush1.msra.mxu0 0.0
    %801 = vmatprep.subr.mxu0 0.0
    %802 = vmatpush1.msra.mxu0 0.0
    %803 = vmatprep.subr.mxu0 0.0
    %804 = vmatpush1.msra.mxu0 0.0
    %805 = vmatprep.subr.mxu0 0.0
    %806 = vmatpush1.msra.mxu0 0.0
    %807 = vmatprep.subr.mxu0 0.0
    %808 = vmatpush1.msra.mxu0 0.0
    %809 = vmatprep.subr.mxu0 0.0
    %810 = vmatpush1.msra.mxu0 0.0
    %811 = vmatprep.subr.mxu0 0.0
    %812 = vmatpush1.msra.mxu0 0.0
    %813 = vmatprep.subr.mxu0 0.0
    %814 = vmatpush1.msra.mxu0 0.0
    %815 = vmatprep.subr.mxu0 0.0
    %816 = vmatpush1.msra.mxu0 0.0
    %817 = vmatprep.subr.mxu0 0.0
    %818 = vmatpush1.msra.mxu0 0.0
    %819 = vmatprep.subr.mxu0 0.0
    %820 = vmatpush1.msra.mxu0 0.0
    %821 = vmatprep.mubr.f32.mxu0 0.0
    %822 = vmatmul.mubr.f32.gmra.mrb[0].mxu0 %v755
    %v823 = vpop.f32.mrb[0].mxu0
    %v824 = vadd.f32 0.0, %v823
    %v825 = vpop.f32.mrb[0].mxu0
    %826 = vdwg.mxu0
    %v827 = vadd.f32 %v754, %v824
    %v828 = vxor.u32 %v827, 2147483648
    %v829 = vmul.f32 %v828, 1.442695
    %v830 = vpow.pop %v829
    %v831 = vadd.f32 %v830, 1.0
    %v832 = vrcp.pop %v831
    %v833 = vmul.f32 1.0, %v832
    %v834 = vtanh.pop %v827
    %v835 = vmul.f32 %v833, %v734
    %837 = vrot.lane.b32.xlu0 %v834, 32
    %v838 = vpop.permute.xlu0 %837
    %v840 = vmul.f32 %v833, %v838
    %842 = vrot.lane.b32.xlu0 %v840, 32
    %v843 = vpop.permute.xlu0 %842
    %v845 = vadd.f32 %v835, %v843
    %v846 = vtanh.pop %v845
    %848 = vrot.lane.b32.xlu0 %v846, 32
    %v849 = vpop.permute.xlu0 %848
    %v851 = vmul.f32 %v833, %v849
    %853 = vrot.lane.b32.xlu0 %v851, 64
    %v854 = vpop.permute.xlu0 %853
    %s856 = scalar_lea.vmem [#allocation3], 10
    %857 = vst.msk [vmem:[%s856] sm:$0x3] %vm295, %v854
    %858 = vrot.lane.b32.xlu0 %v851, 48
    %v859 = vpop.permute.xlu0 %858
    %s861 = scalar_lea.vmem [#allocation4], 4
    %862 = vst.msk [vmem:[%s861] sm:$0x3] %vm295, %v859
    %v863 = vld [vmem:[%s304] sm:$0x3]
    %v864 = vld [vmem:[%s302] sm:$0x3]
    %v865 = vsel %vm83, %v863, %v864
    %v866 = vsel %vm188, %v854, 0
    %868 = vmatprep.subr.mxu0 0.0
    %869 = vmatpush1.msra.mxu0 %v178
    %870 = vmatprep.subr.mxu0 0.0
    %871 = vmatpush1.msra.mxu0 %v179
    %872 = vmatprep.subr.mxu0 0.0
    %873 = vmatpush1.msra.mxu0 %v180
    %874 = vmatprep.subr.mxu0 0.0
    %875 = vmatpush1.msra.mxu0 %v181
    %876 = vmatprep.subr.mxu0 0.0
    %877 = vmatpush1.msra.mxu0 0.0
    %878 = vmatprep.subr.mxu0 0.0
    %879 = vmatpush1.msra.mxu0 0.0
    %880 = vmatprep.subr.mxu0 0.0
    %881 = vmatpush1.msra.mxu0 0.0
    %882 = vmatprep.subr.mxu0 0.0
    %883 = vmatpush1.msra.mxu0 0.0
    %884 = vmatprep.subr.mxu0 0.0
    %885 = vmatpush1.msra.mxu0 0.0
    %886 = vmatprep.subr.mxu0 0.0
    %887 = vmatpush1.msra.mxu0 0.0
    %888 = vmatprep.subr.mxu0 0.0
    %889 = vmatpush1.msra.mxu0 0.0
    %890 = vmatprep.subr.mxu0 0.0
    %891 = vmatpush1.msra.mxu0 0.0
    %892 = vmatprep.subr.mxu0 0.0
    %893 = vmatpush1.msra.mxu0 0.0
    %894 = vmatprep.subr.mxu0 0.0
    %895 = vmatpush1.msra.mxu0 0.0
    %896 = vmatprep.subr.mxu0 0.0
    %897 = vmatpush1.msra.mxu0 0.0
    %898 = vmatprep.subr.mxu0 0.0
    %899 = vmatpush1.msra.mxu0 0.0
    %900 = vmatprep.subr.mxu0 0.0
    %901 = vmatpush1.msra.mxu0 0.0
    %902 = vmatprep.subr.mxu0 0.0
    %903 = vmatpush1.msra.mxu0 0.0
    %904 = vmatprep.subr.mxu0 0.0
    %905 = vmatpush1.msra.mxu0 0.0
    %906 = vmatprep.subr.mxu0 0.0
    %907 = vmatpush1.msra.mxu0 0.0
    %908 = vmatprep.subr.mxu0 0.0
    %909 = vmatpush1.msra.mxu0 0.0
    %910 = vmatprep.subr.mxu0 0.0
    %911 = vmatpush1.msra.mxu0 0.0
    %912 = vmatprep.subr.mxu0 0.0
    %913 = vmatpush1.msra.mxu0 0.0
    %914 = vmatprep.subr.mxu0 0.0
    %915 = vmatpush1.msra.mxu0 0.0
    %916 = vmatprep.subr.mxu0 0.0
    %917 = vmatpush1.msra.mxu0 0.0
    %918 = vmatprep.subr.mxu0 0.0
    %919 = vmatpush1.msra.mxu0 0.0
    %920 = vmatprep.subr.mxu0 0.0
    %921 = vmatpush1.msra.mxu0 0.0
    %922 = vmatprep.subr.mxu0 0.0
    %923 = vmatpush1.msra.mxu0 0.0
    %924 = vmatprep.subr.mxu0 0.0
    %925 = vmatpush1.msra.mxu0 0.0
    %926 = vmatprep.subr.mxu0 0.0
    %927 = vmatpush1.msra.mxu0 0.0
    %928 = vmatprep.subr.mxu0 0.0
    %929 = vmatpush1.msra.mxu0 0.0
    %930 = vmatprep.subr.mxu0 0.0
    %931 = vmatpush1.msra.mxu0 0.0
    %932 = vmatprep.mubr.f32.mxu0 0.0
    %933 = vmatmul.mubr.f32.gmra.mrb[0].mxu0 %v866
    %v934 = vpop.f32.mrb[0].mxu0
    %v935 = vadd.f32 0.0, %v934
    %v936 = vpop.f32.mrb[0].mxu0
    %937 = vdwg.mxu0
    %v938 = vadd.f32 %v865, %v935
    %v939 = vxor.u32 %v938, 2147483648
    %v940 = vmul.f32 %v939, 1.442695
    %v941 = vpow.pop %v940
    %v942 = vadd.f32 %v941, 1.0
    %v943 = vrcp.pop %v942
    %v944 = vmul.f32 1.0, %v943
    %v945 = vtanh.pop %v938
    %v946 = vmul.f32 %v944, %v845
    %948 = vrot.lane.b32.xlu0 %v945, 32
    %v949 = vpop.permute.xlu0 %948
    %v951 = vmul.f32 %v944, %v949
    %953 = vrot.lane.b32.xlu0 %v951, 32
    %v954 = vpop.permute.xlu0 %953
    %v956 = vadd.f32 %v946, %v954
    %v957 = vtanh.pop %v956
    %959 = vrot.lane.b32.xlu0 %v957, 32
    %v960 = vpop.permute.xlu0 %959
    %v962 = vmul.f32 %v944, %v960
    %964 = vrot.lane.b32.xlu0 %v962, 64
    %v965 = vpop.permute.xlu0 %964
    %s967 = scalar_lea.vmem [#allocation3], 12
    %968 = vst.msk [vmem:[%s967] sm:$0x3] %vm295, %v965
    %969 = vrot.lane.b32.xlu0 %v962, 48
    %v970 = vpop.permute.xlu0 %969
    %s972 = scalar_lea.vmem [#allocation4], 2
    %973 = vst.msk [vmem:[%s972] sm:$0x3] %vm295, %v970
    %v974 = vld [vmem:[%s185] sm:$0x3]
    %v975 = vld [vmem:[#allocation2] sm:$0x3]
    %v976 = vsel %vm83, %v974, %v975
    %v977 = vsel %vm188, %v965, 0
    %979 = vmatprep.subr.mxu0 0.0
    %980 = vmatpush1.msra.mxu0 %v178
    %981 = vmatprep.subr.mxu0 0.0
    %982 = vmatpush1.msra.mxu0 %v179
    %983 = vmatprep.subr.mxu0 0.0
    %984 = vmatpush1.msra.mxu0 %v180
    %985 = vmatprep.subr.mxu0 0.0
    %986 = vmatpush1.msra.mxu0 %v181
    %987 = vmatprep.subr.mxu0 0.0
    %988 = vmatpush1.msra.mxu0 0.0
    %989 = vmatprep.subr.mxu0 0.0
    %990 = vmatpush1.msra.mxu0 0.0
    %991 = vmatprep.subr.mxu0 0.0
    %992 = vmatpush1.msra.mxu0 0.0
    %993 = vmatprep.subr.mxu0 0.0
    %994 = vmatpush1.msra.mxu0 0.0
    %995 = vmatprep.subr.mxu0 0.0
    %996 = vmatpush1.msra.mxu0 0.0
    %997 = vmatprep.subr.mxu0 0.0
    %998 = vmatpush1.msra.mxu0 0.0
    %999 = vmatprep.subr.mxu0 0.0
    %1000 = vmatpush1.msra.mxu0 0.0
    %1001 = vmatprep.subr.mxu0 0.0
    %1002 = vmatpush1.msra.mxu0 0.0
    %1003 = vmatprep.subr.mxu0 0.0
    %1004 = vmatpush1.msra.mxu0 0.0
    %1005 = vmatprep.subr.mxu0 0.0
    %1006 = vmatpush1.msra.mxu0 0.0
    %1007 = vmatprep.subr.mxu0 0.0
    %1008 = vmatpush1.msra.mxu0 0.0
    %1009 = vmatprep.subr.mxu0 0.0
    %1010 = vmatpush1.msra.mxu0 0.0
    %1011 = vmatprep.subr.mxu0 0.0
    %1012 = vmatpush1.msra.mxu0 0.0
    %1013 = vmatprep.subr.mxu0 0.0
    %1014 = vmatpush1.msra.mxu0 0.0
    %1015 = vmatprep.subr.mxu0 0.0
    %1016 = vmatpush1.msra.mxu0 0.0
    %1017 = vmatprep.subr.mxu0 0.0
    %1018 = vmatpush1.msra.mxu0 0.0
    %1019 = vmatprep.subr.mxu0 0.0
    %1020 = vmatpush1.msra.mxu0 0.0
    %1021 = vmatprep.subr.mxu0 0.0
    %1022 = vmatpush1.msra.mxu0 0.0
    %1023 = vmatprep.subr.mxu0 0.0
    %1024 = vmatpush1.msra.mxu0 0.0
    %1025 = vmatprep.subr.mxu0 0.0
    %1026 = vmatpush1.msra.mxu0 0.0
    %1027 = vmatprep.subr.mxu0 0.0
    %1028 = vmatpush1.msra.mxu0 0.0
    %1029 = vmatprep.subr.mxu0 0.0
    %1030 = vmatpush1.msra.mxu0 0.0
    %1031 = vmatprep.subr.mxu0 0.0
    %1032 = vmatpush1.msra.mxu0 0.0
    %1033 = vmatprep.subr.mxu0 0.0
    %1034 = vmatpush1.msra.mxu0 0.0
    %1035 = vmatprep.subr.mxu0 0.0
    %1036 = vmatpush1.msra.mxu0 0.0
    %1037 = vmatprep.subr.mxu0 0.0
    %1038 = vmatpush1.msra.mxu0 0.0
    %1039 = vmatprep.subr.mxu0 0.0
    %1040 = vmatpush1.msra.mxu0 0.0
    %1041 = vmatprep.subr.mxu0 0.0
    %1042 = vmatpush1.msra.mxu0 0.0
    %1043 = vmatprep.mubr.f32.mxu0 0.0
    %1044 = vmatmul.mubr.f32.gmra.mrb[0].mxu0 %v977
    %v1045 = vpop.f32.mrb[0].mxu0
    %v1046 = vadd.f32 0.0, %v1045
    %v1047 = vpop.f32.mrb[0].mxu0
    %1048 = vdwg.mxu0
    %v1049 = vadd.f32 %v976, %v1046
    %v1050 = vxor.u32 %v1049, 2147483648
    %v1051 = vmul.f32 %v1050, 1.442695
    %v1052 = vpow.pop %v1051
    %v1053 = vadd.f32 %v1052, 1.0
    %v1054 = vrcp.pop %v1053
    %v1055 = vmul.f32 1.0, %v1054
    %v1056 = vtanh.pop %v1049
    %v1057 = vmul.f32 %v1055, %v956
    %1059 = vrot.lane.b32.xlu0 %v1056, 32
    %v1060 = vpop.permute.xlu0 %1059
    %v1062 = vmul.f32 %v1055, %v1060
    %1064 = vrot.lane.b32.xlu0 %v1062, 32
    %v1065 = vpop.permute.xlu0 %1064
    %v1067 = vadd.f32 %v1057, %v1065
    %v1068 = vtanh.pop %v1067
    %1070 = vrot.lane.b32.xlu0 %v1068, 32
    %v1071 = vpop.permute.xlu0 %1070
    %v1073 = vmul.f32 %v1055, %v1071
    %1075 = vrot.lane.b32.xlu0 %v1073, 64
    %v1076 = vpop.permute.xlu0 %1075
    %s1078 = scalar_lea.vmem [#allocation3], 14
    %1079 = vst.msk [vmem:[%s1078] sm:$0x3] %vm295, %v1076
    %1080 = vrot.lane.b32.xlu0 %v1073, 48
    %v1081 = vpop.permute.xlu0 %1080
    %1083 = vst.msk [vmem:[#allocation4] sm:$0x3] %vm295, %v1081
    %vm1084 = vcmask 254976
    %1085 = vst.msk [vmem:[#allocation10] sm:$0x3] %vm1084, %v1076
    %1087 = vrot.lane.b32.xlu0 %v1067, 96
    %v1088 = vpop.permute.xlu0 %1087
    %1090 = vst.msk [vmem:[#allocation11] sm:$0x3] %vm1084, %v1088
    %v1091 = vld [vmem:[#allocation3] sm:$0x3]
    %v1092 = vld [vmem:[#allocation3 + $0x2] sm:$0x3]
    %v1093 = vld [vmem:[#allocation3 + $0x4] sm:$0x3]
    %v1094 = vld [vmem:[#allocation3 + $0x6] sm:$0x3]
    %v1095 = vld [vmem:[#allocation3 + $0x8] sm:$0x3]
    %v1096 = vld [vmem:[#allocation3 + $0xa] sm:$0x3]
    %v1097 = vld [vmem:[#allocation3 + $0xc] sm:$0x3]
    %v1098 = vld [vmem:[#allocation3 + $0xe] sm:$0x3]
    %v1099 = vld [vmem:[#allocation4] sm:$0x3]
    %v1100 = vld [vmem:[#allocation4 + $0x2] sm:$0x3]
    %v1101 = vld [vmem:[#allocation4 + $0x4] sm:$0x3]
    %v1102 = vld [vmem:[#allocation4 + $0x6] sm:$0x3]
    %v1103 = vld [vmem:[#allocation4 + $0x8] sm:$0x3]
    %v1104 = vld [vmem:[#allocation4 + $0xa] sm:$0x3]
    %v1105 = vld [vmem:[#allocation4 + $0xc] sm:$0x3]
    %v1106 = vld [vmem:[#allocation4 + $0xe] sm:$0x3]
    %v1107 = vld [vmem:[%s6] sm:$0x1]
    %v1108 = vld [vmem:[%s2] sm:$0xff]
    %v1109 = vld [vmem:[%s2 + $0x8] sm:$0xff]
    %v1110 = vld [vmem:[%s2 + $0x10] sm:$0xff]
    %v1111 = vld [vmem:[%s2 + $0x18] sm:$0xff]
    %v1120 = vcombine.low %v1099, %v1100
    %v1121 = vcombine.low %v1101, %v1102
    %v1123 = vunpack.c.l.s4 1983009808
    %v1124 = vunpack.c.0.s8 %v1123
    %v1125 = vlaneseq
    %v1126 = vshrl.u32 %v1125, 7
    %v1127 = vsub.s32 %v1124, %v1126
    %v1128 = vrot.slane %v1120, %v1127
    %v1130 = vunpack.c.l.s4 1983009808
    %v1131 = vunpack.c.0.s8 %v1130
    %v1132 = vlaneseq
    %v1133 = vshrl.u32 %v1132, 7
    %v1134 = vsub.s32 %v1131, %v1133
    %v1135 = vrot.slane %v1121, %v1134
    %v1136 = vcombine.low %v1128, %v1135
    %v1137 = vcombine.low %v1103, %v1104
    %v1138 = vcombine.low %v1105, %v1106
    %v1140 = vunpack.c.l.s4 1983009808
    %v1141 = vunpack.c.0.s8 %v1140
    %v1142 = vlaneseq
    %v1143 = vshrl.u32 %v1142, 7
    %v1144 = vsub.s32 %v1141, %v1143
    %v1145 = vrot.slane %v1137, %v1144
    %v1147 = vunpack.c.l.s4 1983009808
    %v1148 = vunpack.c.0.s8 %v1147
    %v1149 = vlaneseq
    %v1150 = vshrl.u32 %v1149, 7
    %v1151 = vsub.s32 %v1148, %v1150
    %v1152 = vrot.slane %v1138, %v1151
    %v1153 = vcombine.low %v1145, %v1152
    %vm1154 = vcmask 130048
    %v1155 = vsel %vm1154, %v1136, 0
    %v1157 = vsel %vm1154, %v1153, 0
    %1159 = vmatprep.subr.mxu0 0.0
    %1160 = vmatpush1.msra.mxu0 %v1110
    %1161 = vmatprep.subr.mxu0 0.0
    %1162 = vmatpush1.msra.mxu0 %v1111
    %1163 = vmatprep.subr.mxu0 0.0
    %1164 = vmatpush1.msra.mxu0 0.0
    %1165 = vmatprep.subr.mxu0 0.0
    %1166 = vmatpush1.msra.mxu0 0.0
    %1167 = vmatprep.subr.mxu0 0.0
    %1168 = vmatpush1.msra.mxu0 0.0
    %1169 = vmatprep.subr.mxu0 0.0
    %1170 = vmatpush1.msra.mxu0 0.0
    %1171 = vmatprep.subr.mxu0 0.0
    %1172 = vmatpush1.msra.mxu0 0.0
    %1173 = vmatprep.subr.mxu0 0.0
    %1174 = vmatpush1.msra.mxu0 0.0
    %1175 = vmatprep.subr.mxu0 0.0
    %1176 = vmatpush1.msra.mxu0 0.0
    %1177 = vmatprep.subr.mxu0 0.0
    %1178 = vmatpush1.msra.mxu0 0.0
    %1179 = vmatprep.subr.mxu0 0.0
    %1180 = vmatpush1.msra.mxu0 0.0
    %1181 = vmatprep.subr.mxu0 0.0
    %1182 = vmatpush1.msra.mxu0 0.0
    %1183 = vmatprep.subr.mxu0 0.0
    %1184 = vmatpush1.msra.mxu0 0.0
    %1185 = vmatprep.subr.mxu0 0.0
    %1186 = vmatpush1.msra.mxu0 0.0
    %1187 = vmatprep.subr.mxu0 0.0
    %1188 = vmatpush1.msra.mxu0 0.0
    %1189 = vmatprep.subr.mxu0 0.0
    %1190 = vmatpush1.msra.mxu0 0.0
    %1191 = vmatprep.subr.mxu0 0.0
    %1192 = vmatpush1.msra.mxu0 0.0
    %1193 = vmatprep.subr.mxu0 0.0
    %1194 = vmatpush1.msra.mxu0 0.0
    %1195 = vmatprep.subr.mxu0 0.0
    %1196 = vmatpush1.msra.mxu0 0.0
    %1197 = vmatprep.subr.mxu0 0.0
    %1198 = vmatpush1.msra.mxu0 0.0
    %1199 = vmatprep.subr.mxu0 0.0
    %1200 = vmatpush1.msra.mxu0 0.0
    %1201 = vmatprep.subr.mxu0 0.0
    %1202 = vmatpush1.msra.mxu0 0.0
    %1203 = vmatprep.subr.mxu0 0.0
    %1204 = vmatpush1.msra.mxu0 0.0
    %1205 = vmatprep.subr.mxu0 0.0
    %1206 = vmatpush1.msra.mxu0 0.0
    %1207 = vmatprep.subr.mxu0 0.0
    %1208 = vmatpush1.msra.mxu0 0.0
    %1209 = vmatprep.subr.mxu0 0.0
    %1210 = vmatpush1.msra.mxu0 0.0
    %1211 = vmatprep.subr.mxu0 0.0
    %1212 = vmatpush1.msra.mxu0 0.0
    %1213 = vmatprep.subr.mxu0 0.0
    %1214 = vmatpush1.msra.mxu0 0.0
    %1215 = vmatprep.subr.mxu0 0.0
    %1216 = vmatpush1.msra.mxu0 0.0
    %1217 = vmatprep.subr.mxu0 0.0
    %1218 = vmatpush1.msra.mxu0 0.0
    %1219 = vmatprep.subr.mxu0 0.0
    %1220 = vmatpush1.msra.mxu0 0.0
    %1221 = vmatprep.subr.mxu0 0.0
    %1222 = vmatpush1.msra.mxu0 0.0
    %1223 = vmatprep.mubr.f32.mxu0 0.0
    %1224 = vmatmul.mubr.f32.gmra.mrb[0].mxu0 %v1155
    %v1225 = vpop.f32.mrb[0].mxu0
    %v1226 = vadd.f32 0.0, %v1225
    %v1227 = vpop.f32.mrb[0].mxu0
    %1228 = vmatprep.mubr.f32.mxu0 0.0
    %1229 = vmatmul.mubr.f32.gmra.mrb[0].mxu0 %v1157
    %v1230 = vpop.f32.mrb[0].mxu0
    %v1231 = vadd.f32 0.0, %v1230
    %v1232 = vpop.f32.mrb[0].mxu0
    %1233 = vdwg.mxu0
    %v1242 = vcombine.low %v1091, %v1092
    %v1243 = vcombine.low %v1093, %v1094
    %v1245 = vunpack.c.l.s4 1983009808
    %v1246 = vunpack.c.0.s8 %v1245
    %v1247 = vlaneseq
    %v1248 = vshrl.u32 %v1247, 7
    %v1249 = vsub.s32 %v1246, %v1248
    %v1250 = vrot.slane %v1242, %v1249
    %v1252 = vunpack.c.l.s4 1983009808
    %v1253 = vunpack.c.0.s8 %v1252
    %v1254 = vlaneseq
    %v1255 = vshrl.u32 %v1254, 7
    %v1256 = vsub.s32 %v1253, %v1255
    %v1257 = vrot.slane %v1243, %v1256
    %v1258 = vcombine.low %v1250, %v1257
    %v1259 = vcombine.low %v1095, %v1096
    %v1260 = vcombine.low %v1097, %v1098
    %v1262 = vunpack.c.l.s4 1983009808
    %v1263 = vunpack.c.0.s8 %v1262
    %v1264 = vlaneseq
    %v1265 = vshrl.u32 %v1264, 7
    %v1266 = vsub.s32 %v1263, %v1265
    %v1267 = vrot.slane %v1259, %v1266
    %v1269 = vunpack.c.l.s4 1983009808
    %v1270 = vunpack.c.0.s8 %v1269
    %v1271 = vlaneseq
    %v1272 = vshrl.u32 %v1271, 7
    %v1273 = vsub.s32 %v1270, %v1272
    %v1274 = vrot.slane %v1260, %v1273
    %v1275 = vcombine.low %v1267, %v1274
    %v1276 = vsel %vm1154, %v1258, 0
    %v1278 = vsel %vm1154, %v1275, 0
    %1280 = vmatprep.subr.mxu0 0.0
    %1281 = vmatpush1.msra.mxu0 %v1108
    %1282 = vmatprep.subr.mxu0 0.0
    %1283 = vmatpush1.msra.mxu0 %v1109
    %1284 = vmatprep.subr.mxu0 0.0
    %1285 = vmatpush1.msra.mxu0 0.0
    %1286 = vmatprep.subr.mxu0 0.0
    %1287 = vmatpush1.msra.mxu0 0.0
    %1288 = vmatprep.subr.mxu0 0.0
    %1289 = vmatpush1.msra.mxu0 0.0
    %1290 = vmatprep.subr.mxu0 0.0
    %1291 = vmatpush1.msra.mxu0 0.0
    %1292 = vmatprep.subr.mxu0 0.0
    %1293 = vmatpush1.msra.mxu0 0.0
    %1294 = vmatprep.subr.mxu0 0.0
    %1295 = vmatpush1.msra.mxu0 0.0
    %1296 = vmatprep.subr.mxu0 0.0
    %1297 = vmatpush1.msra.mxu0 0.0
    %1298 = vmatprep.subr.mxu0 0.0
    %1299 = vmatpush1.msra.mxu0 0.0
    %1300 = vmatprep.subr.mxu0 0.0
    %1301 = vmatpush1.msra.mxu0 0.0
    %1302 = vmatprep.subr.mxu0 0.0
    %1303 = vmatpush1.msra.mxu0 0.0
    %1304 = vmatprep.subr.mxu0 0.0
    %1305 = vmatpush1.msra.mxu0 0.0
    %1306 = vmatprep.subr.mxu0 0.0
    %1307 = vmatpush1.msra.mxu0 0.0
    %1308 = vmatprep.subr.mxu0 0.0
    %1309 = vmatpush1.msra.mxu0 0.0
    %1310 = vmatprep.subr.mxu0 0.0
    %1311 = vmatpush1.msra.mxu0 0.0
    %1312 = vmatprep.subr.mxu0 0.0
    %1313 = vmatpush1.msra.mxu0 0.0
    %1314 = vmatprep.subr.mxu0 0.0
    %1315 = vmatpush1.msra.mxu0 0.0
    %1316 = vmatprep.subr.mxu0 0.0
    %1317 = vmatpush1.msra.mxu0 0.0
    %1318 = vmatprep.subr.mxu0 0.0
    %1319 = vmatpush1.msra.mxu0 0.0
    %1320 = vmatprep.subr.mxu0 0.0
    %1321 = vmatpush1.msra.mxu0 0.0
    %1322 = vmatprep.subr.mxu0 0.0
    %1323 = vmatpush1.msra.mxu0 0.0
    %1324 = vmatprep.subr.mxu0 0.0
    %1325 = vmatpush1.msra.mxu0 0.0
    %1326 = vmatprep.subr.mxu0 0.0
    %1327 = vmatpush1.msra.mxu0 0.0
    %1328 = vmatprep.subr.mxu0 0.0
    %1329 = vmatpush1.msra.mxu0 0.0
    %1330 = vmatprep.subr.mxu0 0.0
    %1331 = vmatpush1.msra.mxu0 0.0
    %1332 = vmatprep.subr.mxu0 0.0
    %1333 = vmatpush1.msra.mxu0 0.0
    %1334 = vmatprep.subr.mxu0 0.0
    %1335 = vmatpush1.msra.mxu0 0.0
    %1336 = vmatprep.subr.mxu0 0.0
    %1337 = vmatpush1.msra.mxu0 0.0
    %1338 = vmatprep.subr.mxu0 0.0
    %1339 = vmatpush1.msra.mxu0 0.0
    %1340 = vmatprep.subr.mxu0 0.0
    %1341 = vmatpush1.msra.mxu0 0.0
    %1342 = vmatprep.subr.mxu0 0.0
    %1343 = vmatpush1.msra.mxu0 0.0
    %1344 = vmatprep.mubr.f32.mxu0 0.0
    %1345 = vmatmul.mubr.f32.gmra.mrb[0].mxu0 %v1276
    %v1346 = vpop.f32.mrb[0].mxu0
    %v1347 = vadd.f32 %v1226, %v1346
    %v1348 = vpop.f32.mrb[0].mxu0
    %1349 = vmatprep.mubr.f32.mxu0 0.0
    %1350 = vmatmul.mubr.f32.gmra.mrb[0].mxu0 %v1278
    %v1351 = vpop.f32.mrb[0].mxu0
    %v1352 = vadd.f32 %v1231, %v1351
    %v1353 = vpop.f32.mrb[0].mxu0
    %1354 = vdwg.mxu0
    %v1356 = vlaneseq
    %v1357 = vshrl.u32 %v1356, 7
    %v1358 = vsub.s32 0, %v1357
    %v1359 = vrot.slane %v1107, %v1358
    %v1361 = vadd.f32 %v1347, %v1359
    %v1362 = vadd.f32 %v1352, %v1359
    %1363 = vst [vmem:[#allocation2] sm:$0xff] %v1361
    %1364 = vst [vmem:[#allocation2 + $0x8] sm:$0xff] %v1362
    %v1365 = vld [vmem:[#allocation8] sm:$0xff]
    %v1366 = vld [vmem:[#allocation8 + $0x8] sm:$0xff]
    %v1367 = vld [vmem:[#allocation8 + $0x10] sm:$0xff]
    %v1368 = vld [vmem:[#allocation8 + $0x18] sm:$0xff]
    %s1369 = scalar_lea.vmem %s7, 2
    %v1370 = vld [vmem:[%s1369] sm:$0x3]
    %s1371 = scalar_lea.vmem %s8, 2
    %v1372 = vld [vmem:[%s1371] sm:$0x3]
    %v1373 = vld [vmem:[#allocation2] sm:$0x3]
    %v1374 = vld [vmem:[%s185] sm:$0x3]
    %v1375 = vsel %vm83, %v1373, %v1374
    %v1377 = vsel %vm188, %v1370, 0
    %1379 = vmatprep.subr.mxu0 0.0
    %1380 = vmatpush1.msra.mxu0 %v1365
    %1381 = vmatprep.subr.mxu0 0.0
    %1382 = vmatpush1.msra.mxu0 %v1366
    %1383 = vmatprep.subr.mxu0 0.0
    %1384 = vmatpush1.msra.mxu0 %v1367
    %1385 = vmatprep.subr.mxu0 0.0
    %1386 = vmatpush1.msra.mxu0 %v1368
    %1387 = vmatprep.subr.mxu0 0.0
    %1388 = vmatpush1.msra.mxu0 0.0
    %1389 = vmatprep.subr.mxu0 0.0
    %1390 = vmatpush1.msra.mxu0 0.0
    %1391 = vmatprep.subr.mxu0 0.0
    %1392 = vmatpush1.msra.mxu0 0.0
    %1393 = vmatprep.subr.mxu0 0.0
    %1394 = vmatpush1.msra.mxu0 0.0
    %1395 = vmatprep.subr.mxu0 0.0
    %1396 = vmatpush1.msra.mxu0 0.0
    %1397 = vmatprep.subr.mxu0 0.0
    %1398 = vmatpush1.msra.mxu0 0.0
    %1399 = vmatprep.subr.mxu0 0.0
    %1400 = vmatpush1.msra.mxu0 0.0
    %1401 = vmatprep.subr.mxu0 0.0
    %1402 = vmatpush1.msra.mxu0 0.0
    %1403 = vmatprep.subr.mxu0 0.0
    %1404 = vmatpush1.msra.mxu0 0.0
    %1405 = vmatprep.subr.mxu0 0.0
    %1406 = vmatpush1.msra.mxu0 0.0
    %1407 = vmatprep.subr.mxu0 0.0
    %1408 = vmatpush1.msra.mxu0 0.0
    %1409 = vmatprep.subr.mxu0 0.0
    %1410 = vmatpush1.msra.mxu0 0.0
    %1411 = vmatprep.subr.mxu0 0.0
    %1412 = vmatpush1.msra.mxu0 0.0
    %1413 = vmatprep.subr.mxu0 0.0
    %1414 = vmatpush1.msra.mxu0 0.0
    %1415 = vmatprep.subr.mxu0 0.0
    %1416 = vmatpush1.msra.mxu0 0.0
    %1417 = vmatprep.subr.mxu0 0.0
    %1418 = vmatpush1.msra.mxu0 0.0
    %1419 = vmatprep.subr.mxu0 0.0
    %1420 = vmatpush1.msra.mxu0 0.0
    %1421 = vmatprep.subr.mxu0 0.0
    %1422 = vmatpush1.msra.mxu0 0.0
    %1423 = vmatprep.subr.mxu0 0.0
    %1424 = vmatpush1.msra.mxu0 0.0
    %1425 = vmatprep.subr.mxu0 0.0
    %1426 = vmatpush1.msra.mxu0 0.0
    %1427 = vmatprep.subr.mxu0 0.0
    %1428 = vmatpush1.msra.mxu0 0.0
    %1429 = vmatprep.subr.mxu0 0.0
    %1430 = vmatpush1.msra.mxu0 0.0
    %1431 = vmatprep.subr.mxu0 0.0
    %1432 = vmatpush1.msra.mxu0 0.0
    %1433 = vmatprep.subr.mxu0 0.0
    %1434 = vmatpush1.msra.mxu0 0.0
    %1435 = vmatprep.subr.mxu0 0.0
    %1436 = vmatpush1.msra.mxu0 0.0
    %1437 = vmatprep.subr.mxu0 0.0
    %1438 = vmatpush1.msra.mxu0 0.0
    %1439 = vmatprep.subr.mxu0 0.0
    %1440 = vmatpush1.msra.mxu0 0.0
    %1441 = vmatprep.subr.mxu0 0.0
    %1442 = vmatpush1.msra.mxu0 0.0
    %1443 = vmatprep.mubr.f32.mxu0 0.0
    %1444 = vmatmul.mubr.f32.gmra.mrb[0].mxu0 %v1377
    %v1445 = vpop.f32.mrb[0].mxu0
    %v1446 = vadd.f32 0.0, %v1445
    %v1447 = vpop.f32.mrb[0].mxu0
    %1448 = vdwg.mxu0
    %v1449 = vadd.f32 %v1375, %v1446
    %v1450 = vxor.u32 %v1449, 2147483648
    %v1451 = vmul.f32 %v1450, 1.442695
    %v1452 = vpow.pop %v1451
    %v1453 = vadd.f32 %v1452, 1.0
    %v1454 = vrcp.pop %v1453
    %v1455 = vmul.f32 1.0, %v1454
    %v1456 = vtanh.pop %v1449
    %1458 = vrot.lane.b32.xlu0 %v1372, 32
    %v1459 = vpop.permute.xlu0 %1458
    %v1461 = vmul.f32 %v1455, %v1459
    %1463 = vrot.lane.b32.xlu0 %v1456, 32
    %v1464 = vpop.permute.xlu0 %1463
    %v1466 = vmul.f32 %v1455, %v1464
    %1468 = vrot.lane.b32.xlu0 %v1466, 32
    %v1469 = vpop.permute.xlu0 %1468
    %v1471 = vadd.f32 %v1461, %v1469
    %v1472 = vtanh.pop %v1471
    %1474 = vrot.lane.b32.xlu0 %v1472, 32
    %v1475 = vpop.permute.xlu0 %1474
    %v1477 = vmul.f32 %v1455, %v1475
    %1479 = vrot.lane.b32.xlu0 %v1477, 64
    %v1480 = vpop.permute.xlu0 %1479
    %1482 = vst.msk [vmem:[#allocation3] sm:$0x3] %vm295, %v1480
    %1483 = vrot.lane.b32.xlu0 %v1477, 48
    %v1484 = vpop.permute.xlu0 %1483
    %1486 = vst.msk [vmem:[%s300] sm:$0x3] %vm295, %v1484
    %v1487 = vld [vmem:[%s302] sm:$0x3]
    %v1488 = vld [vmem:[%s304] sm:$0x3]
    %v1489 = vsel %vm83, %v1487, %v1488
    %v1490 = vsel %vm188, %v1480, 0
    %1492 = vmatprep.subr.mxu0 0.0
    %1493 = vmatpush1.msra.mxu0 %v1365
    %1494 = vmatprep.subr.mxu0 0.0
    %1495 = vmatpush1.msra.mxu0 %v1366
    %1496 = vmatprep.subr.mxu0 0.0
    %1497 = vmatpush1.msra.mxu0 %v1367
    %1498 = vmatprep.subr.mxu0 0.0
    %1499 = vmatpush1.msra.mxu0 %v1368
    %1500 = vmatprep.subr.mxu0 0.0
    %1501 = vmatpush1.msra.mxu0 0.0
    %1502 = vmatprep.subr.mxu0 0.0
    %1503 = vmatpush1.msra.mxu0 0.0
    %1504 = vmatprep.subr.mxu0 0.0
    %1505 = vmatpush1.msra.mxu0 0.0
    %1506 = vmatprep.subr.mxu0 0.0
    %1507 = vmatpush1.msra.mxu0 0.0
    %1508 = vmatprep.subr.mxu0 0.0
    %1509 = vmatpush1.msra.mxu0 0.0
    %1510 = vmatprep.subr.mxu0 0.0
    %1511 = vmatpush1.msra.mxu0 0.0
    %1512 = vmatprep.subr.mxu0 0.0
    %1513 = vmatpush1.msra.mxu0 0.0
    %1514 = vmatprep.subr.mxu0 0.0
    %1515 = vmatpush1.msra.mxu0 0.0
    %1516 = vmatprep.subr.mxu0 0.0
    %1517 = vmatpush1.msra.mxu0 0.0
    %1518 = vmatprep.subr.mxu0 0.0
    %1519 = vmatpush1.msra.mxu0 0.0
    %1520 = vmatprep.subr.mxu0 0.0
    %1521 = vmatpush1.msra.mxu0 0.0
    %1522 = vmatprep.subr.mxu0 0.0
    %1523 = vmatpush1.msra.mxu0 0.0
    %1524 = vmatprep.subr.mxu0 0.0
    %1525 = vmatpush1.msra.mxu0 0.0
    %1526 = vmatprep.subr.mxu0 0.0
    %1527 = vmatpush1.msra.mxu0 0.0
    %1528 = vmatprep.subr.mxu0 0.0
    %1529 = vmatpush1.msra.mxu0 0.0
    %1530 = vmatprep.subr.mxu0 0.0
    %1531 = vmatpush1.msra.mxu0 0.0
    %1532 = vmatprep.subr.mxu0 0.0
    %1533 = vmatpush1.msra.mxu0 0.0
    %1534 = vmatprep.subr.mxu0 0.0
    %1535 = vmatpush1.msra.mxu0 0.0
    %1536 = vmatprep.subr.mxu0 0.0
    %1537 = vmatpush1.msra.mxu0 0.0
    %1538 = vmatprep.subr.mxu0 0.0
    %1539 = vmatpush1.msra.mxu0 0.0
    %1540 = vmatprep.subr.mxu0 0.0
    %1541 = vmatpush1.msra.mxu0 0.0
    %1542 = vmatprep.subr.mxu0 0.0
    %1543 = vmatpush1.msra.mxu0 0.0
    %1544 = vmatprep.subr.mxu0 0.0
    %1545 = vmatpush1.msra.mxu0 0.0
    %1546 = vmatprep.subr.mxu0 0.0
    %1547 = vmatpush1.msra.mxu0 0.0
    %1548 = vmatprep.subr.mxu0 0.0
    %1549 = vmatpush1.msra.mxu0 0.0
    %1550 = vmatprep.subr.mxu0 0.0
    %1551 = vmatpush1.msra.mxu0 0.0
    %1552 = vmatprep.subr.mxu0 0.0
    %1553 = vmatpush1.msra.mxu0 0.0
    %1554 = vmatprep.subr.mxu0 0.0
    %1555 = vmatpush1.msra.mxu0 0.0
    %1556 = vmatprep.mubr.f32.mxu0 0.0
    %1557 = vmatmul.mubr.f32.gmra.mrb[0].mxu0 %v1490
    %v1558 = vpop.f32.mrb[0].mxu0
    %v1559 = vadd.f32 0.0, %v1558
    %v1560 = vpop.f32.mrb[0].mxu0
    %1561 = vdwg.mxu0
    %v1562 = vadd.f32 %v1489, %v1559
    %v1563 = vxor.u32 %v1562, 2147483648
    %v1564 = vmul.f32 %v1563, 1.442695
    %v1565 = vpow.pop %v1564
    %v1566 = vadd.f32 %v1565, 1.0
    %v1567 = vrcp.pop %v1566
    %v1568 = vmul.f32 1.0, %v1567
    %v1569 = vtanh.pop %v1562
    %v1570 = vmul.f32 %v1568, %v1471
    %1572 = vrot.lane.b32.xlu0 %v1569, 32
    %v1573 = vpop.permute.xlu0 %1572
    %v1575 = vmul.f32 %v1568, %v1573
    %1577 = vrot.lane.b32.xlu0 %v1575, 32
    %v1578 = vpop.permute.xlu0 %1577
    %v1580 = vadd.f32 %v1570, %v1578
    %v1581 = vtanh.pop %v1580
    %1583 = vrot.lane.b32.xlu0 %v1581, 32
    %v1584 = vpop.permute.xlu0 %1583
    %v1586 = vmul.f32 %v1568, %v1584
    %1588 = vrot.lane.b32.xlu0 %v1586, 64
    %v1589 = vpop.permute.xlu0 %1588
    %1591 = vst.msk [vmem:[%s408] sm:$0x3] %vm295, %v1589
    %1592 = vrot.lane.b32.xlu0 %v1586, 48
    %v1593 = vpop.permute.xlu0 %1592
    %1595 = vst.msk [vmem:[%s413] sm:$0x3] %vm295, %v1593
    %v1596 = vld [vmem:[%s415] sm:$0x3]
    %v1597 = vld [vmem:[%s417] sm:$0x3]
    %v1598 = vsel %vm83, %v1596, %v1597
    %v1599 = vsel %vm188, %v1589, 0
    %1601 = vmatprep.subr.mxu0 0.0
    %1602 = vmatpush1.msra.mxu0 %v1365
    %1603 = vmatprep.subr.mxu0 0.0
    %1604 = vmatpush1.msra.mxu0 %v1366
    %1605 = vmatprep.subr.mxu0 0.0
    %1606 = vmatpush1.msra.mxu0 %v1367
    %1607 = vmatprep.subr.mxu0 0.0
    %1608 = vmatpush1.msra.mxu0 %v1368
    %1609 = vmatprep.subr.mxu0 0.0
    %1610 = vmatpush1.msra.mxu0 0.0
    %1611 = vmatprep.subr.mxu0 0.0
    %1612 = vmatpush1.msra.mxu0 0.0
    %1613 = vmatprep.subr.mxu0 0.0
    %1614 = vmatpush1.msra.mxu0 0.0
    %1615 = vmatprep.subr.mxu0 0.0
    %1616 = vmatpush1.msra.mxu0 0.0
    %1617 = vmatprep.subr.mxu0 0.0
    %1618 = vmatpush1.msra.mxu0 0.0
    %1619 = vmatprep.subr.mxu0 0.0
    %1620 = vmatpush1.msra.mxu0 0.0
    %1621 = vmatprep.subr.mxu0 0.0
    %1622 = vmatpush1.msra.mxu0 0.0
    %1623 = vmatprep.subr.mxu0 0.0
    %1624 = vmatpush1.msra.mxu0 0.0
    %1625 = vmatprep.subr.mxu0 0.0
    %1626 = vmatpush1.msra.mxu0 0.0
    %1627 = vmatprep.subr.mxu0 0.0
    %1628 = vmatpush1.msra.mxu0 0.0
    %1629 = vmatprep.subr.mxu0 0.0
    %1630 = vmatpush1.msra.mxu0 0.0
    %1631 = vmatprep.subr.mxu0 0.0
    %1632 = vmatpush1.msra.mxu0 0.0
    %1633 = vmatprep.subr.mxu0 0.0
    %1634 = vmatpush1.msra.mxu0 0.0
    %1635 = vmatprep.subr.mxu0 0.0
    %1636 = vmatpush1.msra.mxu0 0.0
    %1637 = vmatprep.subr.mxu0 0.0
    %1638 = vmatpush1.msra.mxu0 0.0
    %1639 = vmatprep.subr.mxu0 0.0
    %1640 = vmatpush1.msra.mxu0 0.0
    %1641 = vmatprep.subr.mxu0 0.0
    %1642 = vmatpush1.msra.mxu0 0.0
    %1643 = vmatprep.subr.mxu0 0.0
    %1644 = vmatpush1.msra.mxu0 0.0
    %1645 = vmatprep.subr.mxu0 0.0
    %1646 = vmatpush1.msra.mxu0 0.0
    %1647 = vmatprep.subr.mxu0 0.0
    %1648 = vmatpush1.msra.mxu0 0.0
    %1649 = vmatprep.subr.mxu0 0.0
    %1650 = vmatpush1.msra.mxu0 0.0
    %1651 = vmatprep.subr.mxu0 0.0
    %1652 = vmatpush1.msra.mxu0 0.0
    %1653 = vmatprep.subr.mxu0 0.0
    %1654 = vmatpush1.msra.mxu0 0.0
    %1655 = vmatprep.subr.mxu0 0.0
    %1656 = vmatpush1.msra.mxu0 0.0
    %1657 = vmatprep.subr.mxu0 0.0
    %1658 = vmatpush1.msra.mxu0 0.0
    %1659 = vmatprep.subr.mxu0 0.0
    %1660 = vmatpush1.msra.mxu0 0.0
    %1661 = vmatprep.subr.mxu0 0.0
    %1662 = vmatpush1.msra.mxu0 0.0
    %1663 = vmatprep.subr.mxu0 0.0
    %1664 = vmatpush1.msra.mxu0 0.0
    %1665 = vmatprep.mubr.f32.mxu0 0.0
    %1666 = vmatmul.mubr.f32.gmra.mrb[0].mxu0 %v1599
    %v1667 = vpop.f32.mrb[0].mxu0
    %v1668 = vadd.f32 0.0, %v1667
    %v1669 = vpop.f32.mrb[0].mxu0
    %1670 = vdwg.mxu0
    %v1671 = vadd.f32 %v1598, %v1668
    %v1672 = vxor.u32 %v1671, 2147483648
    %v1673 = vmul.f32 %v1672, 1.442695
    %v1674 = vpow.pop %v1673
    %v1675 = vadd.f32 %v1674, 1.0
    %v1676 = vrcp.pop %v1675
    %v1677 = vmul.f32 1.0, %v1676
    %v1678 = vtanh.pop %v1671
    %v1679 = vmul.f32 %v1677, %v1580
    %1681 = vrot.lane.b32.xlu0 %v1678, 32
    %v1682 = vpop.permute.xlu0 %1681
    %v1684 = vmul.f32 %v1677, %v1682
    %1686 = vrot.lane.b32.xlu0 %v1684, 32
    %v1687 = vpop.permute.xlu0 %1686
    %v1689 = vadd.f32 %v1679, %v1687
    %v1690 = vtanh.pop %v1689
    %1692 = vrot.lane.b32.xlu0 %v1690, 32
    %v1693 = vpop.permute.xlu0 %1692
    %v1695 = vmul.f32 %v1677, %v1693
    %1697 = vrot.lane.b32.xlu0 %v1695, 64
    %v1698 = vpop.permute.xlu0 %1697
    %1700 = vst.msk [vmem:[%s521] sm:$0x3] %vm295, %v1698
    %1701 = vrot.lane.b32.xlu0 %v1695, 48
    %v1702 = vpop.permute.xlu0 %1701
    %1704 = vst.msk [vmem:[%s526] sm:$0x3] %vm295, %v1702
    %v1705 = vld [vmem:[%s528] sm:$0x3]
    %v1706 = vld [vmem:[%s530] sm:$0x3]
    %v1707 = vsel %vm83, %v1705, %v1706
    %v1708 = vsel %vm188, %v1698, 0
    %1710 = vmatprep.subr.mxu0 0.0
    %1711 = vmatpush1.msra.mxu0 %v1365
    %1712 = vmatprep.subr.mxu0 0.0
    %1713 = vmatpush1.msra.mxu0 %v1366
    %1714 = vmatprep.subr.mxu0 0.0
    %1715 = vmatpush1.msra.mxu0 %v1367
    %1716 = vmatprep.subr.mxu0 0.0
    %1717 = vmatpush1.msra.mxu0 %v1368
    %1718 = vmatprep.subr.mxu0 0.0
    %1719 = vmatpush1.msra.mxu0 0.0
    %1720 = vmatprep.subr.mxu0 0.0
    %1721 = vmatpush1.msra.mxu0 0.0
    %1722 = vmatprep.subr.mxu0 0.0
    %1723 = vmatpush1.msra.mxu0 0.0
    %1724 = vmatprep.subr.mxu0 0.0
    %1725 = vmatpush1.msra.mxu0 0.0
    %1726 = vmatprep.subr.mxu0 0.0
    %1727 = vmatpush1.msra.mxu0 0.0
    %1728 = vmatprep.subr.mxu0 0.0
    %1729 = vmatpush1.msra.mxu0 0.0
    %1730 = vmatprep.subr.mxu0 0.0
    %1731 = vmatpush1.msra.mxu0 0.0
    %1732 = vmatprep.subr.mxu0 0.0
    %1733 = vmatpush1.msra.mxu0 0.0
    %1734 = vmatprep.subr.mxu0 0.0
    %1735 = vmatpush1.msra.mxu0 0.0
    %1736 = vmatprep.subr.mxu0 0.0
    %1737 = vmatpush1.msra.mxu0 0.0
    %1738 = vmatprep.subr.mxu0 0.0
    %1739 = vmatpush1.msra.mxu0 0.0
    %1740 = vmatprep.subr.mxu0 0.0
    %1741 = vmatpush1.msra.mxu0 0.0
    %1742 = vmatprep.subr.mxu0 0.0
    %1743 = vmatpush1.msra.mxu0 0.0
    %1744 = vmatprep.subr.mxu0 0.0
    %1745 = vmatpush1.msra.mxu0 0.0
    %1746 = vmatprep.subr.mxu0 0.0
    %1747 = vmatpush1.msra.mxu0 0.0
    %1748 = vmatprep.subr.mxu0 0.0
    %1749 = vmatpush1.msra.mxu0 0.0
    %1750 = vmatprep.subr.mxu0 0.0
    %1751 = vmatpush1.msra.mxu0 0.0
    %1752 = vmatprep.subr.mxu0 0.0
    %1753 = vmatpush1.msra.mxu0 0.0
    %1754 = vmatprep.subr.mxu0 0.0
    %1755 = vmatpush1.msra.mxu0 0.0
    %1756 = vmatprep.subr.mxu0 0.0
    %1757 = vmatpush1.msra.mxu0 0.0
    %1758 = vmatprep.subr.mxu0 0.0
    %1759 = vmatpush1.msra.mxu0 0.0
    %1760 = vmatprep.subr.mxu0 0.0
    %1761 = vmatpush1.msra.mxu0 0.0
    %1762 = vmatprep.subr.mxu0 0.0
    %1763 = vmatpush1.msra.mxu0 0.0
    %1764 = vmatprep.subr.mxu0 0.0
    %1765 = vmatpush1.msra.mxu0 0.0
    %1766 = vmatprep.subr.mxu0 0.0
    %1767 = vmatpush1.msra.mxu0 0.0
    %1768 = vmatprep.subr.mxu0 0.0
    %1769 = vmatpush1.msra.mxu0 0.0
    %1770 = vmatprep.subr.mxu0 0.0
    %1771 = vmatpush1.msra.mxu0 0.0
    %1772 = vmatprep.subr.mxu0 0.0
    %1773 = vmatpush1.msra.mxu0 0.0
    %1774 = vmatprep.mubr.f32.mxu0 0.0
    %1775 = vmatmul.mubr.f32.gmra.mrb[0].mxu0 %v1708
    %v1776 = vpop.f32.mrb[0].mxu0
    %v1777 = vadd.f32 0.0, %v1776
    %v1778 = vpop.f32.mrb[0].mxu0
    %1779 = vdwg.mxu0
    %v1780 = vadd.f32 %v1707, %v1777
    %v1781 = vxor.u32 %v1780, 2147483648
    %v1782 = vmul.f32 %v1781, 1.442695
    %v1783 = vpow.pop %v1782
    %v1784 = vadd.f32 %v1783, 1.0
    %v1785 = vrcp.pop %v1784
    %v1786 = vmul.f32 1.0, %v1785
    %v1787 = vtanh.pop %v1780
    %v1788 = vmul.f32 %v1786, %v1689
    %1790 = vrot.lane.b32.xlu0 %v1787, 32
    %v1791 = vpop.permute.xlu0 %1790
    %v1793 = vmul.f32 %v1786, %v1791
    %1795 = vrot.lane.b32.xlu0 %v1793, 32
    %v1796 = vpop.permute.xlu0 %1795
    %v1798 = vadd.f32 %v1788, %v1796
    %v1799 = vtanh.pop %v1798
    %1801 = vrot.lane.b32.xlu0 %v1799, 32
    %v1802 = vpop.permute.xlu0 %1801
    %v1804 = vmul.f32 %v1786, %v1802
    %1806 = vrot.lane.b32.xlu0 %v1804, 64
    %v1807 = vpop.permute.xlu0 %1806
    %1809 = vst.msk [vmem:[%s634] sm:$0x3] %vm295, %v1807
    %1810 = vrot.lane.b32.xlu0 %v1804, 48
    %v1811 = vpop.permute.xlu0 %1810
    %1813 = vst.msk [vmem:[%s639] sm:$0x3] %vm295, %v1811
    %v1814 = vld [vmem:[%s530] sm:$0x3]
    %v1815 = vld [vmem:[%s528] sm:$0x3]
    %v1816 = vsel %vm83, %v1814, %v1815
    %v1817 = vsel %vm188, %v1807, 0
    %1819 = vmatprep.subr.mxu0 0.0
    %1820 = vmatpush1.msra.mxu0 %v1365
    %1821 = vmatprep.subr.mxu0 0.0
    %1822 = vmatpush1.msra.mxu0 %v1366
    %1823 = vmatprep.subr.mxu0 0.0
    %1824 = vmatpush1.msra.mxu0 %v1367
    %1825 = vmatprep.subr.mxu0 0.0
    %1826 = vmatpush1.msra.mxu0 %v1368
    %1827 = vmatprep.subr.mxu0 0.0
    %1828 = vmatpush1.msra.mxu0 0.0
    %1829 = vmatprep.subr.mxu0 0.0
    %1830 = vmatpush1.msra.mxu0 0.0
    %1831 = vmatprep.subr.mxu0 0.0
    %1832 = vmatpush1.msra.mxu0 0.0
    %1833 = vmatprep.subr.mxu0 0.0
    %1834 = vmatpush1.msra.mxu0 0.0
    %1835 = vmatprep.subr.mxu0 0.0
    %1836 = vmatpush1.msra.mxu0 0.0
    %1837 = vmatprep.subr.mxu0 0.0
    %1838 = vmatpush1.msra.mxu0 0.0
    %1839 = vmatprep.subr.mxu0 0.0
    %1840 = vmatpush1.msra.mxu0 0.0
    %1841 = vmatprep.subr.mxu0 0.0
    %1842 = vmatpush1.msra.mxu0 0.0
    %1843 = vmatprep.subr.mxu0 0.0
    %1844 = vmatpush1.msra.mxu0 0.0
    %1845 = vmatprep.subr.mxu0 0.0
    %1846 = vmatpush1.msra.mxu0 0.0
    %1847 = vmatprep.subr.mxu0 0.0
    %1848 = vmatpush1.msra.mxu0 0.0
    %1849 = vmatprep.subr.mxu0 0.0
    %1850 = vmatpush1.msra.mxu0 0.0
    %1851 = vmatprep.subr.mxu0 0.0
    %1852 = vmatpush1.msra.mxu0 0.0
    %1853 = vmatprep.subr.mxu0 0.0
    %1854 = vmatpush1.msra.mxu0 0.0
    %1855 = vmatprep.subr.mxu0 0.0
    %1856 = vmatpush1.msra.mxu0 0.0
    %1857 = vmatprep.subr.mxu0 0.0
    %1858 = vmatpush1.msra.mxu0 0.0
    %1859 = vmatprep.subr.mxu0 0.0
    %1860 = vmatpush1.msra.mxu0 0.0
    %1861 = vmatprep.subr.mxu0 0.0
    %1862 = vmatpush1.msra.mxu0 0.0
    %1863 = vmatprep.subr.mxu0 0.0
    %1864 = vmatpush1.msra.mxu0 0.0
    %1865 = vmatprep.subr.mxu0 0.0
    %1866 = vmatpush1.msra.mxu0 0.0
    %1867 = vmatprep.subr.mxu0 0.0
    %1868 = vmatpush1.msra.mxu0 0.0
    %1869 = vmatprep.subr.mxu0 0.0
    %1870 = vmatpush1.msra.mxu0 0.0
    %1871 = vmatprep.subr.mxu0 0.0
    %1872 = vmatpush1.msra.mxu0 0.0
    %1873 = vmatprep.subr.mxu0 0.0
    %1874 = vmatpush1.msra.mxu0 0.0
    %1875 = vmatprep.subr.mxu0 0.0
    %1876 = vmatpush1.msra.mxu0 0.0
    %1877 = vmatprep.subr.mxu0 0.0
    %1878 = vmatpush1.msra.mxu0 0.0
    %1879 = vmatprep.subr.mxu0 0.0
    %1880 = vmatpush1.msra.mxu0 0.0
    %1881 = vmatprep.subr.mxu0 0.0
    %1882 = vmatpush1.msra.mxu0 0.0
    %1883 = vmatprep.mubr.f32.mxu0 0.0
    %1884 = vmatmul.mubr.f32.gmra.mrb[0].mxu0 %v1817
    %v1885 = vpop.f32.mrb[0].mxu0
    %v1886 = vadd.f32 0.0, %v1885
    %v1887 = vpop.f32.mrb[0].mxu0
    %1888 = vdwg.mxu0
    %v1889 = vadd.f32 %v1816, %v1886
    %v1890 = vxor.u32 %v1889, 2147483648
    %v1891 = vmul.f32 %v1890, 1.442695
    %v1892 = vpow.pop %v1891
    %v1893 = vadd.f32 %v1892, 1.0
    %v1894 = vrcp.pop %v1893
    %v1895 = vmul.f32 1.0, %v1894
    %v1896 = vtanh.pop %v1889
    %v1897 = vmul.f32 %v1895, %v1798
    %1899 = vrot.lane.b32.xlu0 %v1896, 32
    %v1900 = vpop.permute.xlu0 %1899
    %v1902 = vmul.f32 %v1895, %v1900
    %1904 = vrot.lane.b32.xlu0 %v1902, 32
    %v1905 = vpop.permute.xlu0 %1904
    %v1907 = vadd.f32 %v1897, %v1905
    %v1908 = vtanh.pop %v1907
    %1910 = vrot.lane.b32.xlu0 %v1908, 32
    %v1911 = vpop.permute.xlu0 %1910
    %v1913 = vmul.f32 %v1895, %v1911
    %1915 = vrot.lane.b32.xlu0 %v1913, 64
    %v1916 = vpop.permute.xlu0 %1915
    %1918 = vst.msk [vmem:[%s745] sm:$0x3] %vm295, %v1916
    %1919 = vrot.lane.b32.xlu0 %v1913, 48
    %v1920 = vpop.permute.xlu0 %1919
    %1922 = vst.msk [vmem:[%s750] sm:$0x3] %vm295, %v1920
    %v1923 = vld [vmem:[%s417] sm:$0x3]
    %v1924 = vld [vmem:[%s415] sm:$0x3]
    %v1925 = vsel %vm83, %v1923, %v1924
    %v1926 = vsel %vm188, %v1916, 0
    %1928 = vmatprep.subr.mxu0 0.0
    %1929 = vmatpush1.msra.mxu0 %v1365
    %1930 = vmatprep.subr.mxu0 0.0
    %1931 = vmatpush1.msra.mxu0 %v1366
    %1932 = vmatprep.subr.mxu0 0.0
    %1933 = vmatpush1.msra.mxu0 %v1367
    %1934 = vmatprep.subr.mxu0 0.0
    %1935 = vmatpush1.msra.mxu0 %v1368
    %1936 = vmatprep.subr.mxu0 0.0
    %1937 = vmatpush1.msra.mxu0 0.0
    %1938 = vmatprep.subr.mxu0 0.0
    %1939 = vmatpush1.msra.mxu0 0.0
    %1940 = vmatprep.subr.mxu0 0.0
    %1941 = vmatpush1.msra.mxu0 0.0
    %1942 = vmatprep.subr.mxu0 0.0
    %1943 = vmatpush1.msra.mxu0 0.0
    %1944 = vmatprep.subr.mxu0 0.0
    %1945 = vmatpush1.msra.mxu0 0.0
    %1946 = vmatprep.subr.mxu0 0.0
    %1947 = vmatpush1.msra.mxu0 0.0
    %1948 = vmatprep.subr.mxu0 0.0
    %1949 = vmatpush1.msra.mxu0 0.0
    %1950 = vmatprep.subr.mxu0 0.0
    %1951 = vmatpush1.msra.mxu0 0.0
    %1952 = vmatprep.subr.mxu0 0.0
    %1953 = vmatpush1.msra.mxu0 0.0
    %1954 = vmatprep.subr.mxu0 0.0
    %1955 = vmatpush1.msra.mxu0 0.0
    %1956 = vmatprep.subr.mxu0 0.0
    %1957 = vmatpush1.msra.mxu0 0.0
    %1958 = vmatprep.subr.mxu0 0.0
    %1959 = vmatpush1.msra.mxu0 0.0
    %1960 = vmatprep.subr.mxu0 0.0
    %1961 = vmatpush1.msra.mxu0 0.0
    %1962 = vmatprep.subr.mxu0 0.0
    %1963 = vmatpush1.msra.mxu0 0.0
    %1964 = vmatprep.subr.mxu0 0.0
    %1965 = vmatpush1.msra.mxu0 0.0
    %1966 = vmatprep.subr.mxu0 0.0
    %1967 = vmatpush1.msra.mxu0 0.0
    %1968 = vmatprep.subr.mxu0 0.0
    %1969 = vmatpush1.msra.mxu0 0.0
    %1970 = vmatprep.subr.mxu0 0.0
    %1971 = vmatpush1.msra.mxu0 0.0
    %1972 = vmatprep.subr.mxu0 0.0
    %1973 = vmatpush1.msra.mxu0 0.0
    %1974 = vmatprep.subr.mxu0 0.0
    %1975 = vmatpush1.msra.mxu0 0.0
    %1976 = vmatprep.subr.mxu0 0.0
    %1977 = vmatpush1.msra.mxu0 0.0
    %1978 = vmatprep.subr.mxu0 0.0
    %1979 = vmatpush1.msra.mxu0 0.0
    %1980 = vmatprep.subr.mxu0 0.0
    %1981 = vmatpush1.msra.mxu0 0.0
    %1982 = vmatprep.subr.mxu0 0.0
    %1983 = vmatpush1.msra.mxu0 0.0
    %1984 = vmatprep.subr.mxu0 0.0
    %1985 = vmatpush1.msra.mxu0 0.0
    %1986 = vmatprep.subr.mxu0 0.0
    %1987 = vmatpush1.msra.mxu0 0.0
    %1988 = vmatprep.subr.mxu0 0.0
    %1989 = vmatpush1.msra.mxu0 0.0
    %1990 = vmatprep.subr.mxu0 0.0
    %1991 = vmatpush1.msra.mxu0 0.0
    %1992 = vmatprep.mubr.f32.mxu0 0.0
    %1993 = vmatmul.mubr.f32.gmra.mrb[0].mxu0 %v1926
    %v1994 = vpop.f32.mrb[0].mxu0
    %v1995 = vadd.f32 0.0, %v1994
    %v1996 = vpop.f32.mrb[0].mxu0
    %1997 = vdwg.mxu0
    %v1998 = vadd.f32 %v1925, %v1995
    %v1999 = vxor.u32 %v1998, 2147483648
    %v2000 = vmul.f32 %v1999, 1.442695
    %v2001 = vpow.pop %v2000
    %v2002 = vadd.f32 %v2001, 1.0
    %v2003 = vrcp.pop %v2002
    %v2004 = vmul.f32 1.0, %v2003
    %v2005 = vtanh.pop %v1998
    %v2006 = vmul.f32 %v2004, %v1907
    %2008 = vrot.lane.b32.xlu0 %v2005, 32
    %v2009 = vpop.permute.xlu0 %2008
    %v2011 = vmul.f32 %v2004, %v2009
    %2013 = vrot.lane.b32.xlu0 %v2011, 32
    %v2014 = vpop.permute.xlu0 %2013
    %v2016 = vadd.f32 %v2006, %v2014
    %v2017 = vtanh.pop %v2016
    %2019 = vrot.lane.b32.xlu0 %v2017, 32
    %v2020 = vpop.permute.xlu0 %2019
    %v2022 = vmul.f32 %v2004, %v2020
    %2024 = vrot.lane.b32.xlu0 %v2022, 64
    %v2025 = vpop.permute.xlu0 %2024
    %2027 = vst.msk [vmem:[%s856] sm:$0x3] %vm295, %v2025
    %2028 = vrot.lane.b32.xlu0 %v2022, 48
    %v2029 = vpop.permute.xlu0 %2028
    %2031 = vst.msk [vmem:[%s861] sm:$0x3] %vm295, %v2029
    %v2032 = vld [vmem:[%s304] sm:$0x3]
    %v2033 = vld [vmem:[%s302] sm:$0x3]
    %v2034 = vsel %vm83, %v2032, %v2033
    %v2035 = vsel %vm188, %v2025, 0
    %2037 = vmatprep.subr.mxu0 0.0
    %2038 = vmatpush1.msra.mxu0 %v1365
    %2039 = vmatprep.subr.mxu0 0.0
    %2040 = vmatpush1.msra.mxu0 %v1366
    %2041 = vmatprep.subr.mxu0 0.0
    %2042 = vmatpush1.msra.mxu0 %v1367
    %2043 = vmatprep.subr.mxu0 0.0
    %2044 = vmatpush1.msra.mxu0 %v1368
    %2045 = vmatprep.subr.mxu0 0.0
    %2046 = vmatpush1.msra.mxu0 0.0
    %2047 = vmatprep.subr.mxu0 0.0
    %2048 = vmatpush1.msra.mxu0 0.0
    %2049 = vmatprep.subr.mxu0 0.0
    %2050 = vmatpush1.msra.mxu0 0.0
    %2051 = vmatprep.subr.mxu0 0.0
    %2052 = vmatpush1.msra.mxu0 0.0
    %2053 = vmatprep.subr.mxu0 0.0
    %2054 = vmatpush1.msra.mxu0 0.0
    %2055 = vmatprep.subr.mxu0 0.0
    %2056 = vmatpush1.msra.mxu0 0.0
    %2057 = vmatprep.subr.mxu0 0.0
    %2058 = vmatpush1.msra.mxu0 0.0
    %2059 = vmatprep.subr.mxu0 0.0
    %2060 = vmatpush1.msra.mxu0 0.0
    %2061 = vmatprep.subr.mxu0 0.0
    %2062 = vmatpush1.msra.mxu0 0.0
    %2063 = vmatprep.subr.mxu0 0.0
    %2064 = vmatpush1.msra.mxu0 0.0
    %2065 = vmatprep.subr.mxu0 0.0
    %2066 = vmatpush1.msra.mxu0 0.0
    %2067 = vmatprep.subr.mxu0 0.0
    %2068 = vmatpush1.msra.mxu0 0.0
    %2069 = vmatprep.subr.mxu0 0.0
    %2070 = vmatpush1.msra.mxu0 0.0
    %2071 = vmatprep.subr.mxu0 0.0
    %2072 = vmatpush1.msra.mxu0 0.0
    %2073 = vmatprep.subr.mxu0 0.0
    %2074 = vmatpush1.msra.mxu0 0.0
    %2075 = vmatprep.subr.mxu0 0.0
    %2076 = vmatpush1.msra.mxu0 0.0
    %2077 = vmatprep.subr.mxu0 0.0
    %2078 = vmatpush1.msra.mxu0 0.0
    %2079 = vmatprep.subr.mxu0 0.0
    %2080 = vmatpush1.msra.mxu0 0.0
    %2081 = vmatprep.subr.mxu0 0.0
    %2082 = vmatpush1.msra.mxu0 0.0
    %2083 = vmatprep.subr.mxu0 0.0
    %2084 = vmatpush1.msra.mxu0 0.0
    %2085 = vmatprep.subr.mxu0 0.0
    %2086 = vmatpush1.msra.mxu0 0.0
    %2087 = vmatprep.subr.mxu0 0.0
    %2088 = vmatpush1.msra.mxu0 0.0
    %2089 = vmatprep.subr.mxu0 0.0
    %2090 = vmatpush1.msra.mxu0 0.0
    %2091 = vmatprep.subr.mxu0 0.0
    %2092 = vmatpush1.msra.mxu0 0.0
    %2093 = vmatprep.subr.mxu0 0.0
    %2094 = vmatpush1.msra.mxu0 0.0
    %2095 = vmatprep.subr.mxu0 0.0
    %2096 = vmatpush1.msra.mxu0 0.0
    %2097 = vmatprep.subr.mxu0 0.0
    %2098 = vmatpush1.msra.mxu0 0.0
    %2099 = vmatprep.subr.mxu0 0.0
    %2100 = vmatpush1.msra.mxu0 0.0
    %2101 = vmatprep.mubr.f32.mxu0 0.0
    %2102 = vmatmul.mubr.f32.gmra.mrb[0].mxu0 %v2035
    %v2103 = vpop.f32.mrb[0].mxu0
    %v2104 = vadd.f32 0.0, %v2103
    %v2105 = vpop.f32.mrb[0].mxu0
    %2106 = vdwg.mxu0
    %v2107 = vadd.f32 %v2034, %v2104
    %v2108 = vxor.u32 %v2107, 2147483648
    %v2109 = vmul.f32 %v2108, 1.442695
    %v2110 = vpow.pop %v2109
    %v2111 = vadd.f32 %v2110, 1.0
    %v2112 = vrcp.pop %v2111
    %v2113 = vmul.f32 1.0, %v2112
    %v2114 = vtanh.pop %v2107
    %v2115 = vmul.f32 %v2113, %v2016
    %2117 = vrot.lane.b32.xlu0 %v2114, 32
    %v2118 = vpop.permute.xlu0 %2117
    %v2120 = vmul.f32 %v2113, %v2118
    %2122 = vrot.lane.b32.xlu0 %v2120, 32
    %v2123 = vpop.permute.xlu0 %2122
    %v2125 = vadd.f32 %v2115, %v2123
    %v2126 = vtanh.pop %v2125
    %2128 = vrot.lane.b32.xlu0 %v2126, 32
    %v2129 = vpop.permute.xlu0 %2128
    %v2131 = vmul.f32 %v2113, %v2129
    %2133 = vrot.lane.b32.xlu0 %v2131, 64
    %v2134 = vpop.permute.xlu0 %2133
    %2136 = vst.msk [vmem:[%s967] sm:$0x3] %vm295, %v2134
    %2137 = vrot.lane.b32.xlu0 %v2131, 48
    %v2138 = vpop.permute.xlu0 %2137
    %2140 = vst.msk [vmem:[%s972] sm:$0x3] %vm295, %v2138
    %v2141 = vld [vmem:[%s185] sm:$0x3]
    %v2142 = vld [vmem:[#allocation2] sm:$0x3]
    %v2143 = vsel %vm83, %v2141, %v2142
    %v2144 = vsel %vm188, %v2134, 0
    %2146 = vmatprep.subr.mxu0 0.0
    %2147 = vmatpush1.msra.mxu0 %v1365
    %2148 = vmatprep.subr.mxu0 0.0
    %2149 = vmatpush1.msra.mxu0 %v1366
    %2150 = vmatprep.subr.mxu0 0.0
    %2151 = vmatpush1.msra.mxu0 %v1367
    %2152 = vmatprep.subr.mxu0 0.0
    %2153 = vmatpush1.msra.mxu0 %v1368
    %2154 = vmatprep.subr.mxu0 0.0
    %2155 = vmatpush1.msra.mxu0 0.0
    %2156 = vmatprep.subr.mxu0 0.0
    %2157 = vmatpush1.msra.mxu0 0.0
    %2158 = vmatprep.subr.mxu0 0.0
    %2159 = vmatpush1.msra.mxu0 0.0
    %2160 = vmatprep.subr.mxu0 0.0
    %2161 = vmatpush1.msra.mxu0 0.0
    %2162 = vmatprep.subr.mxu0 0.0
    %2163 = vmatpush1.msra.mxu0 0.0
    %2164 = vmatprep.subr.mxu0 0.0
    %2165 = vmatpush1.msra.mxu0 0.0
    %2166 = vmatprep.subr.mxu0 0.0
    %2167 = vmatpush1.msra.mxu0 0.0
    %2168 = vmatprep.subr.mxu0 0.0
    %2169 = vmatpush1.msra.mxu0 0.0
    %2170 = vmatprep.subr.mxu0 0.0
    %2171 = vmatpush1.msra.mxu0 0.0
    %2172 = vmatprep.subr.mxu0 0.0
    %2173 = vmatpush1.msra.mxu0 0.0
    %2174 = vmatprep.subr.mxu0 0.0
    %2175 = vmatpush1.msra.mxu0 0.0
    %2176 = vmatprep.subr.mxu0 0.0
    %2177 = vmatpush1.msra.mxu0 0.0
    %2178 = vmatprep.subr.mxu0 0.0
    %2179 = vmatpush1.msra.mxu0 0.0
    %2180 = vmatprep.subr.mxu0 0.0
    %2181 = vmatpush1.msra.mxu0 0.0
    %2182 = vmatprep.subr.mxu0 0.0
    %2183 = vmatpush1.msra.mxu0 0.0
    %2184 = vmatprep.subr.mxu0 0.0
    %2185 = vmatpush1.msra.mxu0 0.0
    %2186 = vmatprep.subr.mxu0 0.0
    %2187 = vmatpush1.msra.mxu0 0.0
    %2188 = vmatprep.subr.mxu0 0.0
    %2189 = vmatpush1.msra.mxu0 0.0
    %2190 = vmatprep.subr.mxu0 0.0
    %2191 = vmatpush1.msra.mxu0 0.0
    %2192 = vmatprep.subr.mxu0 0.0
    %2193 = vmatpush1.msra.mxu0 0.0
    %2194 = vmatprep.subr.mxu0 0.0
    %2195 = vmatpush1.msra.mxu0 0.0
    %2196 = vmatprep.subr.mxu0 0.0
    %2197 = vmatpush1.msra.mxu0 0.0
    %2198 = vmatprep.subr.mxu0 0.0
    %2199 = vmatpush1.msra.mxu0 0.0
    %2200 = vmatprep.subr.mxu0 0.0
    %2201 = vmatpush1.msra.mxu0 0.0
    %2202 = vmatprep.subr.mxu0 0.0
    %2203 = vmatpush1.msra.mxu0 0.0
    %2204 = vmatprep.subr.mxu0 0.0
    %2205 = vmatpush1.msra.mxu0 0.0
    %2206 = vmatprep.subr.mxu0 0.0
    %2207 = vmatpush1.msra.mxu0 0.0
    %2208 = vmatprep.subr.mxu0 0.0
    %2209 = vmatpush1.msra.mxu0 0.0
    %2210 = vmatprep.mubr.f32.mxu0 0.0
    %2211 = vmatmul.mubr.f32.gmra.mrb[0].mxu0 %v2144
    %v2212 = vpop.f32.mrb[0].mxu0
    %v2213 = vadd.f32 0.0, %v2212
    %v2214 = vpop.f32.mrb[0].mxu0
    %2215 = vdwg.mxu0
    %v2216 = vadd.f32 %v2143, %v2213
    %v2217 = vxor.u32 %v2216, 2147483648
    %v2218 = vmul.f32 %v2217, 1.442695
    %v2219 = vpow.pop %v2218
    %v2220 = vadd.f32 %v2219, 1.0
    %v2221 = vrcp.pop %v2220
    %v2222 = vmul.f32 1.0, %v2221
    %v2223 = vtanh.pop %v2216
    %v2224 = vmul.f32 %v2222, %v2125
    %2226 = vrot.lane.b32.xlu0 %v2223, 32
    %v2227 = vpop.permute.xlu0 %2226
    %v2229 = vmul.f32 %v2222, %v2227
    %2231 = vrot.lane.b32.xlu0 %v2229, 32
    %v2232 = vpop.permute.xlu0 %2231
    %v2234 = vadd.f32 %v2224, %v2232
    %v2235 = vtanh.pop %v2234
    %2237 = vrot.lane.b32.xlu0 %v2235, 32
    %v2238 = vpop.permute.xlu0 %2237
    %v2240 = vmul.f32 %v2222, %v2238
    %2242 = vrot.lane.b32.xlu0 %v2240, 64
    %v2243 = vpop.permute.xlu0 %2242
    %2245 = vst.msk [vmem:[%s1078] sm:$0x3] %vm295, %v2243
    %2246 = vrot.lane.b32.xlu0 %v2240, 48
    %v2247 = vpop.permute.xlu0 %2246
    %2249 = vst.msk [vmem:[#allocation4] sm:$0x3] %vm295, %v2247
    %s2250 = scalar_lea.vmem [#allocation10], 2
    %2251 = vst.msk [vmem:[%s2250] sm:$0x3] %vm1084, %v2243
    %2253 = vrot.lane.b32.xlu0 %v2234, 96
    %v2254 = vpop.permute.xlu0 %2253
    %s2256 = scalar_lea.vmem [#allocation11], 2
    %2257 = vst.msk [vmem:[%s2256] sm:$0x3] %vm1084, %v2254
    %v2258 = vld [vmem:[#allocation3] sm:$0x3]
    %v2259 = vld [vmem:[#allocation3 + $0x2] sm:$0x3]
    %v2260 = vld [vmem:[#allocation3 + $0x4] sm:$0x3]
    %v2261 = vld [vmem:[#allocation3 + $0x6] sm:$0x3]
    %v2262 = vld [vmem:[#allocation3 + $0x8] sm:$0x3]
    %v2263 = vld [vmem:[#allocation3 + $0xa] sm:$0x3]
    %v2264 = vld [vmem:[#allocation3 + $0xc] sm:$0x3]
    %v2265 = vld [vmem:[#allocation3 + $0xe] sm:$0x3]
    %v2266 = vld [vmem:[#allocation4] sm:$0x3]
    %v2267 = vld [vmem:[#allocation4 + $0x2] sm:$0x3]
    %v2268 = vld [vmem:[#allocation4 + $0x4] sm:$0x3]
    %v2269 = vld [vmem:[#allocation4 + $0x6] sm:$0x3]
    %v2270 = vld [vmem:[#allocation4 + $0x8] sm:$0x3]
    %v2271 = vld [vmem:[#allocation4 + $0xa] sm:$0x3]
    %v2272 = vld [vmem:[#allocation4 + $0xc] sm:$0x3]
    %v2273 = vld [vmem:[#allocation4 + $0xe] sm:$0x3]
    %v2274 = vld [vmem:[%s9] sm:$0xff]
    %v2275 = vld [vmem:[%s9 + $0x8] sm:$0xff]
    %v2276 = vld [vmem:[%s9 + $0x10] sm:$0xff]
    %v2277 = vld [vmem:[%s9 + $0x18] sm:$0xff]
    %v2286 = vcombine.low %v2266, %v2267
    %v2287 = vcombine.low %v2268, %v2269
    %v2289 = vunpack.c.l.s4 1983009808
    %v2290 = vunpack.c.0.s8 %v2289
    %v2291 = vlaneseq
    %v2292 = vshrl.u32 %v2291, 7
    %v2293 = vsub.s32 %v2290, %v2292
    %v2294 = vrot.slane %v2286, %v2293
    %v2296 = vunpack.c.l.s4 1983009808
    %v2297 = vunpack.c.0.s8 %v2296
    %v2298 = vlaneseq
    %v2299 = vshrl.u32 %v2298, 7
    %v2300 = vsub.s32 %v2297, %v2299
    %v2301 = vrot.slane %v2287, %v2300
    %v2302 = vcombine.low %v2294, %v2301
    %v2303 = vcombine.low %v2270, %v2271
    %v2304 = vcombine.low %v2272, %v2273
    %v2306 = vunpack.c.l.s4 1983009808
    %v2307 = vunpack.c.0.s8 %v2306
    %v2308 = vlaneseq
    %v2309 = vshrl.u32 %v2308, 7
    %v2310 = vsub.s32 %v2307, %v2309
    %v2311 = vrot.slane %v2303, %v2310
    %v2313 = vunpack.c.l.s4 1983009808
    %v2314 = vunpack.c.0.s8 %v2313
    %v2315 = vlaneseq
    %v2316 = vshrl.u32 %v2315, 7
    %v2317 = vsub.s32 %v2314, %v2316
    %v2318 = vrot.slane %v2304, %v2317
    %v2319 = vcombine.low %v2311, %v2318
    %v2320 = vsel %vm1154, %v2302, 0
    %v2322 = vsel %vm1154, %v2319, 0
    %2324 = vmatprep.subr.mxu0 0.0
    %2325 = vmatpush1.msra.mxu0 %v2276
    %2326 = vmatprep.subr.mxu0 0.0
    %2327 = vmatpush1.msra.mxu0 %v2277
    %2328 = vmatprep.subr.mxu0 0.0
    %2329 = vmatpush1.msra.mxu0 0.0
    %2330 = vmatprep.subr.mxu0 0.0
    %2331 = vmatpush1.msra.mxu0 0.0
    %2332 = vmatprep.subr.mxu0 0.0
    %2333 = vmatpush1.msra.mxu0 0.0
    %2334 = vmatprep.subr.mxu0 0.0
    %2335 = vmatpush1.msra.mxu0 0.0
    %2336 = vmatprep.subr.mxu0 0.0
    %2337 = vmatpush1.msra.mxu0 0.0
    %2338 = vmatprep.subr.mxu0 0.0
    %2339 = vmatpush1.msra.mxu0 0.0
    %2340 = vmatprep.subr.mxu0 0.0
    %2341 = vmatpush1.msra.mxu0 0.0
    %2342 = vmatprep.subr.mxu0 0.0
    %2343 = vmatpush1.msra.mxu0 0.0
    %2344 = vmatprep.subr.mxu0 0.0
    %2345 = vmatpush1.msra.mxu0 0.0
    %2346 = vmatprep.subr.mxu0 0.0
    %2347 = vmatpush1.msra.mxu0 0.0
    %2348 = vmatprep.subr.mxu0 0.0
    %2349 = vmatpush1.msra.mxu0 0.0
    %2350 = vmatprep.subr.mxu0 0.0
    %2351 = vmatpush1.msra.mxu0 0.0
    %2352 = vmatprep.subr.mxu0 0.0
    %2353 = vmatpush1.msra.mxu0 0.0
    %2354 = vmatprep.subr.mxu0 0.0
    %2355 = vmatpush1.msra.mxu0 0.0
    %2356 = vmatprep.subr.mxu0 0.0
    %2357 = vmatpush1.msra.mxu0 0.0
    %2358 = vmatprep.subr.mxu0 0.0
    %2359 = vmatpush1.msra.mxu0 0.0
    %2360 = vmatprep.subr.mxu0 0.0
    %2361 = vmatpush1.msra.mxu0 0.0
    %2362 = vmatprep.subr.mxu0 0.0
    %2363 = vmatpush1.msra.mxu0 0.0
    %2364 = vmatprep.subr.mxu0 0.0
    %2365 = vmatpush1.msra.mxu0 0.0
    %2366 = vmatprep.subr.mxu0 0.0
    %2367 = vmatpush1.msra.mxu0 0.0
    %2368 = vmatprep.subr.mxu0 0.0
    %2369 = vmatpush1.msra.mxu0 0.0
    %2370 = vmatprep.subr.mxu0 0.0
    %2371 = vmatpush1.msra.mxu0 0.0
    %2372 = vmatprep.subr.mxu0 0.0
    %2373 = vmatpush1.msra.mxu0 0.0
    %2374 = vmatprep.subr.mxu0 0.0
    %2375 = vmatpush1.msra.mxu0 0.0
    %2376 = vmatprep.subr.mxu0 0.0
    %2377 = vmatpush1.msra.mxu0 0.0
    %2378 = vmatprep.subr.mxu0 0.0
    %2379 = vmatpush1.msra.mxu0 0.0
    %2380 = vmatprep.subr.mxu0 0.0
    %2381 = vmatpush1.msra.mxu0 0.0
    %2382 = vmatprep.subr.mxu0 0.0
    %2383 = vmatpush1.msra.mxu0 0.0
    %2384 = vmatprep.subr.mxu0 0.0
    %2385 = vmatpush1.msra.mxu0 0.0
    %2386 = vmatprep.subr.mxu0 0.0
    %2387 = vmatpush1.msra.mxu0 0.0
    %2388 = vmatprep.mubr.f32.mxu0 0.0
    %2389 = vmatmul.mubr.f32.gmra.mrb[0].mxu0 %v2320
    %v2390 = vpop.f32.mrb[0].mxu0
    %v2391 = vadd.f32 0.0, %v2390
    %v2392 = vpop.f32.mrb[0].mxu0
    %2393 = vmatprep.mubr.f32.mxu0 0.0
    %2394 = vmatmul.mubr.f32.gmra.mrb[0].mxu0 %v2322
    %v2395 = vpop.f32.mrb[0].mxu0
    %v2396 = vadd.f32 0.0, %v2395
    %v2397 = vpop.f32.mrb[0].mxu0
    %2398 = vdwg.mxu0
    %v2407 = vcombine.low %v2258, %v2259
    %v2408 = vcombine.low %v2260, %v2261
    %v2410 = vunpack.c.l.s4 1983009808
    %v2411 = vunpack.c.0.s8 %v2410
    %v2412 = vlaneseq
    %v2413 = vshrl.u32 %v2412, 7
    %v2414 = vsub.s32 %v2411, %v2413
    %v2415 = vrot.slane %v2407, %v2414
    %v2417 = vunpack.c.l.s4 1983009808
    %v2418 = vunpack.c.0.s8 %v2417
    %v2419 = vlaneseq
    %v2420 = vshrl.u32 %v2419, 7
    %v2421 = vsub.s32 %v2418, %v2420
    %v2422 = vrot.slane %v2408, %v2421
    %v2423 = vcombine.low %v2415, %v2422
    %v2424 = vcombine.low %v2262, %v2263
    %v2425 = vcombine.low %v2264, %v2265
    %v2427 = vunpack.c.l.s4 1983009808
    %v2428 = vunpack.c.0.s8 %v2427
    %v2429 = vlaneseq
    %v2430 = vshrl.u32 %v2429, 7
    %v2431 = vsub.s32 %v2428, %v2430
    %v2432 = vrot.slane %v2424, %v2431
    %v2434 = vunpack.c.l.s4 1983009808
    %v2435 = vunpack.c.0.s8 %v2434
    %v2436 = vlaneseq
    %v2437 = vshrl.u32 %v2436, 7
    %v2438 = vsub.s32 %v2435, %v2437
    %v2439 = vrot.slane %v2425, %v2438
    %v2440 = vcombine.low %v2432, %v2439
    %v2441 = vsel %vm1154, %v2423, 0
    %v2443 = vsel %vm1154, %v2440, 0
    %2445 = vmatprep.subr.mxu0 0.0
    %2446 = vmatpush1.msra.mxu0 %v2274
    %2447 = vmatprep.subr.mxu0 0.0
    %2448 = vmatpush1.msra.mxu0 %v2275
    %2449 = vmatprep.subr.mxu0 0.0
    %2450 = vmatpush1.msra.mxu0 0.0
    %2451 = vmatprep.subr.mxu0 0.0
    %2452 = vmatpush1.msra.mxu0 0.0
    %2453 = vmatprep.subr.mxu0 0.0
    %2454 = vmatpush1.msra.mxu0 0.0
    %2455 = vmatprep.subr.mxu0 0.0
    %2456 = vmatpush1.msra.mxu0 0.0
    %2457 = vmatprep.subr.mxu0 0.0
    %2458 = vmatpush1.msra.mxu0 0.0
    %2459 = vmatprep.subr.mxu0 0.0
    %2460 = vmatpush1.msra.mxu0 0.0
    %2461 = vmatprep.subr.mxu0 0.0
    %2462 = vmatpush1.msra.mxu0 0.0
    %2463 = vmatprep.subr.mxu0 0.0
    %2464 = vmatpush1.msra.mxu0 0.0
    %2465 = vmatprep.subr.mxu0 0.0
    %2466 = vmatpush1.msra.mxu0 0.0
    %2467 = vmatprep.subr.mxu0 0.0
    %2468 = vmatpush1.msra.mxu0 0.0
    %2469 = vmatprep.subr.mxu0 0.0
    %2470 = vmatpush1.msra.mxu0 0.0
    %2471 = vmatprep.subr.mxu0 0.0
    %2472 = vmatpush1.msra.mxu0 0.0
    %2473 = vmatprep.subr.mxu0 0.0
    %2474 = vmatpush1.msra.mxu0 0.0
    %2475 = vmatprep.subr.mxu0 0.0
    %2476 = vmatpush1.msra.mxu0 0.0
    %2477 = vmatprep.subr.mxu0 0.0
    %2478 = vmatpush1.msra.mxu0 0.0
    %2479 = vmatprep.subr.mxu0 0.0
    %2480 = vmatpush1.msra.mxu0 0.0
    %2481 = vmatprep.subr.mxu0 0.0
    %2482 = vmatpush1.msra.mxu0 0.0
    %2483 = vmatprep.subr.mxu0 0.0
    %2484 = vmatpush1.msra.mxu0 0.0
    %2485 = vmatprep.subr.mxu0 0.0
    %2486 = vmatpush1.msra.mxu0 0.0
    %2487 = vmatprep.subr.mxu0 0.0
    %2488 = vmatpush1.msra.mxu0 0.0
    %2489 = vmatprep.subr.mxu0 0.0
    %2490 = vmatpush1.msra.mxu0 0.0
    %2491 = vmatprep.subr.mxu0 0.0
    %2492 = vmatpush1.msra.mxu0 0.0
    %2493 = vmatprep.subr.mxu0 0.0
    %2494 = vmatpush1.msra.mxu0 0.0
    %2495 = vmatprep.subr.mxu0 0.0
    %2496 = vmatpush1.msra.mxu0 0.0
    %2497 = vmatprep.subr.mxu0 0.0
    %2498 = vmatpush1.msra.mxu0 0.0
    %2499 = vmatprep.subr.mxu0 0.0
    %2500 = vmatpush1.msra.mxu0 0.0
    %2501 = vmatprep.subr.mxu0 0.0
    %2502 = vmatpush1.msra.mxu0 0.0
    %2503 = vmatprep.subr.mxu0 0.0
    %2504 = vmatpush1.msra.mxu0 0.0
    %2505 = vmatprep.subr.mxu0 0.0
    %2506 = vmatpush1.msra.mxu0 0.0
    %2507 = vmatprep.subr.mxu0 0.0
    %2508 = vmatpush1.msra.mxu0 0.0
    %2509 = vmatprep.mubr.f32.mxu0 0.0
    %2510 = vmatmul.mubr.f32.gmra.mrb[0].mxu0 %v2441
    %v2511 = vpop.f32.mrb[0].mxu0
    %v2512 = vadd.f32 %v2391, %v2511
    %v2513 = vpop.f32.mrb[0].mxu0
    %2514 = vmatprep.mubr.f32.mxu0 0.0
    %2515 = vmatmul.mubr.f32.gmra.mrb[0].mxu0 %v2443
    %v2516 = vpop.f32.mrb[0].mxu0
    %v2517 = vadd.f32 %v2396, %v2516
    %v2518 = vpop.f32.mrb[0].mxu0
    %2519 = vdwg.mxu0
    %v2520 = vld [vmem:[%s10] sm:$0x1]
    %v2522 = vlaneseq
    %v2523 = vshrl.u32 %v2522, 7
    %v2524 = vsub.s32 0, %v2523
    %v2525 = vrot.slane %v2520, %v2524
    %v2527 = vadd.f32 %v2512, %v2525
    %v2528 = vadd.f32 %v2517, %v2525
    %vm2529 = vcmask 31744
    %2530 = vst.msk [vmem:[%s11] sm:$0xff] %vm2529, %v2527
    %2531 = vst.msk [vmem:[%s11 + $0x8] sm:$0xff] %vm2529, %v2528
    // Predicated region
    $region54: #{tpu_custom_call.1} parent=1 // pred_check
      _
    $region55: #{tpu_custom_call.1} parent=1 // pred_check_branch
      %2533 = sbr.rel (0) target = $region57
    $region56: #{tpu_custom_call.1} parent=1 // pred_region
      _
    $region57: #{tpu_custom_call.1} parent=1 // pred_fallthru
      _
    // Predicated region
    $region58: #{tpu_custom_call.1} parent=1 // pred_check
      _
    $region59: #{tpu_custom_call.1} parent=1 // pred_check_branch
      %2535 = sbr.rel (0) target = $region61
    $region60: #{tpu_custom_call.1} parent=1 // pred_region
      %s2537 = ssub.s32 64, 64
      %2538 = vsyncadd [#allocation7], %s2537
      %s2539 = sshll.u32 [#allocation10], 4
      %s2540 = int_to_ptr.vmem [resolvable:$true] %s2539
      %2545 = dma.vmem_to_hbm [thread:$0]  %s2540, 64, %s12, [#allocation7], 32, 32, 2
    $region61: #{tpu_custom_call.1} parent=1 // pred_fallthru
      _
    // Predicated region
    $region62: #{tpu_custom_call.1} parent=1 // pred_check
      _
    $region63: #{tpu_custom_call.1} parent=1 // pred_check_branch
      %2547 = sbr.rel (0) target = $region65
    $region64: #{tpu_custom_call.1} parent=1 // pred_region
      %s2549 = ssub.s32 64, 64
      %2550 = vsyncadd [#allocation12], %s2549
      %s2551 = sshll.u32 [#allocation11], 4
      %s2552 = int_to_ptr.vmem [resolvable:$true] %s2551
      %2557 = dma.vmem_to_hbm [thread:$0]  %s2552, 64, %s13, [#allocation12], 32, 32, 2
    $region65: #{tpu_custom_call.1} parent=1 // pred_fallthru
      _
    // Predicated region
    $region66: #{tpu_custom_call.1} parent=1 // pred_check
      _
    $region67: #{tpu_custom_call.1} parent=1 // pred_check_branch
      %2559 = sbr.rel (0) target = $region69
    $region68: #{tpu_custom_call.1} parent=1 // pred_region
      _
    $region69: #{tpu_custom_call.1} parent=1 // pred_fallthru
      _
    // Predicated region
    $region70: #{tpu_custom_call.1} parent=1 // pred_check
      _
    $region71: #{tpu_custom_call.1} parent=1 // pred_check_branch
      %2561 = sbr.rel (0) target = $region73
    $region72: #{tpu_custom_call.1} parent=1 // pred_region
      %2562 = dma.done [#allocation7], 64
    $region73: #{tpu_custom_call.1} parent=1 // pred_fallthru
      _
    // Predicated region
    $region74: #{tpu_custom_call.1} parent=1 // pred_check
      _
    $region75: #{tpu_custom_call.1} parent=1 // pred_check_branch
      %2564 = sbr.rel (0) target = $region77
    $region76: #{tpu_custom_call.1} parent=1 // pred_region
      %2565 = dma.done [#allocation12], 64
    $region77: #{tpu_custom_call.1} parent=1 // pred_fallthru
      _
    %2566 = vsyncpa [#allocation6], 1
    %2567 = vsyncpa [#allocation9], 1
    %2568 = vsyncpa [#allocation7], 1
    %2569 = vsyncpa [#allocation12], 1

</llo_original>
